<compile_context>
chip_gen: v7x
topology: tpu7x:2x2x1
jax: 0.10.0
libtpu: 0.0.40
codegen_flags: <defaults>
</compile_context>

<pallas_src>
import math

import jax
import jax.numpy as jnp
from jax.experimental import pallas as pl
from jax.experimental.pallas import tpu as pltpu


def gru_kernel(x_ref, wx_ref, bx_ref, wh_rz_ref, whh_ref, h_ref, xp_ref):
    """Fused GRU-style recurrence over all T steps for the full batch.

    x_ref:     (T*B, I)   time-major flattened inputs
    wx_ref:    (I, 3H)    fused x-side weights [wr_x | wz_x | whx]
    bx_ref:    (1, 3H)    fused biases         [br   | bz   | bh ]
    wh_rz_ref: (H, 2H)    fused h-side gate weights [wr_h | wz_h]
    whh_ref:   (H, H)
    h_ref:     (B, H)     output: hidden state after the last time step
    xp_ref:    (T*B, 3H)  VMEM scratch for the x-side projections
    """
    H = whh_ref.shape[0]
    B = h_ref.shape[0]
    T = x_ref.shape[0] // B
    H2 = 2 * H

    # ---- Prologue: everything that does not depend on h, as ONE MXU matmul
    # with M = T*B rows. Biases folded in here, off the serial path.
    xp_ref[...] = (
        jnp.dot(x_ref[...], wx_ref[...], preferred_element_type=jnp.float32)
        + bx_ref[...])

    # Weights stay resident in vregs across the whole (tiny) recurrence.
    wh_rz = wh_rz_ref[...]
    whh = whh_ref[...]

    # ---- Serial recurrence, fully unrolled (T is small and static) so the
    # LLO scheduler can overlap the z / blend work of step t under the MXU
    # latency of the candidate matmul and of step t+1's gate matmul.
    h = jnp.zeros((B, H), jnp.float32)
    for t in range(T):
        xp_t = xp_ref[pl.ds(t * B, B), :]                 # (B, 3H), static slice
        # One fused N=2H MXU push per step for both gate pre-activations.
        rz_pre = (jnp.dot(h, wh_rz, preferred_element_type=jnp.float32)
                  + xp_t[:, :H2])
        # Only r feeds the second matmul -> keep z's EUP pass off the
        # critical path: sigmoid(r) first, then the candidate matmul.
        r = jax.nn.sigmoid(rz_pre[:, :H])
        g = jnp.tanh(
            jnp.dot(r * h, whh, preferred_element_type=jnp.float32)
            + xp_t[:, H2:])
        z = jax.nn.sigmoid(rz_pre[:, H:])
        h = (1.0 - z) * h + z * g

    h_ref[...] = h


def lstm_forward_pallas(x, params):
    """x: (B, T, I) float32. Returns (B, 1, H) — the hidden state after the
    last time step, matching the torch `Lstm.forward` return value."""
    B, T, I = x.shape
    H = params["whh"].shape[0]

    wr, wz = params["wr"], params["wz"]
    wr_x, wr_h = wr[:I, :], wr[I:, :]
    wz_x, wz_h = wz[:I, :], wz[I:, :]

    # concat([x, h]) @ W == x @ W_x + h @ W_h, so split & fuse the weights.
    wx = jnp.concatenate([wr_x, wz_x, params["whx"]], axis=1)         # (I, 3H)
    bx = jnp.concatenate(
        [params["br"], params["bz"], params["bh"]])[None, :]          # (1, 3H)
    wh_rz = jnp.concatenate([wr_h, wz_h], axis=1)                     # (H, 2H)

    # Time-major flatten so the kernel prologue is one (T*B, I) @ (I, 3H).
    x_flat = jnp.transpose(x, (1, 0, 2)).reshape(T * B, I)

    flops = (2 * T * B * I * 3 * H                       # prologue projection
             + T * (2 * B * H * 2 * H + 2 * B * H * H)   # recurrence matmuls
             + T * 8 * B * H)                            # elementwise blend
    cost = pl.CostEstimate(
        flops=int(flops),
        transcendentals=int(3 * T * B * H),
        bytes_accessed=int(4 * (T * B * I + I * 3 * H + 3 * H
                                + H * 2 * H + H * H + B * H)),
    )

    h = pl.pallas_call(
        gru_kernel,
        out_shape=jax.ShapeDtypeStruct((B, H), jnp.float32),
        # Single block: the problem is tiny and the recurrence is serial, so
        # splitting the batch only adds grid-step overhead / duplicate DMAs.
        grid=(1,),
        in_specs=[
            pl.BlockSpec((T * B, I), lambda i: (0, 0)),
            pl.BlockSpec((I, 3 * H), lambda i: (0, 0)),
            pl.BlockSpec((1, 3 * H), lambda i: (0, 0)),
            pl.BlockSpec((H, 2 * H), lambda i: (0, 0)),
            pl.BlockSpec((H, H), lambda i: (0, 0)),
        ],
        out_specs=pl.BlockSpec((B, H), lambda i: (0, 0)),
        scratch_shapes=[pltpu.VMEM((T * B, 3 * H), jnp.float32)],
        compiler_params=pltpu.CompilerParams(
            dimension_semantics=("arbitrary",)),
        cost_estimate=cost,
    )(x_flat, wx, bx, wh_rz, params["whh"])

    return h[:, None, :]                                  # (B, 1, H)


def lstm_forward_ref(x, params):
    """Plain-JAX reference mirroring the torch code line by line."""
    B, T, I = x.shape
    H = params["whh"].shape[0]
    h = jnp.zeros((B, 1, H), jnp.float32)
    for i in range(T):
        xl = x[:, i, :][:, None, :]                       # (B, 1, I)
        xc = jnp.concatenate([xl, h], axis=2)             # (B, 1, I+H)
        r = jax.nn.sigmoid(jnp.matmul(xc, params["wr"]) + params["br"])
        z = jax.nn.sigmoid(jnp.matmul(xc, params["wz"]) + params["bz"])
        g = jnp.tanh(jnp.matmul(r * h, params["whh"])
                     + jnp.matmul(xl, params["whx"]) + params["bh"])
        h = (1.0 - z) * h + z * g
    return h


def xavier_uniform(key, shape):
    bound = math.sqrt(6.0 / (shape[0] + shape[1]))
    return jax.random.uniform(key, shape, jnp.float32, -bound, bound)


def init_params(key, input_size, hidden_size):
    concat_len = input_size + hidden_size
    k = jax.random.split(key, 4)
    return {
        "wr": xavier_uniform(k[0], (concat_len, hidden_size)),
        "wz": xavier_uniform(k[1], (concat_len, hidden_size)),
        "whh": xavier_uniform(k[2], (hidden_size, hidden_size)),
        "whx": xavier_uniform(k[3], (input_size, hidden_size)),
        "br": jnp.zeros((hidden_size,), jnp.float32),
        "bz": jnp.zeros((hidden_size,), jnp.float32),
        "bh": jnp.zeros((hidden_size,), jnp.float32),
    }


if __name__ == "__main__":
    # B must be 64 because Lstmcell hard-codes its state buffers as (64, 1, H).
    B, T, I, H = 64, 8, 16, 32

    key = jax.random.PRNGKey(0)
    kx, kp = jax.random.split(key)
    x = jax.random.normal(kx, (B, T, I), jnp.float32)
    params = init_params(kp, I, H)

    out = lstm_forward_pallas(x, params)
    out = jax.block_until_ready(out)

    ref = lstm_forward_ref(x, params)
    assert out.shape == (B, 1, H)
    assert jnp.allclose(out, ref, rtol=1e-5, atol=1e-5), (
        f"max abs err {jnp.max(jnp.abs(out - ref))}")

    print("KERNEL_OK")
</pallas_src>

<mosaic_0001>
module attributes {stable_mosaic.version = 11 : i64} {
  func.func @gru_kernel(%arg0: i32, %arg1: memref<512x16xf32, #tpu.memory_space<vmem>>, %arg2: memref<16x96xf32, #tpu.memory_space<vmem>>, %arg3: memref<1x96xf32, #tpu.memory_space<vmem>>, %arg4: memref<32x64xf32, #tpu.memory_space<vmem>>, %arg5: memref<32x32xf32, #tpu.memory_space<vmem>>, %arg6: memref<64x32xf32, #tpu.memory_space<vmem>>, %arg7: memref<512x96xf32, #tpu.memory_space<vmem>>) attributes {dimension_semantics = [#tpu.dimension_semantics<arbitrary>], iteration_bounds = array<i64: 1>, scalar_prefetch = 0 : i64, scratch_operands = 1 : i64, tpu.core_type = #tpu.core_type<tc>, window_params = [{pipeline_mode = #tpu.pipeline_mode<synchronous>, transform_indices = @transform_0, window_bounds = array<i64: 512, 16>}, {pipeline_mode = #tpu.pipeline_mode<synchronous>, transform_indices = @transform_1, window_bounds = array<i64: 16, 96>}, {pipeline_mode = #tpu.pipeline_mode<synchronous>, transform_indices = @transform_2, window_bounds = array<i64: 1, 96>}, {pipeline_mode = #tpu.pipeline_mode<synchronous>, transform_indices = @transform_3, window_bounds = array<i64: 32, 64>}, {pipeline_mode = #tpu.pipeline_mode<synchronous>, transform_indices = @transform_4, window_bounds = array<i64: 32, 32>}, {pipeline_mode = #tpu.pipeline_mode<synchronous>, transform_indices = @transform_5, window_bounds = array<i64: 64, 32>}]} {
    %c0 = arith.constant 0 : index
    %c0_0 = arith.constant 0 : index
    %0 = vector.load %arg1[%c0, %c0_0] : memref<512x16xf32, #tpu.memory_space<vmem>>, vector<512x16xf32>
    %c0_1 = arith.constant 0 : index
    %c0_2 = arith.constant 0 : index
    %1 = vector.load %arg2[%c0_1, %c0_2] : memref<16x96xf32, #tpu.memory_space<vmem>>, vector<16x96xf32>
    %cst = arith.constant dense<0.000000e+00> : vector<512x96xf32>
    %2 = tpu.matmul %0, %1, %cst {dimension_numbers = #tpu.dot_dimension_numbers<[1], [0], [0], [1], [0, 0, 1, 1], [], []>} : vector<512x16xf32>, vector<16x96xf32>, vector<512x96xf32> -> vector<512x96xf32>
    %c0_3 = arith.constant 0 : index
    %c0_4 = arith.constant 0 : index
    %3 = vector.load %arg3[%c0_3, %c0_4] : memref<1x96xf32, #tpu.memory_space<vmem>>, vector<1x96xf32>
    %4 = vector.broadcast %3 : vector<1x96xf32> to vector<512x96xf32>
    %5 = arith.addf %2, %4 : vector<512x96xf32>
    %c0_5 = arith.constant 0 : index
    %c0_6 = arith.constant 0 : index
    %6 = vector.load %arg7[%c0_5, %c0_6] : memref<512x96xf32, #tpu.memory_space<vmem>>, vector<512x96xf32>
    tpu.vector_store %arg7[%c0_5, %c0_6], %5 {strides = array<i32>} : memref<512x96xf32, #tpu.memory_space<vmem>>, vector<512x96xf32>,
    %c0_7 = arith.constant 0 : index
    %c0_8 = arith.constant 0 : index
    %7 = vector.load %arg4[%c0_7, %c0_8] : memref<32x64xf32, #tpu.memory_space<vmem>>, vector<32x64xf32>
    %c0_9 = arith.constant 0 : index
    %c0_10 = arith.constant 0 : index
    %8 = vector.load %arg5[%c0_9, %c0_10] : memref<32x32xf32, #tpu.memory_space<vmem>>, vector<32x32xf32>
    %cst_11 = arith.constant 0.000000e+00 : f32
    %9 = vector.broadcast %cst_11 : f32 to vector<64x32xf32>
    %c0_12 = arith.constant 0 : index
    %c0_13 = arith.constant 0 : index
    %10 = vector.load %arg7[%c0_12, %c0_13] : memref<512x96xf32, #tpu.memory_space<vmem>>, vector<64x96xf32>
    %cst_14 = arith.constant dense<0.000000e+00> : vector<64x64xf32>
    %11 = tpu.matmul %9, %7, %cst_14 {dimension_numbers = #tpu.dot_dimension_numbers<[1], [0], [0], [1], [0, 0, 1, 1], [], []>} : vector<64x32xf32>, vector<32x64xf32>, vector<64x64xf32> -> vector<64x64xf32>
    %12 = vector.extract_strided_slice %10 {offsets = [0, 0], sizes = [64, 64], strides = [1, 1]} : vector<64x96xf32> to vector<64x64xf32>
    %13 = arith.addf %11, %12 : vector<64x64xf32>
    %14 = vector.extract_strided_slice %13 {offsets = [0, 0], sizes = [64, 32], strides = [1, 1]} : vector<64x64xf32> to vector<64x32xf32>
    %15 = arith.negf %14 : vector<64x32xf32>
    %16 = math.exp %15 : vector<64x32xf32>
    %cst_15 = arith.constant 1.000000e+00 : f32
    %17 = vector.broadcast %cst_15 : f32 to vector<64x32xf32>
    %18 = arith.addf %17, %16 : vector<64x32xf32>
    %19 = arith.divf %17, %18 : vector<64x32xf32>
    %20 = arith.mulf %19, %9 : vector<64x32xf32>
    %cst_16 = arith.constant dense<0.000000e+00> : vector<64x32xf32>
    %21 = tpu.matmul %20, %8, %cst_16 {dimension_numbers = #tpu.dot_dimension_numbers<[1], [0], [0], [1], [0, 0, 1, 1], [], []>} : vector<64x32xf32>, vector<32x32xf32>, vector<64x32xf32> -> vector<64x32xf32>
    %22 = vector.extract_strided_slice %10 {offsets = [0, 64], sizes = [64, 32], strides = [1, 1]} : vector<64x96xf32> to vector<64x32xf32>
    %23 = arith.addf %21, %22 : vector<64x32xf32>
    %24 = math.tanh %23 : vector<64x32xf32>
    %25 = vector.extract_strided_slice %13 {offsets = [0, 32], sizes = [64, 32], strides = [1, 1]} : vector<64x64xf32> to vector<64x32xf32>
    %26 = arith.negf %25 : vector<64x32xf32>
    %27 = math.exp %26 : vector<64x32xf32>
    %cst_17 = arith.constant 1.000000e+00 : f32
    %28 = vector.broadcast %cst_17 : f32 to vector<64x32xf32>
    %29 = arith.addf %28, %27 : vector<64x32xf32>
    %30 = arith.divf %28, %29 : vector<64x32xf32>
    %cst_18 = arith.constant 1.000000e+00 : f32
    %31 = vector.broadcast %cst_18 : f32 to vector<64x32xf32>
    %32 = arith.subf %31, %30 : vector<64x32xf32>
    %33 = arith.mulf %32, %9 : vector<64x32xf32>
    %34 = arith.mulf %30, %24 : vector<64x32xf32>
    %35 = arith.addf %33, %34 : vector<64x32xf32>
    %c64 = arith.constant 64 : index
    %c0_19 = arith.constant 0 : index
    %36 = vector.load %arg7[%c64, %c0_19] : memref<512x96xf32, #tpu.memory_space<vmem>>, vector<64x96xf32>
    %cst_20 = arith.constant dense<0.000000e+00> : vector<64x64xf32>
    %37 = tpu.matmul %35, %7, %cst_20 {dimension_numbers = #tpu.dot_dimension_numbers<[1], [0], [0], [1], [0, 0, 1, 1], [], []>} : vector<64x32xf32>, vector<32x64xf32>, vector<64x64xf32> -> vector<64x64xf32>
    %38 = vector.extract_strided_slice %36 {offsets = [0, 0], sizes = [64, 64], strides = [1, 1]} : vector<64x96xf32> to vector<64x64xf32>
    %39 = arith.addf %37, %38 : vector<64x64xf32>
    %40 = vector.extract_strided_slice %39 {offsets = [0, 0], sizes = [64, 32], strides = [1, 1]} : vector<64x64xf32> to vector<64x32xf32>
    %41 = arith.negf %40 : vector<64x32xf32>
    %42 = math.exp %41 : vector<64x32xf32>
    %cst_21 = arith.constant 1.000000e+00 : f32
    %43 = vector.broadcast %cst_21 : f32 to vector<64x32xf32>
    %44 = arith.addf %43, %42 : vector<64x32xf32>
    %45 = arith.divf %43, %44 : vector<64x32xf32>
    %46 = arith.mulf %45, %35 : vector<64x32xf32>
    %cst_22 = arith.constant dense<0.000000e+00> : vector<64x32xf32>
    %47 = tpu.matmul %46, %8, %cst_22 {dimension_numbers = #tpu.dot_dimension_numbers<[1], [0], [0], [1], [0, 0, 1, 1], [], []>} : vector<64x32xf32>, vector<32x32xf32>, vector<64x32xf32> -> vector<64x32xf32>
    %48 = vector.extract_strided_slice %36 {offsets = [0, 64], sizes = [64, 32], strides = [1, 1]} : vector<64x96xf32> to vector<64x32xf32>
    %49 = arith.addf %47, %48 : vector<64x32xf32>
    %50 = math.tanh %49 : vector<64x32xf32>
    %51 = vector.extract_strided_slice %39 {offsets = [0, 32], sizes = [64, 32], strides = [1, 1]} : vector<64x64xf32> to vector<64x32xf32>
    %52 = arith.negf %51 : vector<64x32xf32>
    %53 = math.exp %52 : vector<64x32xf32>
    %cst_23 = arith.constant 1.000000e+00 : f32
    %54 = vector.broadcast %cst_23 : f32 to vector<64x32xf32>
    %55 = arith.addf %54, %53 : vector<64x32xf32>
    %56 = arith.divf %54, %55 : vector<64x32xf32>
    %cst_24 = arith.constant 1.000000e+00 : f32
    %57 = vector.broadcast %cst_24 : f32 to vector<64x32xf32>
    %58 = arith.subf %57, %56 : vector<64x32xf32>
    %59 = arith.mulf %58, %35 : vector<64x32xf32>
    %60 = arith.mulf %56, %50 : vector<64x32xf32>
    %61 = arith.addf %59, %60 : vector<64x32xf32>
    %c128 = arith.constant 128 : index
    %c0_25 = arith.constant 0 : index
    %62 = vector.load %arg7[%c128, %c0_25] : memref<512x96xf32, #tpu.memory_space<vmem>>, vector<64x96xf32>
    %cst_26 = arith.constant dense<0.000000e+00> : vector<64x64xf32>
    %63 = tpu.matmul %61, %7, %cst_26 {dimension_numbers = #tpu.dot_dimension_numbers<[1], [0], [0], [1], [0, 0, 1, 1], [], []>} : vector<64x32xf32>, vector<32x64xf32>, vector<64x64xf32> -> vector<64x64xf32>
    %64 = vector.extract_strided_slice %62 {offsets = [0, 0], sizes = [64, 64], strides = [1, 1]} : vector<64x96xf32> to vector<64x64xf32>
    %65 = arith.addf %63, %64 : vector<64x64xf32>
    %66 = vector.extract_strided_slice %65 {offsets = [0, 0], sizes = [64, 32], strides = [1, 1]} : vector<64x64xf32> to vector<64x32xf32>
    %67 = arith.negf %66 : vector<64x32xf32>
    %68 = math.exp %67 : vector<64x32xf32>
    %cst_27 = arith.constant 1.000000e+00 : f32
    %69 = vector.broadcast %cst_27 : f32 to vector<64x32xf32>
    %70 = arith.addf %69, %68 : vector<64x32xf32>
    %71 = arith.divf %69, %70 : vector<64x32xf32>
    %72 = arith.mulf %71, %61 : vector<64x32xf32>
    %cst_28 = arith.constant dense<0.000000e+00> : vector<64x32xf32>
    %73 = tpu.matmul %72, %8, %cst_28 {dimension_numbers = #tpu.dot_dimension_numbers<[1], [0], [0], [1], [0, 0, 1, 1], [], []>} : vector<64x32xf32>, vector<32x32xf32>, vector<64x32xf32> -> vector<64x32xf32>
    %74 = vector.extract_strided_slice %62 {offsets = [0, 64], sizes = [64, 32], strides = [1, 1]} : vector<64x96xf32> to vector<64x32xf32>
    %75 = arith.addf %73, %74 : vector<64x32xf32>
    %76 = math.tanh %75 : vector<64x32xf32>
    %77 = vector.extract_strided_slice %65 {offsets = [0, 32], sizes = [64, 32], strides = [1, 1]} : vector<64x64xf32> to vector<64x32xf32>
    %78 = arith.negf %77 : vector<64x32xf32>
    %79 = math.exp %78 : vector<64x32xf32>
    %cst_29 = arith.constant 1.000000e+00 : f32
    %80 = vector.broadcast %cst_29 : f32 to vector<64x32xf32>
    %81 = arith.addf %80, %79 : vector<64x32xf32>
    %82 = arith.divf %80, %81 : vector<64x32xf32>
    %cst_30 = arith.constant 1.000000e+00 : f32
    %83 = vector.broadcast %cst_30 : f32 to vector<64x32xf32>
    %84 = arith.subf %83, %82 : vector<64x32xf32>
    %85 = arith.mulf %84, %61 : vector<64x32xf32>
    %86 = arith.mulf %82, %76 : vector<64x32xf32>
    %87 = arith.addf %85, %86 : vector<64x32xf32>
    %c192 = arith.constant 192 : index
    %c0_31 = arith.constant 0 : index
    %88 = vector.load %arg7[%c192, %c0_31] : memref<512x96xf32, #tpu.memory_space<vmem>>, vector<64x96xf32>
    %cst_32 = arith.constant dense<0.000000e+00> : vector<64x64xf32>
    %89 = tpu.matmul %87, %7, %cst_32 {dimension_numbers = #tpu.dot_dimension_numbers<[1], [0], [0], [1], [0, 0, 1, 1], [], []>} : vector<64x32xf32>, vector<32x64xf32>, vector<64x64xf32> -> vector<64x64xf32>
    %90 = vector.extract_strided_slice %88 {offsets = [0, 0], sizes = [64, 64], strides = [1, 1]} : vector<64x96xf32> to vector<64x64xf32>
    %91 = arith.addf %89, %90 : vector<64x64xf32>
    %92 = vector.extract_strided_slice %91 {offsets = [0, 0], sizes = [64, 32], strides = [1, 1]} : vector<64x64xf32> to vector<64x32xf32>
    %93 = arith.negf %92 : vector<64x32xf32>
    %94 = math.exp %93 : vector<64x32xf32>
    %cst_33 = arith.constant 1.000000e+00 : f32
    %95 = vector.broadcast %cst_33 : f32 to vector<64x32xf32>
    %96 = arith.addf %95, %94 : vector<64x32xf32>
    %97 = arith.divf %95, %96 : vector<64x32xf32>
    %98 = arith.mulf %97, %87 : vector<64x32xf32>
    %cst_34 = arith.constant dense<0.000000e+00> : vector<64x32xf32>
    %99 = tpu.matmul %98, %8, %cst_34 {dimension_numbers = #tpu.dot_dimension_numbers<[1], [0], [0], [1], [0, 0, 1, 1], [], []>} : vector<64x32xf32>, vector<32x32xf32>, vector<64x32xf32> -> vector<64x32xf32>
    %100 = vector.extract_strided_slice %88 {offsets = [0, 64], sizes = [64, 32], strides = [1, 1]} : vector<64x96xf32> to vector<64x32xf32>
    %101 = arith.addf %99, %100 : vector<64x32xf32>
    %102 = math.tanh %101 : vector<64x32xf32>
    %103 = vector.extract_strided_slice %91 {offsets = [0, 32], sizes = [64, 32], strides = [1, 1]} : vector<64x64xf32> to vector<64x32xf32>
    %104 = arith.negf %103 : vector<64x32xf32>
    %105 = math.exp %104 : vector<64x32xf32>
    %cst_35 = arith.constant 1.000000e+00 : f32
    %106 = vector.broadcast %cst_35 : f32 to vector<64x32xf32>
    %107 = arith.addf %106, %105 : vector<64x32xf32>
    %108 = arith.divf %106, %107 : vector<64x32xf32>
    %cst_36 = arith.constant 1.000000e+00 : f32
    %109 = vector.broadcast %cst_36 : f32 to vector<64x32xf32>
    %110 = arith.subf %109, %108 : vector<64x32xf32>
    %111 = arith.mulf %110, %87 : vector<64x32xf32>
    %112 = arith.mulf %108, %102 : vector<64x32xf32>
    %113 = arith.addf %111, %112 : vector<64x32xf32>
    %c256 = arith.constant 256 : index
    %c0_37 = arith.constant 0 : index
    %114 = vector.load %arg7[%c256, %c0_37] : memref<512x96xf32, #tpu.memory_space<vmem>>, vector<64x96xf32>
    %cst_38 = arith.constant dense<0.000000e+00> : vector<64x64xf32>
    %115 = tpu.matmul %113, %7, %cst_38 {dimension_numbers = #tpu.dot_dimension_numbers<[1], [0], [0], [1], [0, 0, 1, 1], [], []>} : vector<64x32xf32>, vector<32x64xf32>, vector<64x64xf32> -> vector<64x64xf32>
    %116 = vector.extract_strided_slice %114 {offsets = [0, 0], sizes = [64, 64], strides = [1, 1]} : vector<64x96xf32> to vector<64x64xf32>
    %117 = arith.addf %115, %116 : vector<64x64xf32>
    %118 = vector.extract_strided_slice %117 {offsets = [0, 0], sizes = [64, 32], strides = [1, 1]} : vector<64x64xf32> to vector<64x32xf32>
    %119 = arith.negf %118 : vector<64x32xf32>
    %120 = math.exp %119 : vector<64x32xf32>
    %cst_39 = arith.constant 1.000000e+00 : f32
    %121 = vector.broadcast %cst_39 : f32 to vector<64x32xf32>
    %122 = arith.addf %121, %120 : vector<64x32xf32>
    %123 = arith.divf %121, %122 : vector<64x32xf32>
    %124 = arith.mulf %123, %113 : vector<64x32xf32>
    %cst_40 = arith.constant dense<0.000000e+00> : vector<64x32xf32>
    %125 = tpu.matmul %124, %8, %cst_40 {dimension_numbers = #tpu.dot_dimension_numbers<[1], [0], [0], [1], [0, 0, 1, 1], [], []>} : vector<64x32xf32>, vector<32x32xf32>, vector<64x32xf32> -> vector<64x32xf32>
    %126 = vector.extract_strided_slice %114 {offsets = [0, 64], sizes = [64, 32], strides = [1, 1]} : vector<64x96xf32> to vector<64x32xf32>
    %127 = arith.addf %125, %126 : vector<64x32xf32>
    %128 = math.tanh %127 : vector<64x32xf32>
    %129 = vector.extract_strided_slice %117 {offsets = [0, 32], sizes = [64, 32], strides = [1, 1]} : vector<64x64xf32> to vector<64x32xf32>
    %130 = arith.negf %129 : vector<64x32xf32>
    %131 = math.exp %130 : vector<64x32xf32>
    %cst_41 = arith.constant 1.000000e+00 : f32
    %132 = vector.broadcast %cst_41 : f32 to vector<64x32xf32>
    %133 = arith.addf %132, %131 : vector<64x32xf32>
    %134 = arith.divf %132, %133 : vector<64x32xf32>
    %cst_42 = arith.constant 1.000000e+00 : f32
    %135 = vector.broadcast %cst_42 : f32 to vector<64x32xf32>
    %136 = arith.subf %135, %134 : vector<64x32xf32>
    %137 = arith.mulf %136, %113 : vector<64x32xf32>
    %138 = arith.mulf %134, %128 : vector<64x32xf32>
    %139 = arith.addf %137, %138 : vector<64x32xf32>
    %c320 = arith.constant 320 : index
    %c0_43 = arith.constant 0 : index
    %140 = vector.load %arg7[%c320, %c0_43] : memref<512x96xf32, #tpu.memory_space<vmem>>, vector<64x96xf32>
    %cst_44 = arith.constant dense<0.000000e+00> : vector<64x64xf32>
    %141 = tpu.matmul %139, %7, %cst_44 {dimension_numbers = #tpu.dot_dimension_numbers<[1], [0], [0], [1], [0, 0, 1, 1], [], []>} : vector<64x32xf32>, vector<32x64xf32>, vector<64x64xf32> -> vector<64x64xf32>
    %142 = vector.extract_strided_slice %140 {offsets = [0, 0], sizes = [64, 64], strides = [1, 1]} : vector<64x96xf32> to vector<64x64xf32>
    %143 = arith.addf %141, %142 : vector<64x64xf32>
    %144 = vector.extract_strided_slice %143 {offsets = [0, 0], sizes = [64, 32], strides = [1, 1]} : vector<64x64xf32> to vector<64x32xf32>
    %145 = arith.negf %144 : vector<64x32xf32>
    %146 = math.exp %145 : vector<64x32xf32>
    %cst_45 = arith.constant 1.000000e+00 : f32
    %147 = vector.broadcast %cst_45 : f32 to vector<64x32xf32>
    %148 = arith.addf %147, %146 : vector<64x32xf32>
    %149 = arith.divf %147, %148 : vector<64x32xf32>
    %150 = arith.mulf %149, %139 : vector<64x32xf32>
    %cst_46 = arith.constant dense<0.000000e+00> : vector<64x32xf32>
    %151 = tpu.matmul %150, %8, %cst_46 {dimension_numbers = #tpu.dot_dimension_numbers<[1], [0], [0], [1], [0, 0, 1, 1], [], []>} : vector<64x32xf32>, vector<32x32xf32>, vector<64x32xf32> -> vector<64x32xf32>
    %152 = vector.extract_strided_slice %140 {offsets = [0, 64], sizes = [64, 32], strides = [1, 1]} : vector<64x96xf32> to vector<64x32xf32>
    %153 = arith.addf %151, %152 : vector<64x32xf32>
    %154 = math.tanh %153 : vector<64x32xf32>
    %155 = vector.extract_strided_slice %143 {offsets = [0, 32], sizes = [64, 32], strides = [1, 1]} : vector<64x64xf32> to vector<64x32xf32>
    %156 = arith.negf %155 : vector<64x32xf32>
    %157 = math.exp %156 : vector<64x32xf32>
    %cst_47 = arith.constant 1.000000e+00 : f32
    %158 = vector.broadcast %cst_47 : f32 to vector<64x32xf32>
    %159 = arith.addf %158, %157 : vector<64x32xf32>
    %160 = arith.divf %158, %159 : vector<64x32xf32>
    %cst_48 = arith.constant 1.000000e+00 : f32
    %161 = vector.broadcast %cst_48 : f32 to vector<64x32xf32>
    %162 = arith.subf %161, %160 : vector<64x32xf32>
    %163 = arith.mulf %162, %139 : vector<64x32xf32>
    %164 = arith.mulf %160, %154 : vector<64x32xf32>
    %165 = arith.addf %163, %164 : vector<64x32xf32>
    %c384 = arith.constant 384 : index
    %c0_49 = arith.constant 0 : index
    %166 = vector.load %arg7[%c384, %c0_49] : memref<512x96xf32, #tpu.memory_space<vmem>>, vector<64x96xf32>
    %cst_50 = arith.constant dense<0.000000e+00> : vector<64x64xf32>
    %167 = tpu.matmul %165, %7, %cst_50 {dimension_numbers = #tpu.dot_dimension_numbers<[1], [0], [0], [1], [0, 0, 1, 1], [], []>} : vector<64x32xf32>, vector<32x64xf32>, vector<64x64xf32> -> vector<64x64xf32>
    %168 = vector.extract_strided_slice %166 {offsets = [0, 0], sizes = [64, 64], strides = [1, 1]} : vector<64x96xf32> to vector<64x64xf32>
    %169 = arith.addf %167, %168 : vector<64x64xf32>
    %170 = vector.extract_strided_slice %169 {offsets = [0, 0], sizes = [64, 32], strides = [1, 1]} : vector<64x64xf32> to vector<64x32xf32>
    %171 = arith.negf %170 : vector<64x32xf32>
    %172 = math.exp %171 : vector<64x32xf32>
    %cst_51 = arith.constant 1.000000e+00 : f32
    %173 = vector.broadcast %cst_51 : f32 to vector<64x32xf32>
    %174 = arith.addf %173, %172 : vector<64x32xf32>
    %175 = arith.divf %173, %174 : vector<64x32xf32>
    %176 = arith.mulf %175, %165 : vector<64x32xf32>
    %cst_52 = arith.constant dense<0.000000e+00> : vector<64x32xf32>
    %177 = tpu.matmul %176, %8, %cst_52 {dimension_numbers = #tpu.dot_dimension_numbers<[1], [0], [0], [1], [0, 0, 1, 1], [], []>} : vector<64x32xf32>, vector<32x32xf32>, vector<64x32xf32> -> vector<64x32xf32>
    %178 = vector.extract_strided_slice %166 {offsets = [0, 64], sizes = [64, 32], strides = [1, 1]} : vector<64x96xf32> to vector<64x32xf32>
    %179 = arith.addf %177, %178 : vector<64x32xf32>
    %180 = math.tanh %179 : vector<64x32xf32>
    %181 = vector.extract_strided_slice %169 {offsets = [0, 32], sizes = [64, 32], strides = [1, 1]} : vector<64x64xf32> to vector<64x32xf32>
    %182 = arith.negf %181 : vector<64x32xf32>
    %183 = math.exp %182 : vector<64x32xf32>
    %cst_53 = arith.constant 1.000000e+00 : f32
    %184 = vector.broadcast %cst_53 : f32 to vector<64x32xf32>
    %185 = arith.addf %184, %183 : vector<64x32xf32>
    %186 = arith.divf %184, %185 : vector<64x32xf32>
    %cst_54 = arith.constant 1.000000e+00 : f32
    %187 = vector.broadcast %cst_54 : f32 to vector<64x32xf32>
    %188 = arith.subf %187, %186 : vector<64x32xf32>
    %189 = arith.mulf %188, %165 : vector<64x32xf32>
    %190 = arith.mulf %186, %180 : vector<64x32xf32>
    %191 = arith.addf %189, %190 : vector<64x32xf32>
    %c448 = arith.constant 448 : index
    %c0_55 = arith.constant 0 : index
    %192 = vector.load %arg7[%c448, %c0_55] : memref<512x96xf32, #tpu.memory_space<vmem>>, vector<64x96xf32>
    %cst_56 = arith.constant dense<0.000000e+00> : vector<64x64xf32>
    %193 = tpu.matmul %191, %7, %cst_56 {dimension_numbers = #tpu.dot_dimension_numbers<[1], [0], [0], [1], [0, 0, 1, 1], [], []>} : vector<64x32xf32>, vector<32x64xf32>, vector<64x64xf32> -> vector<64x64xf32>
    %194 = vector.extract_strided_slice %192 {offsets = [0, 0], sizes = [64, 64], strides = [1, 1]} : vector<64x96xf32> to vector<64x64xf32>
    %195 = arith.addf %193, %194 : vector<64x64xf32>
    %196 = vector.extract_strided_slice %195 {offsets = [0, 0], sizes = [64, 32], strides = [1, 1]} : vector<64x64xf32> to vector<64x32xf32>
    %197 = arith.negf %196 : vector<64x32xf32>
    %198 = math.exp %197 : vector<64x32xf32>
    %cst_57 = arith.constant 1.000000e+00 : f32
    %199 = vector.broadcast %cst_57 : f32 to vector<64x32xf32>
    %200 = arith.addf %199, %198 : vector<64x32xf32>
    %201 = arith.divf %199, %200 : vector<64x32xf32>
    %202 = arith.mulf %201, %191 : vector<64x32xf32>
    %cst_58 = arith.constant dense<0.000000e+00> : vector<64x32xf32>
    %203 = tpu.matmul %202, %8, %cst_58 {dimension_numbers = #tpu.dot_dimension_numbers<[1], [0], [0], [1], [0, 0, 1, 1], [], []>} : vector<64x32xf32>, vector<32x32xf32>, vector<64x32xf32> -> vector<64x32xf32>
    %204 = vector.extract_strided_slice %192 {offsets = [0, 64], sizes = [64, 32], strides = [1, 1]} : vector<64x96xf32> to vector<64x32xf32>
    %205 = arith.addf %203, %204 : vector<64x32xf32>
    %206 = math.tanh %205 : vector<64x32xf32>
    %207 = vector.extract_strided_slice %195 {offsets = [0, 32], sizes = [64, 32], strides = [1, 1]} : vector<64x64xf32> to vector<64x32xf32>
    %208 = arith.negf %207 : vector<64x32xf32>
    %209 = math.exp %208 : vector<64x32xf32>
    %cst_59 = arith.constant 1.000000e+00 : f32
    %210 = vector.broadcast %cst_59 : f32 to vector<64x32xf32>
    %211 = arith.addf %210, %209 : vector<64x32xf32>
    %212 = arith.divf %210, %211 : vector<64x32xf32>
    %cst_60 = arith.constant 1.000000e+00 : f32
    %213 = vector.broadcast %cst_60 : f32 to vector<64x32xf32>
    %214 = arith.subf %213, %212 : vector<64x32xf32>
    %215 = arith.mulf %214, %191 : vector<64x32xf32>
    %216 = arith.mulf %212, %206 : vector<64x32xf32>
    %217 = arith.addf %215, %216 : vector<64x32xf32>
    %c0_61 = arith.constant 0 : index
    %c0_62 = arith.constant 0 : index
    %218 = vector.load %arg6[%c0_61, %c0_62] : memref<64x32xf32, #tpu.memory_space<vmem>>, vector<64x32xf32>
    tpu.vector_store %arg6[%c0_61, %c0_62], %217 {strides = array<i32>} : memref<64x32xf32, #tpu.memory_space<vmem>>, vector<64x32xf32>,
    return
  }
  func.func @transform_0(%arg0: i32) -> (i32, i32) {
    %c0_i32 = arith.constant 0 : i32
    %c0_i32_0 = arith.constant 0 : i32
    %c0_i32_1 = arith.constant 0 : i32
    return %c0_i32, %c0_i32_0 : i32, i32
  }
  func.func @transform_1(%arg0: i32) -> (i32, i32) {
    %c0_i32 = arith.constant 0 : i32
    %c0_i32_0 = arith.constant 0 : i32
    %c0_i32_1 = arith.constant 0 : i32
    return %c0_i32, %c0_i32_0 : i32, i32
  }
  func.func @transform_2(%arg0: i32) -> (i32, i32) {
    %c0_i32 = arith.constant 0 : i32
    %c0_i32_0 = arith.constant 0 : i32
    %c0_i32_1 = arith.constant 0 : i32
    return %c0_i32, %c0_i32_0 : i32, i32
  }
  func.func @transform_3(%arg0: i32) -> (i32, i32) {
    %c0_i32 = arith.constant 0 : i32
    %c0_i32_0 = arith.constant 0 : i32
    %c0_i32_1 = arith.constant 0 : i32
    return %c0_i32, %c0_i32_0 : i32, i32
  }
  func.func @transform_4(%arg0: i32) -> (i32, i32) {
    %c0_i32 = arith.constant 0 : i32
    %c0_i32_0 = arith.constant 0 : i32
    %c0_i32_1 = arith.constant 0 : i32
    return %c0_i32, %c0_i32_0 : i32, i32
  }
  func.func @transform_5(%arg0: i32) -> (i32, i32) {
    %c0_i32 = arith.constant 0 : i32
    %c0_i32_0 = arith.constant 0 : i32
    %c0_i32_1 = arith.constant 0 : i32
    return %c0_i32, %c0_i32_0 : i32, i32
  }
}

</mosaic_0001>

<llo_original>
// kernel: tpu_custom_call.1
$region0: #{tpu_custom_call.1}
  #allocation0 [shape = 'u32[]', space=smem, size = 0x4, offset = 0x4, fixed_abs, tag = 'smem constant byte address 0x4 - core index']
  #allocation1 [shape = 'u32[144,128]{1,0:T(1,128)}', space=vmem, size = 0x12000, scoped, tag = 'internal scratch']
  #allocation2 [shape = 'f32[512,96]{1,0:T(8,128)}', space=vmem, size = 0x40000, scoped, tag = 'scratch operand']
  %s0 = inlined_call_operand.vmem [shape: f32[512,16], index: 0, kind: input, shape index: {}]
  %s1 = inlined_call_operand.vmem [shape: f32[16,96], index: 1, kind: input, shape index: {}]
  %s2 = inlined_call_operand.vmem [shape: f32[1,96], index: 2, kind: input, shape index: {}]
  %s3 = inlined_call_operand.vmem [shape: f32[32,64], index: 3, kind: input, shape index: {}]
  %s4 = inlined_call_operand.vmem [shape: f32[32,32], index: 4, kind: input, shape index: {}]
  %s5 = inlined_call_operand.vmem [shape: f32[64,32], index: 5, kind: output, shape index: {}]
  %s6 = sld [smem:[#allocation0]]
  $region30: #{tpu_custom_call.1} parent=0
    _
  %s8 = ssub.s32 1, %s6
  %s9 = scalar_select 0, %s8, %s6
  // Predicated region
  $region2: #{tpu_custom_call.1} parent=0 // pred_check
    _
  $region3: #{tpu_custom_call.1} parent=0 // pred_check_branch
    %11 = sbr.rel (0) target = $region5
  $region4: #{tpu_custom_call.1} parent=0 // pred_region
    _
  $region5: #{tpu_custom_call.1} parent=0 // pred_fallthru
    _
  // Predicated region
  $region6: #{tpu_custom_call.1} parent=0 // pred_check
    _
  $region7: #{tpu_custom_call.1} parent=0 // pred_check_branch
    %13 = sbr.rel (0) target = $region9
  $region8: #{tpu_custom_call.1} parent=0 // pred_region
    _
  $region9: #{tpu_custom_call.1} parent=0 // pred_fallthru
    _
  // Predicated region
  $region10: #{tpu_custom_call.1} parent=0 // pred_check
    _
  $region11: #{tpu_custom_call.1} parent=0 // pred_check_branch
    %15 = sbr.rel (0) target = $region13
  $region12: #{tpu_custom_call.1} parent=0 // pred_region
    _
  $region13: #{tpu_custom_call.1} parent=0 // pred_fallthru
    _
  // Predicated region
  $region14: #{tpu_custom_call.1} parent=0 // pred_check
    _
  $region15: #{tpu_custom_call.1} parent=0 // pred_check_branch
    %17 = sbr.rel (0) target = $region17
  $region16: #{tpu_custom_call.1} parent=0 // pred_region
    _
  $region17: #{tpu_custom_call.1} parent=0 // pred_fallthru
    _
  // Predicated region
  $region18: #{tpu_custom_call.1} parent=0 // pred_check
    _
  $region19: #{tpu_custom_call.1} parent=0 // pred_check_branch
    %19 = sbr.rel (0) target = $region21
  $region20: #{tpu_custom_call.1} parent=0 // pred_region
    _
  $region21: #{tpu_custom_call.1} parent=0 // pred_fallthru
    _
  %v20 = vld [vmem:[%s0] sm:$0xff]
  %v21 = vld [vmem:[%s0 + $0x8] sm:$0xff]
  %v22 = vld [vmem:[%s0 + $0x10] sm:$0xff]
  %v23 = vld [vmem:[%s0 + $0x18] sm:$0xff]
  %v24 = vld [vmem:[%s0 + $0x20] sm:$0xff]
  %v25 = vld [vmem:[%s0 + $0x28] sm:$0xff]
  %v26 = vld [vmem:[%s0 + $0x30] sm:$0xff]
  %v27 = vld [vmem:[%s0 + $0x38] sm:$0xff]
  %v28 = vld [vmem:[%s0 + $0x40] sm:$0xff]
  %v29 = vld [vmem:[%s0 + $0x48] sm:$0xff]
  %v30 = vld [vmem:[%s0 + $0x50] sm:$0xff]
  %v31 = vld [vmem:[%s0 + $0x58] sm:$0xff]
  %v32 = vld [vmem:[%s0 + $0x60] sm:$0xff]
  %v33 = vld [vmem:[%s0 + $0x68] sm:$0xff]
  %v34 = vld [vmem:[%s0 + $0x70] sm:$0xff]
  %v35 = vld [vmem:[%s0 + $0x78] sm:$0xff]
  %v36 = vld [vmem:[%s0 + $0x80] sm:$0xff]
  %v37 = vld [vmem:[%s0 + $0x88] sm:$0xff]
  %v38 = vld [vmem:[%s0 + $0x90] sm:$0xff]
  %v39 = vld [vmem:[%s0 + $0x98] sm:$0xff]
  %v40 = vld [vmem:[%s0 + $0xa0] sm:$0xff]
  %v41 = vld [vmem:[%s0 + $0xa8] sm:$0xff]
  %v42 = vld [vmem:[%s0 + $0xb0] sm:$0xff]
  %v43 = vld [vmem:[%s0 + $0xb8] sm:$0xff]
  %v44 = vld [vmem:[%s0 + $0xc0] sm:$0xff]
  %v45 = vld [vmem:[%s0 + $0xc8] sm:$0xff]
  %v46 = vld [vmem:[%s0 + $0xd0] sm:$0xff]
  %v47 = vld [vmem:[%s0 + $0xd8] sm:$0xff]
  %v48 = vld [vmem:[%s0 + $0xe0] sm:$0xff]
  %v49 = vld [vmem:[%s0 + $0xe8] sm:$0xff]
  %v50 = vld [vmem:[%s0 + $0xf0] sm:$0xff]
  %v51 = vld [vmem:[%s0 + $0xf8] sm:$0xff]
  %v52 = vld [vmem:[%s0 + $0x100] sm:$0xff]
  %v53 = vld [vmem:[%s0 + $0x108] sm:$0xff]
  %v54 = vld [vmem:[%s0 + $0x110] sm:$0xff]
  %v55 = vld [vmem:[%s0 + $0x118] sm:$0xff]
  %v56 = vld [vmem:[%s0 + $0x120] sm:$0xff]
  %v57 = vld [vmem:[%s0 + $0x128] sm:$0xff]
  %v58 = vld [vmem:[%s0 + $0x130] sm:$0xff]
  %v59 = vld [vmem:[%s0 + $0x138] sm:$0xff]
  %v60 = vld [vmem:[%s0 + $0x140] sm:$0xff]
  %v61 = vld [vmem:[%s0 + $0x148] sm:$0xff]
  %v62 = vld [vmem:[%s0 + $0x150] sm:$0xff]
  %v63 = vld [vmem:[%s0 + $0x158] sm:$0xff]
  %v64 = vld [vmem:[%s0 + $0x160] sm:$0xff]
  %v65 = vld [vmem:[%s0 + $0x168] sm:$0xff]
  %v66 = vld [vmem:[%s0 + $0x170] sm:$0xff]
  %v67 = vld [vmem:[%s0 + $0x178] sm:$0xff]
  %v68 = vld [vmem:[%s0 + $0x180] sm:$0xff]
  %v69 = vld [vmem:[%s0 + $0x188] sm:$0xff]
  %v70 = vld [vmem:[%s0 + $0x190] sm:$0xff]
  %v71 = vld [vmem:[%s0 + $0x198] sm:$0xff]
  %v72 = vld [vmem:[%s0 + $0x1a0] sm:$0xff]
  %v73 = vld [vmem:[%s0 + $0x1a8] sm:$0xff]
  %v74 = vld [vmem:[%s0 + $0x1b0] sm:$0xff]
  %v75 = vld [vmem:[%s0 + $0x1b8] sm:$0xff]
  %v76 = vld [vmem:[%s0 + $0x1c0] sm:$0xff]
  %v77 = vld [vmem:[%s0 + $0x1c8] sm:$0xff]
  %v78 = vld [vmem:[%s0 + $0x1d0] sm:$0xff]
  %v79 = vld [vmem:[%s0 + $0x1d8] sm:$0xff]
  %v80 = vld [vmem:[%s0 + $0x1e0] sm:$0xff]
  %v81 = vld [vmem:[%s0 + $0x1e8] sm:$0xff]
  %v82 = vld [vmem:[%s0 + $0x1f0] sm:$0xff]
  %v83 = vld [vmem:[%s0 + $0x1f8] sm:$0xff]
  %v84 = vld [vmem:[%s1] sm:$0xff]
  %v85 = vld [vmem:[%s1 + $0x8] sm:$0xff]
  %v86 = vld [vmem:[%s2] sm:$0x1]
  %v88 = vlaneseq
  %v89 = vshrl.u32 %v88, 7
  %v90 = vsub.s32 0, %v89
  %v91 = vrot.slane %v86, %v90
  %vm93 = vcmask 130048
  %v95 = vsel %vm93, %v20, 0
  %v98 = vsel %vm93, %v21, 0
  %v101 = vsel %vm93, %v22, 0
  %v104 = vsel %vm93, %v23, 0
  %v107 = vsel %vm93, %v24, 0
  %v110 = vsel %vm93, %v25, 0
  %v113 = vsel %vm93, %v26, 0
  %v116 = vsel %vm93, %v27, 0
  %v119 = vsel %vm93, %v28, 0
  %v122 = vsel %vm93, %v29, 0
  %v125 = vsel %vm93, %v30, 0
  %v128 = vsel %vm93, %v31, 0
  %v131 = vsel %vm93, %v32, 0
  %v134 = vsel %vm93, %v33, 0
  %v137 = vsel %vm93, %v34, 0
  %v140 = vsel %vm93, %v35, 0
  %v143 = vsel %vm93, %v36, 0
  %v146 = vsel %vm93, %v37, 0
  %v149 = vsel %vm93, %v38, 0
  %v152 = vsel %vm93, %v39, 0
  %v155 = vsel %vm93, %v40, 0
  %v158 = vsel %vm93, %v41, 0
  %v161 = vsel %vm93, %v42, 0
  %v164 = vsel %vm93, %v43, 0
  %v167 = vsel %vm93, %v44, 0
  %v170 = vsel %vm93, %v45, 0
  %v173 = vsel %vm93, %v46, 0
  %v176 = vsel %vm93, %v47, 0
  %v179 = vsel %vm93, %v48, 0
  %v182 = vsel %vm93, %v49, 0
  %v185 = vsel %vm93, %v50, 0
  %v188 = vsel %vm93, %v51, 0
  %v191 = vsel %vm93, %v52, 0
  %v194 = vsel %vm93, %v53, 0
  %v197 = vsel %vm93, %v54, 0
  %v200 = vsel %vm93, %v55, 0
  %v203 = vsel %vm93, %v56, 0
  %v206 = vsel %vm93, %v57, 0
  %v209 = vsel %vm93, %v58, 0
  %v212 = vsel %vm93, %v59, 0
  %v215 = vsel %vm93, %v60, 0
  %v218 = vsel %vm93, %v61, 0
  %v221 = vsel %vm93, %v62, 0
  %v224 = vsel %vm93, %v63, 0
  %v227 = vsel %vm93, %v64, 0
  %v230 = vsel %vm93, %v65, 0
  %v233 = vsel %vm93, %v66, 0
  %v236 = vsel %vm93, %v67, 0
  %v239 = vsel %vm93, %v68, 0
  %v242 = vsel %vm93, %v69, 0
  %v245 = vsel %vm93, %v70, 0
  %v248 = vsel %vm93, %v71, 0
  %v251 = vsel %vm93, %v72, 0
  %v254 = vsel %vm93, %v73, 0
  %v257 = vsel %vm93, %v74, 0
  %v260 = vsel %vm93, %v75, 0
  %v263 = vsel %vm93, %v76, 0
  %v266 = vsel %vm93, %v77, 0
  %v269 = vsel %vm93, %v78, 0
  %v272 = vsel %vm93, %v79, 0
  %v275 = vsel %vm93, %v80, 0
  %v278 = vsel %vm93, %v81, 0
  %v281 = vsel %vm93, %v82, 0
  %v284 = vsel %vm93, %v83, 0
  %286 = vmatprep.subr.mxu0 0.0
  %287 = vmatpush1.msra.mxu0 %v84
  %288 = vmatprep.subr.mxu0 0.0
  %289 = vmatpush1.msra.mxu0 %v85
  %290 = vmatprep.subr.mxu0 0.0
  %291 = vmatpush1.msra.mxu0 0.0
  %292 = vmatprep.subr.mxu0 0.0
  %293 = vmatpush1.msra.mxu0 0.0
  %294 = vmatprep.subr.mxu0 0.0
  %295 = vmatpush1.msra.mxu0 0.0
  %296 = vmatprep.subr.mxu0 0.0
  %297 = vmatpush1.msra.mxu0 0.0
  %298 = vmatprep.subr.mxu0 0.0
  %299 = vmatpush1.msra.mxu0 0.0
  %300 = vmatprep.subr.mxu0 0.0
  %301 = vmatpush1.msra.mxu0 0.0
  %302 = vmatprep.subr.mxu0 0.0
  %303 = vmatpush1.msra.mxu0 0.0
  %304 = vmatprep.subr.mxu0 0.0
  %305 = vmatpush1.msra.mxu0 0.0
  %306 = vmatprep.subr.mxu0 0.0
  %307 = vmatpush1.msra.mxu0 0.0
  %308 = vmatprep.subr.mxu0 0.0
  %309 = vmatpush1.msra.mxu0 0.0
  %310 = vmatprep.subr.mxu0 0.0
  %311 = vmatpush1.msra.mxu0 0.0
  %312 = vmatprep.subr.mxu0 0.0
  %313 = vmatpush1.msra.mxu0 0.0
  %314 = vmatprep.subr.mxu0 0.0
  %315 = vmatpush1.msra.mxu0 0.0
  %316 = vmatprep.subr.mxu0 0.0
  %317 = vmatpush1.msra.mxu0 0.0
  %318 = vmatprep.subr.mxu0 0.0
  %319 = vmatpush1.msra.mxu0 0.0
  %320 = vmatprep.subr.mxu0 0.0
  %321 = vmatpush1.msra.mxu0 0.0
  %322 = vmatprep.subr.mxu0 0.0
  %323 = vmatpush1.msra.mxu0 0.0
  %324 = vmatprep.subr.mxu0 0.0
  %325 = vmatpush1.msra.mxu0 0.0
  %326 = vmatprep.subr.mxu0 0.0
  %327 = vmatpush1.msra.mxu0 0.0
  %328 = vmatprep.subr.mxu0 0.0
  %329 = vmatpush1.msra.mxu0 0.0
  %330 = vmatprep.subr.mxu0 0.0
  %331 = vmatpush1.msra.mxu0 0.0
  %332 = vmatprep.subr.mxu0 0.0
  %333 = vmatpush1.msra.mxu0 0.0
  %334 = vmatprep.subr.mxu0 0.0
  %335 = vmatpush1.msra.mxu0 0.0
  %336 = vmatprep.subr.mxu0 0.0
  %337 = vmatpush1.msra.mxu0 0.0
  %338 = vmatprep.subr.mxu0 0.0
  %339 = vmatpush1.msra.mxu0 0.0
  %340 = vmatprep.subr.mxu0 0.0
  %341 = vmatpush1.msra.mxu0 0.0
  %342 = vmatprep.subr.mxu0 0.0
  %343 = vmatpush1.msra.mxu0 0.0
  %344 = vmatprep.subr.mxu0 0.0
  %345 = vmatpush1.msra.mxu0 0.0
  %346 = vmatprep.subr.mxu0 0.0
  %347 = vmatpush1.msra.mxu0 0.0
  %348 = vmatprep.subr.mxu0 0.0
  %349 = vmatpush1.msra.mxu0 0.0
  %350 = vmatprep.mubr.f32.mxu0 0.0
  %351 = vmatmul.mubr.f32.gmra.mrb[0].mxu0 %v95
  %v352 = vpop.f32.mrb[0].mxu0
  %v353 = vadd.f32 %v91, %v352
  %v354 = vpop.f32.mrb[0].mxu0
  %355 = vmatprep.mubr.f32.mxu0 0.0
  %356 = vmatmul.mubr.f32.gmra.mrb[0].mxu0 %v98
  %v357 = vpop.f32.mrb[0].mxu0
  %v358 = vadd.f32 %v91, %v357
  %v359 = vpop.f32.mrb[0].mxu0
  %360 = vmatprep.mubr.f32.mxu0 0.0
  %361 = vmatmul.mubr.f32.gmra.mrb[0].mxu0 %v101
  %v362 = vpop.f32.mrb[0].mxu0
  %v363 = vadd.f32 %v91, %v362
  %v364 = vpop.f32.mrb[0].mxu0
  %365 = vmatprep.mubr.f32.mxu0 0.0
  %366 = vmatmul.mubr.f32.gmra.mrb[0].mxu0 %v104
  %v367 = vpop.f32.mrb[0].mxu0
  %v368 = vadd.f32 %v91, %v367
  %v369 = vpop.f32.mrb[0].mxu0
  %370 = vmatprep.mubr.f32.mxu0 0.0
  %371 = vmatmul.mubr.f32.gmra.mrb[0].mxu0 %v107
  %v372 = vpop.f32.mrb[0].mxu0
  %v373 = vadd.f32 %v91, %v372
  %v374 = vpop.f32.mrb[0].mxu0
  %375 = vmatprep.mubr.f32.mxu0 0.0
  %376 = vmatmul.mubr.f32.gmra.mrb[0].mxu0 %v110
  %v377 = vpop.f32.mrb[0].mxu0
  %v378 = vadd.f32 %v91, %v377
  %v379 = vpop.f32.mrb[0].mxu0
  %380 = vmatprep.mubr.f32.mxu0 0.0
  %381 = vmatmul.mubr.f32.gmra.mrb[0].mxu0 %v113
  %v382 = vpop.f32.mrb[0].mxu0
  %v383 = vadd.f32 %v91, %v382
  %v384 = vpop.f32.mrb[0].mxu0
  %385 = vmatprep.mubr.f32.mxu0 0.0
  %386 = vmatmul.mubr.f32.gmra.mrb[0].mxu0 %v116
  %v387 = vpop.f32.mrb[0].mxu0
  %v388 = vadd.f32 %v91, %v387
  %v389 = vpop.f32.mrb[0].mxu0
  %390 = vmatprep.mubr.f32.mxu0 0.0
  %391 = vmatmul.mubr.f32.gmra.mrb[0].mxu0 %v119
  %v392 = vpop.f32.mrb[0].mxu0
  %v393 = vadd.f32 %v91, %v392
  %v394 = vpop.f32.mrb[0].mxu0
  %395 = vmatprep.mubr.f32.mxu0 0.0
  %396 = vmatmul.mubr.f32.gmra.mrb[0].mxu0 %v122
  %v397 = vpop.f32.mrb[0].mxu0
  %v398 = vadd.f32 %v91, %v397
  %v399 = vpop.f32.mrb[0].mxu0
  %400 = vmatprep.mubr.f32.mxu0 0.0
  %401 = vmatmul.mubr.f32.gmra.mrb[0].mxu0 %v125
  %v402 = vpop.f32.mrb[0].mxu0
  %v403 = vadd.f32 %v91, %v402
  %v404 = vpop.f32.mrb[0].mxu0
  %405 = vmatprep.mubr.f32.mxu0 0.0
  %406 = vmatmul.mubr.f32.gmra.mrb[0].mxu0 %v128
  %v407 = vpop.f32.mrb[0].mxu0
  %v408 = vadd.f32 %v91, %v407
  %v409 = vpop.f32.mrb[0].mxu0
  %410 = vmatprep.mubr.f32.mxu0 0.0
  %411 = vmatmul.mubr.f32.gmra.mrb[0].mxu0 %v131
  %v412 = vpop.f32.mrb[0].mxu0
  %v413 = vadd.f32 %v91, %v412
  %v414 = vpop.f32.mrb[0].mxu0
  %415 = vmatprep.mubr.f32.mxu0 0.0
  %416 = vmatmul.mubr.f32.gmra.mrb[0].mxu0 %v134
  %v417 = vpop.f32.mrb[0].mxu0
  %v418 = vadd.f32 %v91, %v417
  %v419 = vpop.f32.mrb[0].mxu0
  %420 = vmatprep.mubr.f32.mxu0 0.0
  %421 = vmatmul.mubr.f32.gmra.mrb[0].mxu0 %v137
  %v422 = vpop.f32.mrb[0].mxu0
  %v423 = vadd.f32 %v91, %v422
  %v424 = vpop.f32.mrb[0].mxu0
  %425 = vmatprep.mubr.f32.mxu0 0.0
  %426 = vmatmul.mubr.f32.gmra.mrb[0].mxu0 %v140
  %v427 = vpop.f32.mrb[0].mxu0
  %v428 = vadd.f32 %v91, %v427
  %v429 = vpop.f32.mrb[0].mxu0
  %430 = vmatprep.mubr.f32.mxu0 0.0
  %431 = vmatmul.mubr.f32.gmra.mrb[0].mxu0 %v143
  %v432 = vpop.f32.mrb[0].mxu0
  %v433 = vadd.f32 %v91, %v432
  %v434 = vpop.f32.mrb[0].mxu0
  %435 = vmatprep.mubr.f32.mxu0 0.0
  %436 = vmatmul.mubr.f32.gmra.mrb[0].mxu0 %v146
  %v437 = vpop.f32.mrb[0].mxu0
  %v438 = vadd.f32 %v91, %v437
  %v439 = vpop.f32.mrb[0].mxu0
  %440 = vmatprep.mubr.f32.mxu0 0.0
  %441 = vmatmul.mubr.f32.gmra.mrb[0].mxu0 %v149
  %v442 = vpop.f32.mrb[0].mxu0
  %v443 = vadd.f32 %v91, %v442
  %v444 = vpop.f32.mrb[0].mxu0
  %445 = vmatprep.mubr.f32.mxu0 0.0
  %446 = vmatmul.mubr.f32.gmra.mrb[0].mxu0 %v152
  %v447 = vpop.f32.mrb[0].mxu0
  %v448 = vadd.f32 %v91, %v447
  %v449 = vpop.f32.mrb[0].mxu0
  %450 = vmatprep.mubr.f32.mxu0 0.0
  %451 = vmatmul.mubr.f32.gmra.mrb[0].mxu0 %v155
  %v452 = vpop.f32.mrb[0].mxu0
  %v453 = vadd.f32 %v91, %v452
  %v454 = vpop.f32.mrb[0].mxu0
  %455 = vmatprep.mubr.f32.mxu0 0.0
  %456 = vmatmul.mubr.f32.gmra.mrb[0].mxu0 %v158
  %v457 = vpop.f32.mrb[0].mxu0
  %v458 = vadd.f32 %v91, %v457
  %v459 = vpop.f32.mrb[0].mxu0
  %460 = vmatprep.mubr.f32.mxu0 0.0
  %461 = vmatmul.mubr.f32.gmra.mrb[0].mxu0 %v161
  %v462 = vpop.f32.mrb[0].mxu0
  %v463 = vadd.f32 %v91, %v462
  %v464 = vpop.f32.mrb[0].mxu0
  %465 = vmatprep.mubr.f32.mxu0 0.0
  %466 = vmatmul.mubr.f32.gmra.mrb[0].mxu0 %v164
  %v467 = vpop.f32.mrb[0].mxu0
  %v468 = vadd.f32 %v91, %v467
  %v469 = vpop.f32.mrb[0].mxu0
  %470 = vmatprep.mubr.f32.mxu0 0.0
  %471 = vmatmul.mubr.f32.gmra.mrb[0].mxu0 %v167
  %v472 = vpop.f32.mrb[0].mxu0
  %v473 = vadd.f32 %v91, %v472
  %v474 = vpop.f32.mrb[0].mxu0
  %475 = vmatprep.mubr.f32.mxu0 0.0
  %476 = vmatmul.mubr.f32.gmra.mrb[0].mxu0 %v170
  %v477 = vpop.f32.mrb[0].mxu0
  %v478 = vadd.f32 %v91, %v477
  %v479 = vpop.f32.mrb[0].mxu0
  %480 = vmatprep.mubr.f32.mxu0 0.0
  %481 = vmatmul.mubr.f32.gmra.mrb[0].mxu0 %v173
  %v482 = vpop.f32.mrb[0].mxu0
  %v483 = vadd.f32 %v91, %v482
  %v484 = vpop.f32.mrb[0].mxu0
  %485 = vmatprep.mubr.f32.mxu0 0.0
  %486 = vmatmul.mubr.f32.gmra.mrb[0].mxu0 %v176
  %v487 = vpop.f32.mrb[0].mxu0
  %v488 = vadd.f32 %v91, %v487
  %v489 = vpop.f32.mrb[0].mxu0
  %490 = vmatprep.mubr.f32.mxu0 0.0
  %491 = vmatmul.mubr.f32.gmra.mrb[0].mxu0 %v179
  %v492 = vpop.f32.mrb[0].mxu0
  %v493 = vadd.f32 %v91, %v492
  %v494 = vpop.f32.mrb[0].mxu0
  %495 = vmatprep.mubr.f32.mxu0 0.0
  %496 = vmatmul.mubr.f32.gmra.mrb[0].mxu0 %v182
  %v497 = vpop.f32.mrb[0].mxu0
  %v498 = vadd.f32 %v91, %v497
  %v499 = vpop.f32.mrb[0].mxu0
  %500 = vmatprep.mubr.f32.mxu0 0.0
  %501 = vmatmul.mubr.f32.gmra.mrb[0].mxu0 %v185
  %v502 = vpop.f32.mrb[0].mxu0
  %v503 = vadd.f32 %v91, %v502
  %v504 = vpop.f32.mrb[0].mxu0
  %505 = vmatprep.mubr.f32.mxu0 0.0
  %506 = vmatmul.mubr.f32.gmra.mrb[0].mxu0 %v188
  %v507 = vpop.f32.mrb[0].mxu0
  %v508 = vadd.f32 %v91, %v507
  %v509 = vpop.f32.mrb[0].mxu0
  %510 = vmatprep.mubr.f32.mxu0 0.0
  %511 = vmatmul.mubr.f32.gmra.mrb[0].mxu0 %v191
  %v512 = vpop.f32.mrb[0].mxu0
  %v513 = vadd.f32 %v91, %v512
  %v514 = vpop.f32.mrb[0].mxu0
  %515 = vmatprep.mubr.f32.mxu0 0.0
  %516 = vmatmul.mubr.f32.gmra.mrb[0].mxu0 %v194
  %v517 = vpop.f32.mrb[0].mxu0
  %v518 = vadd.f32 %v91, %v517
  %v519 = vpop.f32.mrb[0].mxu0
  %520 = vmatprep.mubr.f32.mxu0 0.0
  %521 = vmatmul.mubr.f32.gmra.mrb[0].mxu0 %v197
  %v522 = vpop.f32.mrb[0].mxu0
  %v523 = vadd.f32 %v91, %v522
  %v524 = vpop.f32.mrb[0].mxu0
  %525 = vmatprep.mubr.f32.mxu0 0.0
  %526 = vmatmul.mubr.f32.gmra.mrb[0].mxu0 %v200
  %v527 = vpop.f32.mrb[0].mxu0
  %v528 = vadd.f32 %v91, %v527
  %v529 = vpop.f32.mrb[0].mxu0
  %530 = vmatprep.mubr.f32.mxu0 0.0
  %531 = vmatmul.mubr.f32.gmra.mrb[0].mxu0 %v203
  %v532 = vpop.f32.mrb[0].mxu0
  %v533 = vadd.f32 %v91, %v532
  %v534 = vpop.f32.mrb[0].mxu0
  %535 = vmatprep.mubr.f32.mxu0 0.0
  %536 = vmatmul.mubr.f32.gmra.mrb[0].mxu0 %v206
  %v537 = vpop.f32.mrb[0].mxu0
  %v538 = vadd.f32 %v91, %v537
  %v539 = vpop.f32.mrb[0].mxu0
  %540 = vmatprep.mubr.f32.mxu0 0.0
  %541 = vmatmul.mubr.f32.gmra.mrb[0].mxu0 %v209
  %v542 = vpop.f32.mrb[0].mxu0
  %v543 = vadd.f32 %v91, %v542
  %v544 = vpop.f32.mrb[0].mxu0
  %545 = vmatprep.mubr.f32.mxu0 0.0
  %546 = vmatmul.mubr.f32.gmra.mrb[0].mxu0 %v212
  %v547 = vpop.f32.mrb[0].mxu0
  %v548 = vadd.f32 %v91, %v547
  %v549 = vpop.f32.mrb[0].mxu0
  %550 = vmatprep.mubr.f32.mxu0 0.0
  %551 = vmatmul.mubr.f32.gmra.mrb[0].mxu0 %v215
  %v552 = vpop.f32.mrb[0].mxu0
  %v553 = vadd.f32 %v91, %v552
  %v554 = vpop.f32.mrb[0].mxu0
  %555 = vmatprep.mubr.f32.mxu0 0.0
  %556 = vmatmul.mubr.f32.gmra.mrb[0].mxu0 %v218
  %v557 = vpop.f32.mrb[0].mxu0
  %v558 = vadd.f32 %v91, %v557
  %v559 = vpop.f32.mrb[0].mxu0
  %560 = vmatprep.mubr.f32.mxu0 0.0
  %561 = vmatmul.mubr.f32.gmra.mrb[0].mxu0 %v221
  %v562 = vpop.f32.mrb[0].mxu0
  %v563 = vadd.f32 %v91, %v562
  %v564 = vpop.f32.mrb[0].mxu0
  %565 = vmatprep.mubr.f32.mxu0 0.0
  %566 = vmatmul.mubr.f32.gmra.mrb[0].mxu0 %v224
  %v567 = vpop.f32.mrb[0].mxu0
  %v568 = vadd.f32 %v91, %v567
  %v569 = vpop.f32.mrb[0].mxu0
  %570 = vmatprep.mubr.f32.mxu0 0.0
  %571 = vmatmul.mubr.f32.gmra.mrb[0].mxu0 %v227
  %v572 = vpop.f32.mrb[0].mxu0
  %v573 = vadd.f32 %v91, %v572
  %v574 = vpop.f32.mrb[0].mxu0
  %575 = vmatprep.mubr.f32.mxu0 0.0
  %576 = vmatmul.mubr.f32.gmra.mrb[0].mxu0 %v230
  %v577 = vpop.f32.mrb[0].mxu0
  %v578 = vadd.f32 %v91, %v577
  %v579 = vpop.f32.mrb[0].mxu0
  %580 = vmatprep.mubr.f32.mxu0 0.0
  %581 = vmatmul.mubr.f32.gmra.mrb[0].mxu0 %v233
  %v582 = vpop.f32.mrb[0].mxu0
  %v583 = vadd.f32 %v91, %v582
  %v584 = vpop.f32.mrb[0].mxu0
  %585 = vmatprep.mubr.f32.mxu0 0.0
  %586 = vmatmul.mubr.f32.gmra.mrb[0].mxu0 %v236
  %v587 = vpop.f32.mrb[0].mxu0
  %v588 = vadd.f32 %v91, %v587
  %v589 = vpop.f32.mrb[0].mxu0
  %590 = vmatprep.mubr.f32.mxu0 0.0
  %591 = vmatmul.mubr.f32.gmra.mrb[0].mxu0 %v239
  %v592 = vpop.f32.mrb[0].mxu0
  %v593 = vadd.f32 %v91, %v592
  %v594 = vpop.f32.mrb[0].mxu0
  %595 = vmatprep.mubr.f32.mxu0 0.0
  %596 = vmatmul.mubr.f32.gmra.mrb[0].mxu0 %v242
  %v597 = vpop.f32.mrb[0].mxu0
  %v598 = vadd.f32 %v91, %v597
  %v599 = vpop.f32.mrb[0].mxu0
  %600 = vmatprep.mubr.f32.mxu0 0.0
  %601 = vmatmul.mubr.f32.gmra.mrb[0].mxu0 %v245
  %v602 = vpop.f32.mrb[0].mxu0
  %v603 = vadd.f32 %v91, %v602
  %v604 = vpop.f32.mrb[0].mxu0
  %605 = vmatprep.mubr.f32.mxu0 0.0
  %606 = vmatmul.mubr.f32.gmra.mrb[0].mxu0 %v248
  %v607 = vpop.f32.mrb[0].mxu0
  %v608 = vadd.f32 %v91, %v607
  %v609 = vpop.f32.mrb[0].mxu0
  %610 = vmatprep.mubr.f32.mxu0 0.0
  %611 = vmatmul.mubr.f32.gmra.mrb[0].mxu0 %v251
  %v612 = vpop.f32.mrb[0].mxu0
  %v613 = vadd.f32 %v91, %v612
  %v614 = vpop.f32.mrb[0].mxu0
  %615 = vmatprep.mubr.f32.mxu0 0.0
  %616 = vmatmul.mubr.f32.gmra.mrb[0].mxu0 %v254
  %v617 = vpop.f32.mrb[0].mxu0
  %v618 = vadd.f32 %v91, %v617
  %v619 = vpop.f32.mrb[0].mxu0
  %620 = vmatprep.mubr.f32.mxu0 0.0
  %621 = vmatmul.mubr.f32.gmra.mrb[0].mxu0 %v257
  %v622 = vpop.f32.mrb[0].mxu0
  %v623 = vadd.f32 %v91, %v622
  %v624 = vpop.f32.mrb[0].mxu0
  %625 = vmatprep.mubr.f32.mxu0 0.0
  %626 = vmatmul.mubr.f32.gmra.mrb[0].mxu0 %v260
  %v627 = vpop.f32.mrb[0].mxu0
  %v628 = vadd.f32 %v91, %v627
  %v629 = vpop.f32.mrb[0].mxu0
  %630 = vmatprep.mubr.f32.mxu0 0.0
  %631 = vmatmul.mubr.f32.gmra.mrb[0].mxu0 %v263
  %v632 = vpop.f32.mrb[0].mxu0
  %v633 = vadd.f32 %v91, %v632
  %v634 = vpop.f32.mrb[0].mxu0
  %635 = vmatprep.mubr.f32.mxu0 0.0
  %636 = vmatmul.mubr.f32.gmra.mrb[0].mxu0 %v266
  %v637 = vpop.f32.mrb[0].mxu0
  %v638 = vadd.f32 %v91, %v637
  %v639 = vpop.f32.mrb[0].mxu0
  %640 = vmatprep.mubr.f32.mxu0 0.0
  %641 = vmatmul.mubr.f32.gmra.mrb[0].mxu0 %v269
  %v642 = vpop.f32.mrb[0].mxu0
  %v643 = vadd.f32 %v91, %v642
  %v644 = vpop.f32.mrb[0].mxu0
  %645 = vmatprep.mubr.f32.mxu0 0.0
  %646 = vmatmul.mubr.f32.gmra.mrb[0].mxu0 %v272
  %v647 = vpop.f32.mrb[0].mxu0
  %v648 = vadd.f32 %v91, %v647
  %v649 = vpop.f32.mrb[0].mxu0
  %650 = vmatprep.mubr.f32.mxu0 0.0
  %651 = vmatmul.mubr.f32.gmra.mrb[0].mxu0 %v275
  %v652 = vpop.f32.mrb[0].mxu0
  %v653 = vadd.f32 %v91, %v652
  %v654 = vpop.f32.mrb[0].mxu0
  %655 = vmatprep.mubr.f32.mxu0 0.0
  %656 = vmatmul.mubr.f32.gmra.mrb[0].mxu0 %v278
  %v657 = vpop.f32.mrb[0].mxu0
  %v658 = vadd.f32 %v91, %v657
  %v659 = vpop.f32.mrb[0].mxu0
  %660 = vmatprep.mubr.f32.mxu0 0.0
  %661 = vmatmul.mubr.f32.gmra.mrb[0].mxu0 %v281
  %v662 = vpop.f32.mrb[0].mxu0
  %v663 = vadd.f32 %v91, %v662
  %v664 = vpop.f32.mrb[0].mxu0
  %665 = vmatprep.mubr.f32.mxu0 0.0
  %666 = vmatmul.mubr.f32.gmra.mrb[0].mxu0 %v284
  %v667 = vpop.f32.mrb[0].mxu0
  %v668 = vadd.f32 %v91, %v667
  %v669 = vpop.f32.mrb[0].mxu0
  %670 = vdwg.mxu0
  %vm671 = vcmask 785408
  %672 = vst.msk [vmem:[#allocation2] sm:$0xff] %vm671, %v353
  %673 = vst.msk [vmem:[#allocation2 + $0x8] sm:$0xff] %vm671, %v358
  %674 = vst.msk [vmem:[#allocation2 + $0x10] sm:$0xff] %vm671, %v363
  %675 = vst.msk [vmem:[#allocation2 + $0x18] sm:$0xff] %vm671, %v368
  %676 = vst.msk [vmem:[#allocation2 + $0x20] sm:$0xff] %vm671, %v373
  %677 = vst.msk [vmem:[#allocation2 + $0x28] sm:$0xff] %vm671, %v378
  %678 = vst.msk [vmem:[#allocation2 + $0x30] sm:$0xff] %vm671, %v383
  %679 = vst.msk [vmem:[#allocation2 + $0x38] sm:$0xff] %vm671, %v388
  %680 = vst.msk [vmem:[#allocation2 + $0x40] sm:$0xff] %vm671, %v393
  %681 = vst.msk [vmem:[#allocation2 + $0x48] sm:$0xff] %vm671, %v398
  %682 = vst.msk [vmem:[#allocation2 + $0x50] sm:$0xff] %vm671, %v403
  %683 = vst.msk [vmem:[#allocation2 + $0x58] sm:$0xff] %vm671, %v408
  %684 = vst.msk [vmem:[#allocation2 + $0x60] sm:$0xff] %vm671, %v413
  %685 = vst.msk [vmem:[#allocation2 + $0x68] sm:$0xff] %vm671, %v418
  %686 = vst.msk [vmem:[#allocation2 + $0x70] sm:$0xff] %vm671, %v423
  %687 = vst.msk [vmem:[#allocation2 + $0x78] sm:$0xff] %vm671, %v428
  %688 = vst.msk [vmem:[#allocation2 + $0x80] sm:$0xff] %vm671, %v433
  %689 = vst.msk [vmem:[#allocation2 + $0x88] sm:$0xff] %vm671, %v438
  %690 = vst.msk [vmem:[#allocation2 + $0x90] sm:$0xff] %vm671, %v443
  %691 = vst.msk [vmem:[#allocation2 + $0x98] sm:$0xff] %vm671, %v448
  %692 = vst.msk [vmem:[#allocation2 + $0xa0] sm:$0xff] %vm671, %v453
  %693 = vst.msk [vmem:[#allocation2 + $0xa8] sm:$0xff] %vm671, %v458
  %694 = vst.msk [vmem:[#allocation2 + $0xb0] sm:$0xff] %vm671, %v463
  %695 = vst.msk [vmem:[#allocation2 + $0xb8] sm:$0xff] %vm671, %v468
  %696 = vst.msk [vmem:[#allocation2 + $0xc0] sm:$0xff] %vm671, %v473
  %697 = vst.msk [vmem:[#allocation2 + $0xc8] sm:$0xff] %vm671, %v478
  %698 = vst.msk [vmem:[#allocation2 + $0xd0] sm:$0xff] %vm671, %v483
  %699 = vst.msk [vmem:[#allocation2 + $0xd8] sm:$0xff] %vm671, %v488
  %700 = vst.msk [vmem:[#allocation2 + $0xe0] sm:$0xff] %vm671, %v493
  %701 = vst.msk [vmem:[#allocation2 + $0xe8] sm:$0xff] %vm671, %v498
  %702 = vst.msk [vmem:[#allocation2 + $0xf0] sm:$0xff] %vm671, %v503
  %703 = vst.msk [vmem:[#allocation2 + $0xf8] sm:$0xff] %vm671, %v508
  %704 = vst.msk [vmem:[#allocation2 + $0x100] sm:$0xff] %vm671, %v513
  %705 = vst.msk [vmem:[#allocation2 + $0x108] sm:$0xff] %vm671, %v518
  %706 = vst.msk [vmem:[#allocation2 + $0x110] sm:$0xff] %vm671, %v523
  %707 = vst.msk [vmem:[#allocation2 + $0x118] sm:$0xff] %vm671, %v528
  %708 = vst.msk [vmem:[#allocation2 + $0x120] sm:$0xff] %vm671, %v533
  %709 = vst.msk [vmem:[#allocation2 + $0x128] sm:$0xff] %vm671, %v538
  %710 = vst.msk [vmem:[#allocation2 + $0x130] sm:$0xff] %vm671, %v543
  %711 = vst.msk [vmem:[#allocation2 + $0x138] sm:$0xff] %vm671, %v548
  %712 = vst.msk [vmem:[#allocation2 + $0x140] sm:$0xff] %vm671, %v553
  %713 = vst.msk [vmem:[#allocation2 + $0x148] sm:$0xff] %vm671, %v558
  %714 = vst.msk [vmem:[#allocation2 + $0x150] sm:$0xff] %vm671, %v563
  %715 = vst.msk [vmem:[#allocation2 + $0x158] sm:$0xff] %vm671, %v568
  %716 = vst.msk [vmem:[#allocation2 + $0x160] sm:$0xff] %vm671, %v573
  %717 = vst.msk [vmem:[#allocation2 + $0x168] sm:$0xff] %vm671, %v578
  %718 = vst.msk [vmem:[#allocation2 + $0x170] sm:$0xff] %vm671, %v583
  %719 = vst.msk [vmem:[#allocation2 + $0x178] sm:$0xff] %vm671, %v588
  %720 = vst.msk [vmem:[#allocation2 + $0x180] sm:$0xff] %vm671, %v593
  %721 = vst.msk [vmem:[#allocation2 + $0x188] sm:$0xff] %vm671, %v598
  %722 = vst.msk [vmem:[#allocation2 + $0x190] sm:$0xff] %vm671, %v603
  %723 = vst.msk [vmem:[#allocation2 + $0x198] sm:$0xff] %vm671, %v608
  %724 = vst.msk [vmem:[#allocation2 + $0x1a0] sm:$0xff] %vm671, %v613
  %725 = vst.msk [vmem:[#allocation2 + $0x1a8] sm:$0xff] %vm671, %v618
  %726 = vst.msk [vmem:[#allocation2 + $0x1b0] sm:$0xff] %vm671, %v623
  %727 = vst.msk [vmem:[#allocation2 + $0x1b8] sm:$0xff] %vm671, %v628
  %728 = vst.msk [vmem:[#allocation2 + $0x1c0] sm:$0xff] %vm671, %v633
  %729 = vst.msk [vmem:[#allocation2 + $0x1c8] sm:$0xff] %vm671, %v638
  %730 = vst.msk [vmem:[#allocation2 + $0x1d0] sm:$0xff] %vm671, %v643
  %731 = vst.msk [vmem:[#allocation2 + $0x1d8] sm:$0xff] %vm671, %v648
  %732 = vst.msk [vmem:[#allocation2 + $0x1e0] sm:$0xff] %vm671, %v653
  %733 = vst.msk [vmem:[#allocation2 + $0x1e8] sm:$0xff] %vm671, %v658
  %734 = vst.msk [vmem:[#allocation2 + $0x1f0] sm:$0xff] %vm671, %v663
  %735 = vst.msk [vmem:[#allocation2 + $0x1f8] sm:$0xff] %vm671, %v668
  %v736 = vld [vmem:[%s3] sm:$0xff]
  %v737 = vld [vmem:[%s3 + $0x8] sm:$0xff]
  %v738 = vld [vmem:[%s3 + $0x10] sm:$0xff]
  %v739 = vld [vmem:[%s3 + $0x18] sm:$0xff]
  %v740 = vld [vmem:[%s4] sm:$0xff]
  %v741 = vld [vmem:[%s4 + $0x8] sm:$0xff]
  %v742 = vld [vmem:[%s4 + $0x10] sm:$0xff]
  %v743 = vld [vmem:[%s4 + $0x18] sm:$0xff]
  %v744 = vld [vmem:[#allocation2] sm:$0xff]
  %v745 = vld [vmem:[#allocation2 + $0x8] sm:$0xff]
  %v746 = vld [vmem:[#allocation2 + $0x10] sm:$0xff]
  %v747 = vld [vmem:[#allocation2 + $0x18] sm:$0xff]
  %v748 = vld [vmem:[#allocation2 + $0x20] sm:$0xff]
  %v749 = vld [vmem:[#allocation2 + $0x28] sm:$0xff]
  %v750 = vld [vmem:[#allocation2 + $0x30] sm:$0xff]
  %v751 = vld [vmem:[#allocation2 + $0x38] sm:$0xff]
  %vm752 = vcmask 261120
  %v754 = vsel %vm752, 0.0, 0
  %756 = vmatprep.subr.mxu0 0.0
  %757 = vmatpush1.msra.mxu0 %v736
  %758 = vmatprep.subr.mxu0 0.0
  %759 = vmatpush1.msra.mxu0 %v737
  %760 = vmatprep.subr.mxu0 0.0
  %761 = vmatpush1.msra.mxu0 %v738
  %762 = vmatprep.subr.mxu0 0.0
  %763 = vmatpush1.msra.mxu0 %v739
  %764 = vmatprep.subr.mxu0 0.0
  %765 = vmatpush1.msra.mxu0 0.0
  %766 = vmatprep.subr.mxu0 0.0
  %767 = vmatpush1.msra.mxu0 0.0
  %768 = vmatprep.subr.mxu0 0.0
  %769 = vmatpush1.msra.mxu0 0.0
  %770 = vmatprep.subr.mxu0 0.0
  %771 = vmatpush1.msra.mxu0 0.0
  %772 = vmatprep.subr.mxu0 0.0
  %773 = vmatpush1.msra.mxu0 0.0
  %774 = vmatprep.subr.mxu0 0.0
  %775 = vmatpush1.msra.mxu0 0.0
  %776 = vmatprep.subr.mxu0 0.0
  %777 = vmatpush1.msra.mxu0 0.0
  %778 = vmatprep.subr.mxu0 0.0
  %779 = vmatpush1.msra.mxu0 0.0
  %780 = vmatprep.subr.mxu0 0.0
  %781 = vmatpush1.msra.mxu0 0.0
  %782 = vmatprep.subr.mxu0 0.0
  %783 = vmatpush1.msra.mxu0 0.0
  %784 = vmatprep.subr.mxu0 0.0
  %785 = vmatpush1.msra.mxu0 0.0
  %786 = vmatprep.subr.mxu0 0.0
  %787 = vmatpush1.msra.mxu0 0.0
  %788 = vmatprep.subr.mxu0 0.0
  %789 = vmatpush1.msra.mxu0 0.0
  %790 = vmatprep.subr.mxu0 0.0
  %791 = vmatpush1.msra.mxu0 0.0
  %792 = vmatprep.subr.mxu0 0.0
  %793 = vmatpush1.msra.mxu0 0.0
  %794 = vmatprep.subr.mxu0 0.0
  %795 = vmatpush1.msra.mxu0 0.0
  %796 = vmatprep.subr.mxu0 0.0
  %797 = vmatpush1.msra.mxu0 0.0
  %798 = vmatprep.subr.mxu0 0.0
  %799 = vmatpush1.msra.mxu0 0.0
  %800 = vmatprep.subr.mxu0 0.0
  %801 = vmatpush1.msra.mxu0 0.0
  %802 = vmatprep.subr.mxu0 0.0
  %803 = vmatpush1.msra.mxu0 0.0
  %804 = vmatprep.subr.mxu0 0.0
  %805 = vmatpush1.msra.mxu0 0.0
  %806 = vmatprep.subr.mxu0 0.0
  %807 = vmatpush1.msra.mxu0 0.0
  %808 = vmatprep.subr.mxu0 0.0
  %809 = vmatpush1.msra.mxu0 0.0
  %810 = vmatprep.subr.mxu0 0.0
  %811 = vmatpush1.msra.mxu0 0.0
  %812 = vmatprep.subr.mxu0 0.0
  %813 = vmatpush1.msra.mxu0 0.0
  %814 = vmatprep.subr.mxu0 0.0
  %815 = vmatpush1.msra.mxu0 0.0
  %816 = vmatprep.subr.mxu0 0.0
  %817 = vmatpush1.msra.mxu0 0.0
  %818 = vmatprep.subr.mxu0 0.0
  %819 = vmatpush1.msra.mxu0 0.0
  %820 = vmatprep.mubr.f32.mxu0 0.0
  %821 = vmatmul.mubr.f32.gmra.mrb[0].mxu0 %v754
  %v822 = vpop.f32.mrb[0].mxu0
  %v823 = vadd.f32 %v744, %v822
  %v824 = vpop.f32.mrb[0].mxu0
  %825 = vmatprep.mubr.f32.mxu0 0.0
  %826 = vmatmul.mubr.f32.gmra.mrb[0].mxu0 %v754
  %v827 = vpop.f32.mrb[0].mxu0
  %v828 = vadd.f32 %v745, %v827
  %v829 = vpop.f32.mrb[0].mxu0
  %830 = vmatprep.mubr.f32.mxu0 0.0
  %831 = vmatmul.mubr.f32.gmra.mrb[0].mxu0 %v754
  %v832 = vpop.f32.mrb[0].mxu0
  %v833 = vadd.f32 %v746, %v832
  %v834 = vpop.f32.mrb[0].mxu0
  %835 = vmatprep.mubr.f32.mxu0 0.0
  %836 = vmatmul.mubr.f32.gmra.mrb[0].mxu0 %v754
  %v837 = vpop.f32.mrb[0].mxu0
  %v838 = vadd.f32 %v747, %v837
  %v839 = vpop.f32.mrb[0].mxu0
  %840 = vmatprep.mubr.f32.mxu0 0.0
  %841 = vmatmul.mubr.f32.gmra.mrb[0].mxu0 %v754
  %v842 = vpop.f32.mrb[0].mxu0
  %v843 = vadd.f32 %v748, %v842
  %v844 = vpop.f32.mrb[0].mxu0
  %845 = vmatprep.mubr.f32.mxu0 0.0
  %846 = vmatmul.mubr.f32.gmra.mrb[0].mxu0 %v754
  %v847 = vpop.f32.mrb[0].mxu0
  %v848 = vadd.f32 %v749, %v847
  %v849 = vpop.f32.mrb[0].mxu0
  %850 = vmatprep.mubr.f32.mxu0 0.0
  %851 = vmatmul.mubr.f32.gmra.mrb[0].mxu0 %v754
  %v852 = vpop.f32.mrb[0].mxu0
  %v853 = vadd.f32 %v750, %v852
  %v854 = vpop.f32.mrb[0].mxu0
  %855 = vmatprep.mubr.f32.mxu0 0.0
  %856 = vmatmul.mubr.f32.gmra.mrb[0].mxu0 %v754
  %v857 = vpop.f32.mrb[0].mxu0
  %v858 = vadd.f32 %v751, %v857
  %v859 = vpop.f32.mrb[0].mxu0
  %860 = vdwg.mxu0
  %v861 = vxor.u32 %v823, 2147483648
  %v862 = vxor.u32 %v828, 2147483648
  %v863 = vxor.u32 %v833, 2147483648
  %v864 = vxor.u32 %v838, 2147483648
  %v865 = vxor.u32 %v843, 2147483648
  %v866 = vxor.u32 %v848, 2147483648
  %v867 = vxor.u32 %v853, 2147483648
  %v868 = vxor.u32 %v858, 2147483648
  %v869 = vmul.f32 %v861, 1.442695
  %v870 = vpow.pop %v869
  %v871 = vmul.f32 %v862, 1.442695
  %v872 = vpow.pop %v871
  %v873 = vmul.f32 %v863, 1.442695
  %v874 = vpow.pop %v873
  %v875 = vmul.f32 %v864, 1.442695
  %v876 = vpow.pop %v875
  %v877 = vmul.f32 %v865, 1.442695
  %v878 = vpow.pop %v877
  %v879 = vmul.f32 %v866, 1.442695
  %v880 = vpow.pop %v879
  %v881 = vmul.f32 %v867, 1.442695
  %v882 = vpow.pop %v881
  %v883 = vmul.f32 %v868, 1.442695
  %v884 = vpow.pop %v883
  %v885 = vadd.f32 %v870, 1.0
  %v886 = vadd.f32 %v872, 1.0
  %v887 = vadd.f32 %v874, 1.0
  %v888 = vadd.f32 %v876, 1.0
  %v889 = vadd.f32 %v878, 1.0
  %v890 = vadd.f32 %v880, 1.0
  %v891 = vadd.f32 %v882, 1.0
  %v892 = vadd.f32 %v884, 1.0
  %v893 = vrcp.pop %v885
  %v894 = vmul.f32 1.0, %v893
  %v895 = vrcp.pop %v886
  %v896 = vmul.f32 1.0, %v895
  %v897 = vrcp.pop %v887
  %v898 = vmul.f32 1.0, %v897
  %v899 = vrcp.pop %v888
  %v900 = vmul.f32 1.0, %v899
  %v901 = vrcp.pop %v889
  %v902 = vmul.f32 1.0, %v901
  %v903 = vrcp.pop %v890
  %v904 = vmul.f32 1.0, %v903
  %v905 = vrcp.pop %v891
  %v906 = vmul.f32 1.0, %v905
  %v907 = vrcp.pop %v892
  %v908 = vmul.f32 1.0, %v907
  %v909 = vmul.f32 %v894, 0.0
  %v910 = vmul.f32 %v896, 0.0
  %v911 = vmul.f32 %v898, 0.0
  %v912 = vmul.f32 %v900, 0.0
  %v913 = vmul.f32 %v902, 0.0
  %v914 = vmul.f32 %v904, 0.0
  %v915 = vmul.f32 %v906, 0.0
  %v916 = vmul.f32 %v908, 0.0
  %925 = vrot.lane.b32.xlu0 %v744, 64
  %v926 = vpop.permute.xlu0 %925
  %927 = vrot.lane.b32.xlu0 %v745, 64
  %v928 = vpop.permute.xlu0 %927
  %929 = vrot.lane.b32.xlu0 %v746, 64
  %v930 = vpop.permute.xlu0 %929
  %931 = vrot.lane.b32.xlu0 %v747, 64
  %v932 = vpop.permute.xlu0 %931
  %933 = vrot.lane.b32.xlu0 %v748, 64
  %v934 = vpop.permute.xlu0 %933
  %935 = vrot.lane.b32.xlu0 %v749, 64
  %v936 = vpop.permute.xlu0 %935
  %937 = vrot.lane.b32.xlu0 %v750, 64
  %v938 = vpop.permute.xlu0 %937
  %939 = vrot.lane.b32.xlu0 %v751, 64
  %v940 = vpop.permute.xlu0 %939
  %v950 = vsel %vm752, %v909, 0
  %v953 = vsel %vm752, %v910, 0
  %v956 = vsel %vm752, %v911, 0
  %v959 = vsel %vm752, %v912, 0
  %v962 = vsel %vm752, %v913, 0
  %v965 = vsel %vm752, %v914, 0
  %v968 = vsel %vm752, %v915, 0
  %v971 = vsel %vm752, %v916, 0
  %973 = vmatprep.subr.mxu0 0.0
  %974 = vmatpush1.msra.mxu0 %v740
  %975 = vmatprep.subr.mxu0 0.0
  %976 = vmatpush1.msra.mxu0 %v741
  %977 = vmatprep.subr.mxu0 0.0
  %978 = vmatpush1.msra.mxu0 %v742
  %979 = vmatprep.subr.mxu0 0.0
  %980 = vmatpush1.msra.mxu0 %v743
  %981 = vmatprep.subr.mxu0 0.0
  %982 = vmatpush1.msra.mxu0 0.0
  %983 = vmatprep.subr.mxu0 0.0
  %984 = vmatpush1.msra.mxu0 0.0
  %985 = vmatprep.subr.mxu0 0.0
  %986 = vmatpush1.msra.mxu0 0.0
  %987 = vmatprep.subr.mxu0 0.0
  %988 = vmatpush1.msra.mxu0 0.0
  %989 = vmatprep.subr.mxu0 0.0
  %990 = vmatpush1.msra.mxu0 0.0
  %991 = vmatprep.subr.mxu0 0.0
  %992 = vmatpush1.msra.mxu0 0.0
  %993 = vmatprep.subr.mxu0 0.0
  %994 = vmatpush1.msra.mxu0 0.0
  %995 = vmatprep.subr.mxu0 0.0
  %996 = vmatpush1.msra.mxu0 0.0
  %997 = vmatprep.subr.mxu0 0.0
  %998 = vmatpush1.msra.mxu0 0.0
  %999 = vmatprep.subr.mxu0 0.0
  %1000 = vmatpush1.msra.mxu0 0.0
  %1001 = vmatprep.subr.mxu0 0.0
  %1002 = vmatpush1.msra.mxu0 0.0
  %1003 = vmatprep.subr.mxu0 0.0
  %1004 = vmatpush1.msra.mxu0 0.0
  %1005 = vmatprep.subr.mxu0 0.0
  %1006 = vmatpush1.msra.mxu0 0.0
  %1007 = vmatprep.subr.mxu0 0.0
  %1008 = vmatpush1.msra.mxu0 0.0
  %1009 = vmatprep.subr.mxu0 0.0
  %1010 = vmatpush1.msra.mxu0 0.0
  %1011 = vmatprep.subr.mxu0 0.0
  %1012 = vmatpush1.msra.mxu0 0.0
  %1013 = vmatprep.subr.mxu0 0.0
  %1014 = vmatpush1.msra.mxu0 0.0
  %1015 = vmatprep.subr.mxu0 0.0
  %1016 = vmatpush1.msra.mxu0 0.0
  %1017 = vmatprep.subr.mxu0 0.0
  %1018 = vmatpush1.msra.mxu0 0.0
  %1019 = vmatprep.subr.mxu0 0.0
  %1020 = vmatpush1.msra.mxu0 0.0
  %1021 = vmatprep.subr.mxu0 0.0
  %1022 = vmatpush1.msra.mxu0 0.0
  %1023 = vmatprep.subr.mxu0 0.0
  %1024 = vmatpush1.msra.mxu0 0.0
  %1025 = vmatprep.subr.mxu0 0.0
  %1026 = vmatpush1.msra.mxu0 0.0
  %1027 = vmatprep.subr.mxu0 0.0
  %1028 = vmatpush1.msra.mxu0 0.0
  %1029 = vmatprep.subr.mxu0 0.0
  %1030 = vmatpush1.msra.mxu0 0.0
  %1031 = vmatprep.subr.mxu0 0.0
  %1032 = vmatpush1.msra.mxu0 0.0
  %1033 = vmatprep.subr.mxu0 0.0
  %1034 = vmatpush1.msra.mxu0 0.0
  %1035 = vmatprep.subr.mxu0 0.0
  %1036 = vmatpush1.msra.mxu0 0.0
  %1037 = vmatprep.mubr.f32.mxu0 0.0
  %1038 = vmatmul.mubr.f32.gmra.mrb[0].mxu0 %v950
  %v1039 = vpop.f32.mrb[0].mxu0
  %v1040 = vadd.f32 %v926, %v1039
  %v1041 = vpop.f32.mrb[0].mxu0
  %1042 = vmatprep.mubr.f32.mxu0 0.0
  %1043 = vmatmul.mubr.f32.gmra.mrb[0].mxu0 %v953
  %v1044 = vpop.f32.mrb[0].mxu0
  %v1045 = vadd.f32 %v928, %v1044
  %v1046 = vpop.f32.mrb[0].mxu0
  %1047 = vmatprep.mubr.f32.mxu0 0.0
  %1048 = vmatmul.mubr.f32.gmra.mrb[0].mxu0 %v956
  %v1049 = vpop.f32.mrb[0].mxu0
  %v1050 = vadd.f32 %v930, %v1049
  %v1051 = vpop.f32.mrb[0].mxu0
  %1052 = vmatprep.mubr.f32.mxu0 0.0
  %1053 = vmatmul.mubr.f32.gmra.mrb[0].mxu0 %v959
  %v1054 = vpop.f32.mrb[0].mxu0
  %v1055 = vadd.f32 %v932, %v1054
  %v1056 = vpop.f32.mrb[0].mxu0
  %1057 = vmatprep.mubr.f32.mxu0 0.0
  %1058 = vmatmul.mubr.f32.gmra.mrb[0].mxu0 %v962
  %v1059 = vpop.f32.mrb[0].mxu0
  %v1060 = vadd.f32 %v934, %v1059
  %v1061 = vpop.f32.mrb[0].mxu0
  %1062 = vmatprep.mubr.f32.mxu0 0.0
  %1063 = vmatmul.mubr.f32.gmra.mrb[0].mxu0 %v965
  %v1064 = vpop.f32.mrb[0].mxu0
  %v1065 = vadd.f32 %v936, %v1064
  %v1066 = vpop.f32.mrb[0].mxu0
  %1067 = vmatprep.mubr.f32.mxu0 0.0
  %1068 = vmatmul.mubr.f32.gmra.mrb[0].mxu0 %v968
  %v1069 = vpop.f32.mrb[0].mxu0
  %v1070 = vadd.f32 %v938, %v1069
  %v1071 = vpop.f32.mrb[0].mxu0
  %1072 = vmatprep.mubr.f32.mxu0 0.0
  %1073 = vmatmul.mubr.f32.gmra.mrb[0].mxu0 %v971
  %v1074 = vpop.f32.mrb[0].mxu0
  %v1075 = vadd.f32 %v940, %v1074
  %v1076 = vpop.f32.mrb[0].mxu0
  %1077 = vdwg.mxu0
  %v1078 = vtanh.pop %v1040
  %v1079 = vtanh.pop %v1045
  %v1080 = vtanh.pop %v1050
  %v1081 = vtanh.pop %v1055
  %v1082 = vtanh.pop %v1060
  %v1083 = vtanh.pop %v1065
  %v1084 = vtanh.pop %v1070
  %v1085 = vtanh.pop %v1075
  %v1086 = vsub.f32 1.0, %v894
  %v1087 = vsub.f32 1.0, %v896
  %v1088 = vsub.f32 1.0, %v898
  %v1089 = vsub.f32 1.0, %v900
  %v1090 = vsub.f32 1.0, %v902
  %v1091 = vsub.f32 1.0, %v904
  %v1092 = vsub.f32 1.0, %v906
  %v1093 = vsub.f32 1.0, %v908
  %v1094 = vmul.f32 %v1086, 0.0
  %v1095 = vmul.f32 %v1087, 0.0
  %v1096 = vmul.f32 %v1088, 0.0
  %v1097 = vmul.f32 %v1089, 0.0
  %v1098 = vmul.f32 %v1090, 0.0
  %v1099 = vmul.f32 %v1091, 0.0
  %v1100 = vmul.f32 %v1092, 0.0
  %v1101 = vmul.f32 %v1093, 0.0
  %1110 = vrot.lane.b32.xlu0 %v1078, 32
  %v1111 = vpop.permute.xlu0 %1110
  %1112 = vrot.lane.b32.xlu0 %v1079, 32
  %v1113 = vpop.permute.xlu0 %1112
  %1114 = vrot.lane.b32.xlu0 %v1080, 32
  %v1115 = vpop.permute.xlu0 %1114
  %1116 = vrot.lane.b32.xlu0 %v1081, 32
  %v1117 = vpop.permute.xlu0 %1116
  %1118 = vrot.lane.b32.xlu0 %v1082, 32
  %v1119 = vpop.permute.xlu0 %1118
  %1120 = vrot.lane.b32.xlu0 %v1083, 32
  %v1121 = vpop.permute.xlu0 %1120
  %1122 = vrot.lane.b32.xlu0 %v1084, 32
  %v1123 = vpop.permute.xlu0 %1122
  %1124 = vrot.lane.b32.xlu0 %v1085, 32
  %v1125 = vpop.permute.xlu0 %1124
  %v1134 = vmul.f32 %v894, %v1111
  %v1135 = vmul.f32 %v896, %v1113
  %v1136 = vmul.f32 %v898, %v1115
  %v1137 = vmul.f32 %v900, %v1117
  %v1138 = vmul.f32 %v902, %v1119
  %v1139 = vmul.f32 %v904, %v1121
  %v1140 = vmul.f32 %v906, %v1123
  %v1141 = vmul.f32 %v908, %v1125
  %v1142 = vadd.f32 %v1094, %v1134
  %v1143 = vadd.f32 %v1095, %v1135
  %v1144 = vadd.f32 %v1096, %v1136
  %v1145 = vadd.f32 %v1097, %v1137
  %v1146 = vadd.f32 %v1098, %v1138
  %v1147 = vadd.f32 %v1099, %v1139
  %v1148 = vadd.f32 %v1100, %v1140
  %v1149 = vadd.f32 %v1101, %v1141
  %v1150 = vld [vmem:[#allocation2 + $0x40] sm:$0xff]
  %v1151 = vld [vmem:[#allocation2 + $0x48] sm:$0xff]
  %v1152 = vld [vmem:[#allocation2 + $0x50] sm:$0xff]
  %v1153 = vld [vmem:[#allocation2 + $0x58] sm:$0xff]
  %v1154 = vld [vmem:[#allocation2 + $0x60] sm:$0xff]
  %v1155 = vld [vmem:[#allocation2 + $0x68] sm:$0xff]
  %v1156 = vld [vmem:[#allocation2 + $0x70] sm:$0xff]
  %v1157 = vld [vmem:[#allocation2 + $0x78] sm:$0xff]
  %1166 = vrot.lane.b32.xlu0 %v1142, 96
  %v1167 = vpop.permute.xlu0 %1166
  %1168 = vrot.lane.b32.xlu0 %v1143, 96
  %v1169 = vpop.permute.xlu0 %1168
  %1170 = vrot.lane.b32.xlu0 %v1144, 96
  %v1171 = vpop.permute.xlu0 %1170
  %1172 = vrot.lane.b32.xlu0 %v1145, 96
  %v1173 = vpop.permute.xlu0 %1172
  %1174 = vrot.lane.b32.xlu0 %v1146, 96
  %v1175 = vpop.permute.xlu0 %1174
  %1176 = vrot.lane.b32.xlu0 %v1147, 96
  %v1177 = vpop.permute.xlu0 %1176
  %1178 = vrot.lane.b32.xlu0 %v1148, 96
  %v1179 = vpop.permute.xlu0 %1178
  %1180 = vrot.lane.b32.xlu0 %v1149, 96
  %v1181 = vpop.permute.xlu0 %1180
  %v1182 = vsel %vm752, %v1167, 0
  %v1184 = vsel %vm752, %v1169, 0
  %v1186 = vsel %vm752, %v1171, 0
  %v1188 = vsel %vm752, %v1173, 0
  %v1190 = vsel %vm752, %v1175, 0
  %v1192 = vsel %vm752, %v1177, 0
  %v1194 = vsel %vm752, %v1179, 0
  %v1196 = vsel %vm752, %v1181, 0
  %1198 = vmatprep.subr.mxu0 0.0
  %1199 = vmatpush1.msra.mxu0 %v736
  %1200 = vmatprep.subr.mxu0 0.0
  %1201 = vmatpush1.msra.mxu0 %v737
  %1202 = vmatprep.subr.mxu0 0.0
  %1203 = vmatpush1.msra.mxu0 %v738
  %1204 = vmatprep.subr.mxu0 0.0
  %1205 = vmatpush1.msra.mxu0 %v739
  %1206 = vmatprep.subr.mxu0 0.0
  %1207 = vmatpush1.msra.mxu0 0.0
  %1208 = vmatprep.subr.mxu0 0.0
  %1209 = vmatpush1.msra.mxu0 0.0
  %1210 = vmatprep.subr.mxu0 0.0
  %1211 = vmatpush1.msra.mxu0 0.0
  %1212 = vmatprep.subr.mxu0 0.0
  %1213 = vmatpush1.msra.mxu0 0.0
  %1214 = vmatprep.subr.mxu0 0.0
  %1215 = vmatpush1.msra.mxu0 0.0
  %1216 = vmatprep.subr.mxu0 0.0
  %1217 = vmatpush1.msra.mxu0 0.0
  %1218 = vmatprep.subr.mxu0 0.0
  %1219 = vmatpush1.msra.mxu0 0.0
  %1220 = vmatprep.subr.mxu0 0.0
  %1221 = vmatpush1.msra.mxu0 0.0
  %1222 = vmatprep.subr.mxu0 0.0
  %1223 = vmatpush1.msra.mxu0 0.0
  %1224 = vmatprep.subr.mxu0 0.0
  %1225 = vmatpush1.msra.mxu0 0.0
  %1226 = vmatprep.subr.mxu0 0.0
  %1227 = vmatpush1.msra.mxu0 0.0
  %1228 = vmatprep.subr.mxu0 0.0
  %1229 = vmatpush1.msra.mxu0 0.0
  %1230 = vmatprep.subr.mxu0 0.0
  %1231 = vmatpush1.msra.mxu0 0.0
  %1232 = vmatprep.subr.mxu0 0.0
  %1233 = vmatpush1.msra.mxu0 0.0
  %1234 = vmatprep.subr.mxu0 0.0
  %1235 = vmatpush1.msra.mxu0 0.0
  %1236 = vmatprep.subr.mxu0 0.0
  %1237 = vmatpush1.msra.mxu0 0.0
  %1238 = vmatprep.subr.mxu0 0.0
  %1239 = vmatpush1.msra.mxu0 0.0
  %1240 = vmatprep.subr.mxu0 0.0
  %1241 = vmatpush1.msra.mxu0 0.0
  %1242 = vmatprep.subr.mxu0 0.0
  %1243 = vmatpush1.msra.mxu0 0.0
  %1244 = vmatprep.subr.mxu0 0.0
  %1245 = vmatpush1.msra.mxu0 0.0
  %1246 = vmatprep.subr.mxu0 0.0
  %1247 = vmatpush1.msra.mxu0 0.0
  %1248 = vmatprep.subr.mxu0 0.0
  %1249 = vmatpush1.msra.mxu0 0.0
  %1250 = vmatprep.subr.mxu0 0.0
  %1251 = vmatpush1.msra.mxu0 0.0
  %1252 = vmatprep.subr.mxu0 0.0
  %1253 = vmatpush1.msra.mxu0 0.0
  %1254 = vmatprep.subr.mxu0 0.0
  %1255 = vmatpush1.msra.mxu0 0.0
  %1256 = vmatprep.subr.mxu0 0.0
  %1257 = vmatpush1.msra.mxu0 0.0
  %1258 = vmatprep.subr.mxu0 0.0
  %1259 = vmatpush1.msra.mxu0 0.0
  %1260 = vmatprep.subr.mxu0 0.0
  %1261 = vmatpush1.msra.mxu0 0.0
  %1262 = vmatprep.mubr.f32.mxu0 0.0
  %1263 = vmatmul.mubr.f32.gmra.mrb[0].mxu0 %v1182
  %v1264 = vpop.f32.mrb[0].mxu0
  %v1265 = vadd.f32 %v1150, %v1264
  %v1266 = vpop.f32.mrb[0].mxu0
  %1267 = vmatprep.mubr.f32.mxu0 0.0
  %1268 = vmatmul.mubr.f32.gmra.mrb[0].mxu0 %v1184
  %v1269 = vpop.f32.mrb[0].mxu0
  %v1270 = vadd.f32 %v1151, %v1269
  %v1271 = vpop.f32.mrb[0].mxu0
  %1272 = vmatprep.mubr.f32.mxu0 0.0
  %1273 = vmatmul.mubr.f32.gmra.mrb[0].mxu0 %v1186
  %v1274 = vpop.f32.mrb[0].mxu0
  %v1275 = vadd.f32 %v1152, %v1274
  %v1276 = vpop.f32.mrb[0].mxu0
  %1277 = vmatprep.mubr.f32.mxu0 0.0
  %1278 = vmatmul.mubr.f32.gmra.mrb[0].mxu0 %v1188
  %v1279 = vpop.f32.mrb[0].mxu0
  %v1280 = vadd.f32 %v1153, %v1279
  %v1281 = vpop.f32.mrb[0].mxu0
  %1282 = vmatprep.mubr.f32.mxu0 0.0
  %1283 = vmatmul.mubr.f32.gmra.mrb[0].mxu0 %v1190
  %v1284 = vpop.f32.mrb[0].mxu0
  %v1285 = vadd.f32 %v1154, %v1284
  %v1286 = vpop.f32.mrb[0].mxu0
  %1287 = vmatprep.mubr.f32.mxu0 0.0
  %1288 = vmatmul.mubr.f32.gmra.mrb[0].mxu0 %v1192
  %v1289 = vpop.f32.mrb[0].mxu0
  %v1290 = vadd.f32 %v1155, %v1289
  %v1291 = vpop.f32.mrb[0].mxu0
  %1292 = vmatprep.mubr.f32.mxu0 0.0
  %1293 = vmatmul.mubr.f32.gmra.mrb[0].mxu0 %v1194
  %v1294 = vpop.f32.mrb[0].mxu0
  %v1295 = vadd.f32 %v1156, %v1294
  %v1296 = vpop.f32.mrb[0].mxu0
  %1297 = vmatprep.mubr.f32.mxu0 0.0
  %1298 = vmatmul.mubr.f32.gmra.mrb[0].mxu0 %v1196
  %v1299 = vpop.f32.mrb[0].mxu0
  %v1300 = vadd.f32 %v1157, %v1299
  %v1301 = vpop.f32.mrb[0].mxu0
  %1302 = vdwg.mxu0
  %v1303 = vxor.u32 %v1265, 2147483648
  %v1304 = vxor.u32 %v1270, 2147483648
  %v1305 = vxor.u32 %v1275, 2147483648
  %v1306 = vxor.u32 %v1280, 2147483648
  %v1307 = vxor.u32 %v1285, 2147483648
  %v1308 = vxor.u32 %v1290, 2147483648
  %v1309 = vxor.u32 %v1295, 2147483648
  %v1310 = vxor.u32 %v1300, 2147483648
  %v1311 = vmul.f32 %v1303, 1.442695
  %v1312 = vpow.pop %v1311
  %v1313 = vmul.f32 %v1304, 1.442695
  %v1314 = vpow.pop %v1313
  %v1315 = vmul.f32 %v1305, 1.442695
  %v1316 = vpow.pop %v1315
  %v1317 = vmul.f32 %v1306, 1.442695
  %v1318 = vpow.pop %v1317
  %v1319 = vmul.f32 %v1307, 1.442695
  %v1320 = vpow.pop %v1319
  %v1321 = vmul.f32 %v1308, 1.442695
  %v1322 = vpow.pop %v1321
  %v1323 = vmul.f32 %v1309, 1.442695
  %v1324 = vpow.pop %v1323
  %v1325 = vmul.f32 %v1310, 1.442695
  %v1326 = vpow.pop %v1325
  %v1327 = vadd.f32 %v1312, 1.0
  %v1328 = vadd.f32 %v1314, 1.0
  %v1329 = vadd.f32 %v1316, 1.0
  %v1330 = vadd.f32 %v1318, 1.0
  %v1331 = vadd.f32 %v1320, 1.0
  %v1332 = vadd.f32 %v1322, 1.0
  %v1333 = vadd.f32 %v1324, 1.0
  %v1334 = vadd.f32 %v1326, 1.0
  %v1335 = vrcp.pop %v1327
  %v1336 = vmul.f32 1.0, %v1335
  %v1337 = vrcp.pop %v1328
  %v1338 = vmul.f32 1.0, %v1337
  %v1339 = vrcp.pop %v1329
  %v1340 = vmul.f32 1.0, %v1339
  %v1341 = vrcp.pop %v1330
  %v1342 = vmul.f32 1.0, %v1341
  %v1343 = vrcp.pop %v1331
  %v1344 = vmul.f32 1.0, %v1343
  %v1345 = vrcp.pop %v1332
  %v1346 = vmul.f32 1.0, %v1345
  %v1347 = vrcp.pop %v1333
  %v1348 = vmul.f32 1.0, %v1347
  %v1349 = vrcp.pop %v1334
  %v1350 = vmul.f32 1.0, %v1349
  %v1359 = vmul.f32 %v1336, %v1167
  %v1360 = vmul.f32 %v1338, %v1169
  %v1361 = vmul.f32 %v1340, %v1171
  %v1362 = vmul.f32 %v1342, %v1173
  %v1363 = vmul.f32 %v1344, %v1175
  %v1364 = vmul.f32 %v1346, %v1177
  %v1365 = vmul.f32 %v1348, %v1179
  %v1366 = vmul.f32 %v1350, %v1181
  %1375 = vrot.lane.b32.xlu0 %v1150, 64
  %v1376 = vpop.permute.xlu0 %1375
  %1377 = vrot.lane.b32.xlu0 %v1151, 64
  %v1378 = vpop.permute.xlu0 %1377
  %1379 = vrot.lane.b32.xlu0 %v1152, 64
  %v1380 = vpop.permute.xlu0 %1379
  %1381 = vrot.lane.b32.xlu0 %v1153, 64
  %v1382 = vpop.permute.xlu0 %1381
  %1383 = vrot.lane.b32.xlu0 %v1154, 64
  %v1384 = vpop.permute.xlu0 %1383
  %1385 = vrot.lane.b32.xlu0 %v1155, 64
  %v1386 = vpop.permute.xlu0 %1385
  %1387 = vrot.lane.b32.xlu0 %v1156, 64
  %v1388 = vpop.permute.xlu0 %1387
  %1389 = vrot.lane.b32.xlu0 %v1157, 64
  %v1390 = vpop.permute.xlu0 %1389
  %v1400 = vsel %vm752, %v1359, 0
  %v1403 = vsel %vm752, %v1360, 0
  %v1406 = vsel %vm752, %v1361, 0
  %v1409 = vsel %vm752, %v1362, 0
  %v1412 = vsel %vm752, %v1363, 0
  %v1415 = vsel %vm752, %v1364, 0
  %v1418 = vsel %vm752, %v1365, 0
  %v1421 = vsel %vm752, %v1366, 0
  %1423 = vmatprep.subr.mxu0 0.0
  %1424 = vmatpush1.msra.mxu0 %v740
  %1425 = vmatprep.subr.mxu0 0.0
  %1426 = vmatpush1.msra.mxu0 %v741
  %1427 = vmatprep.subr.mxu0 0.0
  %1428 = vmatpush1.msra.mxu0 %v742
  %1429 = vmatprep.subr.mxu0 0.0
  %1430 = vmatpush1.msra.mxu0 %v743
  %1431 = vmatprep.subr.mxu0 0.0
  %1432 = vmatpush1.msra.mxu0 0.0
  %1433 = vmatprep.subr.mxu0 0.0
  %1434 = vmatpush1.msra.mxu0 0.0
  %1435 = vmatprep.subr.mxu0 0.0
  %1436 = vmatpush1.msra.mxu0 0.0
  %1437 = vmatprep.subr.mxu0 0.0
  %1438 = vmatpush1.msra.mxu0 0.0
  %1439 = vmatprep.subr.mxu0 0.0
  %1440 = vmatpush1.msra.mxu0 0.0
  %1441 = vmatprep.subr.mxu0 0.0
  %1442 = vmatpush1.msra.mxu0 0.0
  %1443 = vmatprep.subr.mxu0 0.0
  %1444 = vmatpush1.msra.mxu0 0.0
  %1445 = vmatprep.subr.mxu0 0.0
  %1446 = vmatpush1.msra.mxu0 0.0
  %1447 = vmatprep.subr.mxu0 0.0
  %1448 = vmatpush1.msra.mxu0 0.0
  %1449 = vmatprep.subr.mxu0 0.0
  %1450 = vmatpush1.msra.mxu0 0.0
  %1451 = vmatprep.subr.mxu0 0.0
  %1452 = vmatpush1.msra.mxu0 0.0
  %1453 = vmatprep.subr.mxu0 0.0
  %1454 = vmatpush1.msra.mxu0 0.0
  %1455 = vmatprep.subr.mxu0 0.0
  %1456 = vmatpush1.msra.mxu0 0.0
  %1457 = vmatprep.subr.mxu0 0.0
  %1458 = vmatpush1.msra.mxu0 0.0
  %1459 = vmatprep.subr.mxu0 0.0
  %1460 = vmatpush1.msra.mxu0 0.0
  %1461 = vmatprep.subr.mxu0 0.0
  %1462 = vmatpush1.msra.mxu0 0.0
  %1463 = vmatprep.subr.mxu0 0.0
  %1464 = vmatpush1.msra.mxu0 0.0
  %1465 = vmatprep.subr.mxu0 0.0
  %1466 = vmatpush1.msra.mxu0 0.0
  %1467 = vmatprep.subr.mxu0 0.0
  %1468 = vmatpush1.msra.mxu0 0.0
  %1469 = vmatprep.subr.mxu0 0.0
  %1470 = vmatpush1.msra.mxu0 0.0
  %1471 = vmatprep.subr.mxu0 0.0
  %1472 = vmatpush1.msra.mxu0 0.0
  %1473 = vmatprep.subr.mxu0 0.0
  %1474 = vmatpush1.msra.mxu0 0.0
  %1475 = vmatprep.subr.mxu0 0.0
  %1476 = vmatpush1.msra.mxu0 0.0
  %1477 = vmatprep.subr.mxu0 0.0
  %1478 = vmatpush1.msra.mxu0 0.0
  %1479 = vmatprep.subr.mxu0 0.0
  %1480 = vmatpush1.msra.mxu0 0.0
  %1481 = vmatprep.subr.mxu0 0.0
  %1482 = vmatpush1.msra.mxu0 0.0
  %1483 = vmatprep.subr.mxu0 0.0
  %1484 = vmatpush1.msra.mxu0 0.0
  %1485 = vmatprep.subr.mxu0 0.0
  %1486 = vmatpush1.msra.mxu0 0.0
  %1487 = vmatprep.mubr.f32.mxu0 0.0
  %1488 = vmatmul.mubr.f32.gmra.mrb[0].mxu0 %v1400
  %v1489 = vpop.f32.mrb[0].mxu0
  %v1490 = vadd.f32 %v1376, %v1489
  %v1491 = vpop.f32.mrb[0].mxu0
  %1492 = vmatprep.mubr.f32.mxu0 0.0
  %1493 = vmatmul.mubr.f32.gmra.mrb[0].mxu0 %v1403
  %v1494 = vpop.f32.mrb[0].mxu0
  %v1495 = vadd.f32 %v1378, %v1494
  %v1496 = vpop.f32.mrb[0].mxu0
  %1497 = vmatprep.mubr.f32.mxu0 0.0
  %1498 = vmatmul.mubr.f32.gmra.mrb[0].mxu0 %v1406
  %v1499 = vpop.f32.mrb[0].mxu0
  %v1500 = vadd.f32 %v1380, %v1499
  %v1501 = vpop.f32.mrb[0].mxu0
  %1502 = vmatprep.mubr.f32.mxu0 0.0
  %1503 = vmatmul.mubr.f32.gmra.mrb[0].mxu0 %v1409
  %v1504 = vpop.f32.mrb[0].mxu0
  %v1505 = vadd.f32 %v1382, %v1504
  %v1506 = vpop.f32.mrb[0].mxu0
  %1507 = vmatprep.mubr.f32.mxu0 0.0
  %1508 = vmatmul.mubr.f32.gmra.mrb[0].mxu0 %v1412
  %v1509 = vpop.f32.mrb[0].mxu0
  %v1510 = vadd.f32 %v1384, %v1509
  %v1511 = vpop.f32.mrb[0].mxu0
  %1512 = vmatprep.mubr.f32.mxu0 0.0
  %1513 = vmatmul.mubr.f32.gmra.mrb[0].mxu0 %v1415
  %v1514 = vpop.f32.mrb[0].mxu0
  %v1515 = vadd.f32 %v1386, %v1514
  %v1516 = vpop.f32.mrb[0].mxu0
  %1517 = vmatprep.mubr.f32.mxu0 0.0
  %1518 = vmatmul.mubr.f32.gmra.mrb[0].mxu0 %v1418
  %v1519 = vpop.f32.mrb[0].mxu0
  %v1520 = vadd.f32 %v1388, %v1519
  %v1521 = vpop.f32.mrb[0].mxu0
  %1522 = vmatprep.mubr.f32.mxu0 0.0
  %1523 = vmatmul.mubr.f32.gmra.mrb[0].mxu0 %v1421
  %v1524 = vpop.f32.mrb[0].mxu0
  %v1525 = vadd.f32 %v1390, %v1524
  %v1526 = vpop.f32.mrb[0].mxu0
  %1527 = vdwg.mxu0
  %v1528 = vtanh.pop %v1490
  %v1529 = vtanh.pop %v1495
  %v1530 = vtanh.pop %v1500
  %v1531 = vtanh.pop %v1505
  %v1532 = vtanh.pop %v1510
  %v1533 = vtanh.pop %v1515
  %v1534 = vtanh.pop %v1520
  %v1535 = vtanh.pop %v1525
  %v1536 = vsub.f32 1.0, %v1336
  %v1537 = vsub.f32 1.0, %v1338
  %v1538 = vsub.f32 1.0, %v1340
  %v1539 = vsub.f32 1.0, %v1342
  %v1540 = vsub.f32 1.0, %v1344
  %v1541 = vsub.f32 1.0, %v1346
  %v1542 = vsub.f32 1.0, %v1348
  %v1543 = vsub.f32 1.0, %v1350
  %v1544 = vmul.f32 %v1536, %v1142
  %v1545 = vmul.f32 %v1537, %v1143
  %v1546 = vmul.f32 %v1538, %v1144
  %v1547 = vmul.f32 %v1539, %v1145
  %v1548 = vmul.f32 %v1540, %v1146
  %v1549 = vmul.f32 %v1541, %v1147
  %v1550 = vmul.f32 %v1542, %v1148
  %v1551 = vmul.f32 %v1543, %v1149
  %1560 = vrot.lane.b32.xlu0 %v1528, 32
  %v1561 = vpop.permute.xlu0 %1560
  %1562 = vrot.lane.b32.xlu0 %v1529, 32
  %v1563 = vpop.permute.xlu0 %1562
  %1564 = vrot.lane.b32.xlu0 %v1530, 32
  %v1565 = vpop.permute.xlu0 %1564
  %1566 = vrot.lane.b32.xlu0 %v1531, 32
  %v1567 = vpop.permute.xlu0 %1566
  %1568 = vrot.lane.b32.xlu0 %v1532, 32
  %v1569 = vpop.permute.xlu0 %1568
  %1570 = vrot.lane.b32.xlu0 %v1533, 32
  %v1571 = vpop.permute.xlu0 %1570
  %1572 = vrot.lane.b32.xlu0 %v1534, 32
  %v1573 = vpop.permute.xlu0 %1572
  %1574 = vrot.lane.b32.xlu0 %v1535, 32
  %v1575 = vpop.permute.xlu0 %1574
  %v1584 = vmul.f32 %v1336, %v1561
  %v1585 = vmul.f32 %v1338, %v1563
  %v1586 = vmul.f32 %v1340, %v1565
  %v1587 = vmul.f32 %v1342, %v1567
  %v1588 = vmul.f32 %v1344, %v1569
  %v1589 = vmul.f32 %v1346, %v1571
  %v1590 = vmul.f32 %v1348, %v1573
  %v1591 = vmul.f32 %v1350, %v1575
  %v1592 = vadd.f32 %v1544, %v1584
  %v1593 = vadd.f32 %v1545, %v1585
  %v1594 = vadd.f32 %v1546, %v1586
  %v1595 = vadd.f32 %v1547, %v1587
  %v1596 = vadd.f32 %v1548, %v1588
  %v1597 = vadd.f32 %v1549, %v1589
  %v1598 = vadd.f32 %v1550, %v1590
  %v1599 = vadd.f32 %v1551, %v1591
  %v1600 = vld [vmem:[#allocation2 + $0x80] sm:$0xff]
  %v1601 = vld [vmem:[#allocation2 + $0x88] sm:$0xff]
  %v1602 = vld [vmem:[#allocation2 + $0x90] sm:$0xff]
  %v1603 = vld [vmem:[#allocation2 + $0x98] sm:$0xff]
  %v1604 = vld [vmem:[#allocation2 + $0xa0] sm:$0xff]
  %v1605 = vld [vmem:[#allocation2 + $0xa8] sm:$0xff]
  %v1606 = vld [vmem:[#allocation2 + $0xb0] sm:$0xff]
  %v1607 = vld [vmem:[#allocation2 + $0xb8] sm:$0xff]
  %1616 = vrot.lane.b32.xlu0 %v1592, 96
  %v1617 = vpop.permute.xlu0 %1616
  %1618 = vrot.lane.b32.xlu0 %v1593, 96
  %v1619 = vpop.permute.xlu0 %1618
  %1620 = vrot.lane.b32.xlu0 %v1594, 96
  %v1621 = vpop.permute.xlu0 %1620
  %1622 = vrot.lane.b32.xlu0 %v1595, 96
  %v1623 = vpop.permute.xlu0 %1622
  %1624 = vrot.lane.b32.xlu0 %v1596, 96
  %v1625 = vpop.permute.xlu0 %1624
  %1626 = vrot.lane.b32.xlu0 %v1597, 96
  %v1627 = vpop.permute.xlu0 %1626
  %1628 = vrot.lane.b32.xlu0 %v1598, 96
  %v1629 = vpop.permute.xlu0 %1628
  %1630 = vrot.lane.b32.xlu0 %v1599, 96
  %v1631 = vpop.permute.xlu0 %1630
  %v1632 = vsel %vm752, %v1617, 0
  %v1634 = vsel %vm752, %v1619, 0
  %v1636 = vsel %vm752, %v1621, 0
  %v1638 = vsel %vm752, %v1623, 0
  %v1640 = vsel %vm752, %v1625, 0
  %v1642 = vsel %vm752, %v1627, 0
  %v1644 = vsel %vm752, %v1629, 0
  %v1646 = vsel %vm752, %v1631, 0
  %1648 = vmatprep.subr.mxu0 0.0
  %1649 = vmatpush1.msra.mxu0 %v736
  %1650 = vmatprep.subr.mxu0 0.0
  %1651 = vmatpush1.msra.mxu0 %v737
  %1652 = vmatprep.subr.mxu0 0.0
  %1653 = vmatpush1.msra.mxu0 %v738
  %1654 = vmatprep.subr.mxu0 0.0
  %1655 = vmatpush1.msra.mxu0 %v739
  %1656 = vmatprep.subr.mxu0 0.0
  %1657 = vmatpush1.msra.mxu0 0.0
  %1658 = vmatprep.subr.mxu0 0.0
  %1659 = vmatpush1.msra.mxu0 0.0
  %1660 = vmatprep.subr.mxu0 0.0
  %1661 = vmatpush1.msra.mxu0 0.0
  %1662 = vmatprep.subr.mxu0 0.0
  %1663 = vmatpush1.msra.mxu0 0.0
  %1664 = vmatprep.subr.mxu0 0.0
  %1665 = vmatpush1.msra.mxu0 0.0
  %1666 = vmatprep.subr.mxu0 0.0
  %1667 = vmatpush1.msra.mxu0 0.0
  %1668 = vmatprep.subr.mxu0 0.0
  %1669 = vmatpush1.msra.mxu0 0.0
  %1670 = vmatprep.subr.mxu0 0.0
  %1671 = vmatpush1.msra.mxu0 0.0
  %1672 = vmatprep.subr.mxu0 0.0
  %1673 = vmatpush1.msra.mxu0 0.0
  %1674 = vmatprep.subr.mxu0 0.0
  %1675 = vmatpush1.msra.mxu0 0.0
  %1676 = vmatprep.subr.mxu0 0.0
  %1677 = vmatpush1.msra.mxu0 0.0
  %1678 = vmatprep.subr.mxu0 0.0
  %1679 = vmatpush1.msra.mxu0 0.0
  %1680 = vmatprep.subr.mxu0 0.0
  %1681 = vmatpush1.msra.mxu0 0.0
  %1682 = vmatprep.subr.mxu0 0.0
  %1683 = vmatpush1.msra.mxu0 0.0
  %1684 = vmatprep.subr.mxu0 0.0
  %1685 = vmatpush1.msra.mxu0 0.0
  %1686 = vmatprep.subr.mxu0 0.0
  %1687 = vmatpush1.msra.mxu0 0.0
  %1688 = vmatprep.subr.mxu0 0.0
  %1689 = vmatpush1.msra.mxu0 0.0
  %1690 = vmatprep.subr.mxu0 0.0
  %1691 = vmatpush1.msra.mxu0 0.0
  %1692 = vmatprep.subr.mxu0 0.0
  %1693 = vmatpush1.msra.mxu0 0.0
  %1694 = vmatprep.subr.mxu0 0.0
  %1695 = vmatpush1.msra.mxu0 0.0
  %1696 = vmatprep.subr.mxu0 0.0
  %1697 = vmatpush1.msra.mxu0 0.0
  %1698 = vmatprep.subr.mxu0 0.0
  %1699 = vmatpush1.msra.mxu0 0.0
  %1700 = vmatprep.subr.mxu0 0.0
  %1701 = vmatpush1.msra.mxu0 0.0
  %1702 = vmatprep.subr.mxu0 0.0
  %1703 = vmatpush1.msra.mxu0 0.0
  %1704 = vmatprep.subr.mxu0 0.0
  %1705 = vmatpush1.msra.mxu0 0.0
  %1706 = vmatprep.subr.mxu0 0.0
  %1707 = vmatpush1.msra.mxu0 0.0
  %1708 = vmatprep.subr.mxu0 0.0
  %1709 = vmatpush1.msra.mxu0 0.0
  %1710 = vmatprep.subr.mxu0 0.0
  %1711 = vmatpush1.msra.mxu0 0.0
  %1712 = vmatprep.mubr.f32.mxu0 0.0
  %1713 = vmatmul.mubr.f32.gmra.mrb[0].mxu0 %v1632
  %v1714 = vpop.f32.mrb[0].mxu0
  %v1715 = vadd.f32 %v1600, %v1714
  %v1716 = vpop.f32.mrb[0].mxu0
  %1717 = vmatprep.mubr.f32.mxu0 0.0
  %1718 = vmatmul.mubr.f32.gmra.mrb[0].mxu0 %v1634
  %v1719 = vpop.f32.mrb[0].mxu0
  %v1720 = vadd.f32 %v1601, %v1719
  %v1721 = vpop.f32.mrb[0].mxu0
  %1722 = vmatprep.mubr.f32.mxu0 0.0
  %1723 = vmatmul.mubr.f32.gmra.mrb[0].mxu0 %v1636
  %v1724 = vpop.f32.mrb[0].mxu0
  %v1725 = vadd.f32 %v1602, %v1724
  %v1726 = vpop.f32.mrb[0].mxu0
  %1727 = vmatprep.mubr.f32.mxu0 0.0
  %1728 = vmatmul.mubr.f32.gmra.mrb[0].mxu0 %v1638
  %v1729 = vpop.f32.mrb[0].mxu0
  %v1730 = vadd.f32 %v1603, %v1729
  %v1731 = vpop.f32.mrb[0].mxu0
  %1732 = vmatprep.mubr.f32.mxu0 0.0
  %1733 = vmatmul.mubr.f32.gmra.mrb[0].mxu0 %v1640
  %v1734 = vpop.f32.mrb[0].mxu0
  %v1735 = vadd.f32 %v1604, %v1734
  %v1736 = vpop.f32.mrb[0].mxu0
  %1737 = vmatprep.mubr.f32.mxu0 0.0
  %1738 = vmatmul.mubr.f32.gmra.mrb[0].mxu0 %v1642
  %v1739 = vpop.f32.mrb[0].mxu0
  %v1740 = vadd.f32 %v1605, %v1739
  %v1741 = vpop.f32.mrb[0].mxu0
  %1742 = vmatprep.mubr.f32.mxu0 0.0
  %1743 = vmatmul.mubr.f32.gmra.mrb[0].mxu0 %v1644
  %v1744 = vpop.f32.mrb[0].mxu0
  %v1745 = vadd.f32 %v1606, %v1744
  %v1746 = vpop.f32.mrb[0].mxu0
  %1747 = vmatprep.mubr.f32.mxu0 0.0
  %1748 = vmatmul.mubr.f32.gmra.mrb[0].mxu0 %v1646
  %v1749 = vpop.f32.mrb[0].mxu0
  %v1750 = vadd.f32 %v1607, %v1749
  %v1751 = vpop.f32.mrb[0].mxu0
  %1752 = vdwg.mxu0
  %v1753 = vxor.u32 %v1715, 2147483648
  %v1754 = vxor.u32 %v1720, 2147483648
  %v1755 = vxor.u32 %v1725, 2147483648
  %v1756 = vxor.u32 %v1730, 2147483648
  %v1757 = vxor.u32 %v1735, 2147483648
  %v1758 = vxor.u32 %v1740, 2147483648
  %v1759 = vxor.u32 %v1745, 2147483648
  %v1760 = vxor.u32 %v1750, 2147483648
  %v1761 = vmul.f32 %v1753, 1.442695
  %v1762 = vpow.pop %v1761
  %v1763 = vmul.f32 %v1754, 1.442695
  %v1764 = vpow.pop %v1763
  %v1765 = vmul.f32 %v1755, 1.442695
  %v1766 = vpow.pop %v1765
  %v1767 = vmul.f32 %v1756, 1.442695
  %v1768 = vpow.pop %v1767
  %v1769 = vmul.f32 %v1757, 1.442695
  %v1770 = vpow.pop %v1769
  %v1771 = vmul.f32 %v1758, 1.442695
  %v1772 = vpow.pop %v1771
  %v1773 = vmul.f32 %v1759, 1.442695
  %v1774 = vpow.pop %v1773
  %v1775 = vmul.f32 %v1760, 1.442695
  %v1776 = vpow.pop %v1775
  %v1777 = vadd.f32 %v1762, 1.0
  %v1778 = vadd.f32 %v1764, 1.0
  %v1779 = vadd.f32 %v1766, 1.0
  %v1780 = vadd.f32 %v1768, 1.0
  %v1781 = vadd.f32 %v1770, 1.0
  %v1782 = vadd.f32 %v1772, 1.0
  %v1783 = vadd.f32 %v1774, 1.0
  %v1784 = vadd.f32 %v1776, 1.0
  %v1785 = vrcp.pop %v1777
  %v1786 = vmul.f32 1.0, %v1785
  %v1787 = vrcp.pop %v1778
  %v1788 = vmul.f32 1.0, %v1787
  %v1789 = vrcp.pop %v1779
  %v1790 = vmul.f32 1.0, %v1789
  %v1791 = vrcp.pop %v1780
  %v1792 = vmul.f32 1.0, %v1791
  %v1793 = vrcp.pop %v1781
  %v1794 = vmul.f32 1.0, %v1793
  %v1795 = vrcp.pop %v1782
  %v1796 = vmul.f32 1.0, %v1795
  %v1797 = vrcp.pop %v1783
  %v1798 = vmul.f32 1.0, %v1797
  %v1799 = vrcp.pop %v1784
  %v1800 = vmul.f32 1.0, %v1799
  %v1809 = vmul.f32 %v1786, %v1617
  %v1810 = vmul.f32 %v1788, %v1619
  %v1811 = vmul.f32 %v1790, %v1621
  %v1812 = vmul.f32 %v1792, %v1623
  %v1813 = vmul.f32 %v1794, %v1625
  %v1814 = vmul.f32 %v1796, %v1627
  %v1815 = vmul.f32 %v1798, %v1629
  %v1816 = vmul.f32 %v1800, %v1631
  %1825 = vrot.lane.b32.xlu0 %v1600, 64
  %v1826 = vpop.permute.xlu0 %1825
  %1827 = vrot.lane.b32.xlu0 %v1601, 64
  %v1828 = vpop.permute.xlu0 %1827
  %1829 = vrot.lane.b32.xlu0 %v1602, 64
  %v1830 = vpop.permute.xlu0 %1829
  %1831 = vrot.lane.b32.xlu0 %v1603, 64
  %v1832 = vpop.permute.xlu0 %1831
  %1833 = vrot.lane.b32.xlu0 %v1604, 64
  %v1834 = vpop.permute.xlu0 %1833
  %1835 = vrot.lane.b32.xlu0 %v1605, 64
  %v1836 = vpop.permute.xlu0 %1835
  %1837 = vrot.lane.b32.xlu0 %v1606, 64
  %v1838 = vpop.permute.xlu0 %1837
  %1839 = vrot.lane.b32.xlu0 %v1607, 64
  %v1840 = vpop.permute.xlu0 %1839
  %v1850 = vsel %vm752, %v1809, 0
  %v1853 = vsel %vm752, %v1810, 0
  %v1856 = vsel %vm752, %v1811, 0
  %v1859 = vsel %vm752, %v1812, 0
  %v1862 = vsel %vm752, %v1813, 0
  %v1865 = vsel %vm752, %v1814, 0
  %v1868 = vsel %vm752, %v1815, 0
  %v1871 = vsel %vm752, %v1816, 0
  %1873 = vmatprep.subr.mxu0 0.0
  %1874 = vmatpush1.msra.mxu0 %v740
  %1875 = vmatprep.subr.mxu0 0.0
  %1876 = vmatpush1.msra.mxu0 %v741
  %1877 = vmatprep.subr.mxu0 0.0
  %1878 = vmatpush1.msra.mxu0 %v742
  %1879 = vmatprep.subr.mxu0 0.0
  %1880 = vmatpush1.msra.mxu0 %v743
  %1881 = vmatprep.subr.mxu0 0.0
  %1882 = vmatpush1.msra.mxu0 0.0
  %1883 = vmatprep.subr.mxu0 0.0
  %1884 = vmatpush1.msra.mxu0 0.0
  %1885 = vmatprep.subr.mxu0 0.0
  %1886 = vmatpush1.msra.mxu0 0.0
  %1887 = vmatprep.subr.mxu0 0.0
  %1888 = vmatpush1.msra.mxu0 0.0
  %1889 = vmatprep.subr.mxu0 0.0
  %1890 = vmatpush1.msra.mxu0 0.0
  %1891 = vmatprep.subr.mxu0 0.0
  %1892 = vmatpush1.msra.mxu0 0.0
  %1893 = vmatprep.subr.mxu0 0.0
  %1894 = vmatpush1.msra.mxu0 0.0
  %1895 = vmatprep.subr.mxu0 0.0
  %1896 = vmatpush1.msra.mxu0 0.0
  %1897 = vmatprep.subr.mxu0 0.0
  %1898 = vmatpush1.msra.mxu0 0.0
  %1899 = vmatprep.subr.mxu0 0.0
  %1900 = vmatpush1.msra.mxu0 0.0
  %1901 = vmatprep.subr.mxu0 0.0
  %1902 = vmatpush1.msra.mxu0 0.0
  %1903 = vmatprep.subr.mxu0 0.0
  %1904 = vmatpush1.msra.mxu0 0.0
  %1905 = vmatprep.subr.mxu0 0.0
  %1906 = vmatpush1.msra.mxu0 0.0
  %1907 = vmatprep.subr.mxu0 0.0
  %1908 = vmatpush1.msra.mxu0 0.0
  %1909 = vmatprep.subr.mxu0 0.0
  %1910 = vmatpush1.msra.mxu0 0.0
  %1911 = vmatprep.subr.mxu0 0.0
  %1912 = vmatpush1.msra.mxu0 0.0
  %1913 = vmatprep.subr.mxu0 0.0
  %1914 = vmatpush1.msra.mxu0 0.0
  %1915 = vmatprep.subr.mxu0 0.0
  %1916 = vmatpush1.msra.mxu0 0.0
  %1917 = vmatprep.subr.mxu0 0.0
  %1918 = vmatpush1.msra.mxu0 0.0
  %1919 = vmatprep.subr.mxu0 0.0
  %1920 = vmatpush1.msra.mxu0 0.0
  %1921 = vmatprep.subr.mxu0 0.0
  %1922 = vmatpush1.msra.mxu0 0.0
  %1923 = vmatprep.subr.mxu0 0.0
  %1924 = vmatpush1.msra.mxu0 0.0
  %1925 = vmatprep.subr.mxu0 0.0
  %1926 = vmatpush1.msra.mxu0 0.0
  %1927 = vmatprep.subr.mxu0 0.0
  %1928 = vmatpush1.msra.mxu0 0.0
  %1929 = vmatprep.subr.mxu0 0.0
  %1930 = vmatpush1.msra.mxu0 0.0
  %1931 = vmatprep.subr.mxu0 0.0
  %1932 = vmatpush1.msra.mxu0 0.0
  %1933 = vmatprep.subr.mxu0 0.0
  %1934 = vmatpush1.msra.mxu0 0.0
  %1935 = vmatprep.subr.mxu0 0.0
  %1936 = vmatpush1.msra.mxu0 0.0
  %1937 = vmatprep.mubr.f32.mxu0 0.0
  %1938 = vmatmul.mubr.f32.gmra.mrb[0].mxu0 %v1850
  %v1939 = vpop.f32.mrb[0].mxu0
  %v1940 = vadd.f32 %v1826, %v1939
  %v1941 = vpop.f32.mrb[0].mxu0
  %1942 = vmatprep.mubr.f32.mxu0 0.0
  %1943 = vmatmul.mubr.f32.gmra.mrb[0].mxu0 %v1853
  %v1944 = vpop.f32.mrb[0].mxu0
  %v1945 = vadd.f32 %v1828, %v1944
  %v1946 = vpop.f32.mrb[0].mxu0
  %1947 = vmatprep.mubr.f32.mxu0 0.0
  %1948 = vmatmul.mubr.f32.gmra.mrb[0].mxu0 %v1856
  %v1949 = vpop.f32.mrb[0].mxu0
  %v1950 = vadd.f32 %v1830, %v1949
  %v1951 = vpop.f32.mrb[0].mxu0
  %1952 = vmatprep.mubr.f32.mxu0 0.0
  %1953 = vmatmul.mubr.f32.gmra.mrb[0].mxu0 %v1859
  %v1954 = vpop.f32.mrb[0].mxu0
  %v1955 = vadd.f32 %v1832, %v1954
  %v1956 = vpop.f32.mrb[0].mxu0
  %1957 = vmatprep.mubr.f32.mxu0 0.0
  %1958 = vmatmul.mubr.f32.gmra.mrb[0].mxu0 %v1862
  %v1959 = vpop.f32.mrb[0].mxu0
  %v1960 = vadd.f32 %v1834, %v1959
  %v1961 = vpop.f32.mrb[0].mxu0
  %1962 = vmatprep.mubr.f32.mxu0 0.0
  %1963 = vmatmul.mubr.f32.gmra.mrb[0].mxu0 %v1865
  %v1964 = vpop.f32.mrb[0].mxu0
  %v1965 = vadd.f32 %v1836, %v1964
  %v1966 = vpop.f32.mrb[0].mxu0
  %1967 = vmatprep.mubr.f32.mxu0 0.0
  %1968 = vmatmul.mubr.f32.gmra.mrb[0].mxu0 %v1868
  %v1969 = vpop.f32.mrb[0].mxu0
  %v1970 = vadd.f32 %v1838, %v1969
  %v1971 = vpop.f32.mrb[0].mxu0
  %1972 = vmatprep.mubr.f32.mxu0 0.0
  %1973 = vmatmul.mubr.f32.gmra.mrb[0].mxu0 %v1871
  %v1974 = vpop.f32.mrb[0].mxu0
  %v1975 = vadd.f32 %v1840, %v1974
  %v1976 = vpop.f32.mrb[0].mxu0
  %1977 = vdwg.mxu0
  %v1978 = vtanh.pop %v1940
  %v1979 = vtanh.pop %v1945
  %v1980 = vtanh.pop %v1950
  %v1981 = vtanh.pop %v1955
  %v1982 = vtanh.pop %v1960
  %v1983 = vtanh.pop %v1965
  %v1984 = vtanh.pop %v1970
  %v1985 = vtanh.pop %v1975
  %v1986 = vsub.f32 1.0, %v1786
  %v1987 = vsub.f32 1.0, %v1788
  %v1988 = vsub.f32 1.0, %v1790
  %v1989 = vsub.f32 1.0, %v1792
  %v1990 = vsub.f32 1.0, %v1794
  %v1991 = vsub.f32 1.0, %v1796
  %v1992 = vsub.f32 1.0, %v1798
  %v1993 = vsub.f32 1.0, %v1800
  %v1994 = vmul.f32 %v1986, %v1592
  %v1995 = vmul.f32 %v1987, %v1593
  %v1996 = vmul.f32 %v1988, %v1594
  %v1997 = vmul.f32 %v1989, %v1595
  %v1998 = vmul.f32 %v1990, %v1596
  %v1999 = vmul.f32 %v1991, %v1597
  %v2000 = vmul.f32 %v1992, %v1598
  %v2001 = vmul.f32 %v1993, %v1599
  %2010 = vrot.lane.b32.xlu0 %v1978, 32
  %v2011 = vpop.permute.xlu0 %2010
  %2012 = vrot.lane.b32.xlu0 %v1979, 32
  %v2013 = vpop.permute.xlu0 %2012
  %2014 = vrot.lane.b32.xlu0 %v1980, 32
  %v2015 = vpop.permute.xlu0 %2014
  %2016 = vrot.lane.b32.xlu0 %v1981, 32
  %v2017 = vpop.permute.xlu0 %2016
  %2018 = vrot.lane.b32.xlu0 %v1982, 32
  %v2019 = vpop.permute.xlu0 %2018
  %2020 = vrot.lane.b32.xlu0 %v1983, 32
  %v2021 = vpop.permute.xlu0 %2020
  %2022 = vrot.lane.b32.xlu0 %v1984, 32
  %v2023 = vpop.permute.xlu0 %2022
  %2024 = vrot.lane.b32.xlu0 %v1985, 32
  %v2025 = vpop.permute.xlu0 %2024
  %v2034 = vmul.f32 %v1786, %v2011
  %v2035 = vmul.f32 %v1788, %v2013
  %v2036 = vmul.f32 %v1790, %v2015
  %v2037 = vmul.f32 %v1792, %v2017
  %v2038 = vmul.f32 %v1794, %v2019
  %v2039 = vmul.f32 %v1796, %v2021
  %v2040 = vmul.f32 %v1798, %v2023
  %v2041 = vmul.f32 %v1800, %v2025
  %v2042 = vadd.f32 %v1994, %v2034
  %v2043 = vadd.f32 %v1995, %v2035
  %v2044 = vadd.f32 %v1996, %v2036
  %v2045 = vadd.f32 %v1997, %v2037
  %v2046 = vadd.f32 %v1998, %v2038
  %v2047 = vadd.f32 %v1999, %v2039
  %v2048 = vadd.f32 %v2000, %v2040
  %v2049 = vadd.f32 %v2001, %v2041
  %v2050 = vld [vmem:[#allocation2 + $0xc0] sm:$0xff]
  %v2051 = vld [vmem:[#allocation2 + $0xc8] sm:$0xff]
  %v2052 = vld [vmem:[#allocation2 + $0xd0] sm:$0xff]
  %v2053 = vld [vmem:[#allocation2 + $0xd8] sm:$0xff]
  %v2054 = vld [vmem:[#allocation2 + $0xe0] sm:$0xff]
  %v2055 = vld [vmem:[#allocation2 + $0xe8] sm:$0xff]
  %v2056 = vld [vmem:[#allocation2 + $0xf0] sm:$0xff]
  %v2057 = vld [vmem:[#allocation2 + $0xf8] sm:$0xff]
  %2066 = vrot.lane.b32.xlu0 %v2042, 96
  %v2067 = vpop.permute.xlu0 %2066
  %2068 = vrot.lane.b32.xlu0 %v2043, 96
  %v2069 = vpop.permute.xlu0 %2068
  %2070 = vrot.lane.b32.xlu0 %v2044, 96
  %v2071 = vpop.permute.xlu0 %2070
  %2072 = vrot.lane.b32.xlu0 %v2045, 96
  %v2073 = vpop.permute.xlu0 %2072
  %2074 = vrot.lane.b32.xlu0 %v2046, 96
  %v2075 = vpop.permute.xlu0 %2074
  %2076 = vrot.lane.b32.xlu0 %v2047, 96
  %v2077 = vpop.permute.xlu0 %2076
  %2078 = vrot.lane.b32.xlu0 %v2048, 96
  %v2079 = vpop.permute.xlu0 %2078
  %2080 = vrot.lane.b32.xlu0 %v2049, 96
  %v2081 = vpop.permute.xlu0 %2080
  %v2082 = vsel %vm752, %v2067, 0
  %v2084 = vsel %vm752, %v2069, 0
  %v2086 = vsel %vm752, %v2071, 0
  %v2088 = vsel %vm752, %v2073, 0
  %v2090 = vsel %vm752, %v2075, 0
  %v2092 = vsel %vm752, %v2077, 0
  %v2094 = vsel %vm752, %v2079, 0
  %v2096 = vsel %vm752, %v2081, 0
  %2098 = vmatprep.subr.mxu0 0.0
  %2099 = vmatpush1.msra.mxu0 %v736
  %2100 = vmatprep.subr.mxu0 0.0
  %2101 = vmatpush1.msra.mxu0 %v737
  %2102 = vmatprep.subr.mxu0 0.0
  %2103 = vmatpush1.msra.mxu0 %v738
  %2104 = vmatprep.subr.mxu0 0.0
  %2105 = vmatpush1.msra.mxu0 %v739
  %2106 = vmatprep.subr.mxu0 0.0
  %2107 = vmatpush1.msra.mxu0 0.0
  %2108 = vmatprep.subr.mxu0 0.0
  %2109 = vmatpush1.msra.mxu0 0.0
  %2110 = vmatprep.subr.mxu0 0.0
  %2111 = vmatpush1.msra.mxu0 0.0
  %2112 = vmatprep.subr.mxu0 0.0
  %2113 = vmatpush1.msra.mxu0 0.0
  %2114 = vmatprep.subr.mxu0 0.0
  %2115 = vmatpush1.msra.mxu0 0.0
  %2116 = vmatprep.subr.mxu0 0.0
  %2117 = vmatpush1.msra.mxu0 0.0
  %2118 = vmatprep.subr.mxu0 0.0
  %2119 = vmatpush1.msra.mxu0 0.0
  %2120 = vmatprep.subr.mxu0 0.0
  %2121 = vmatpush1.msra.mxu0 0.0
  %2122 = vmatprep.subr.mxu0 0.0
  %2123 = vmatpush1.msra.mxu0 0.0
  %2124 = vmatprep.subr.mxu0 0.0
  %2125 = vmatpush1.msra.mxu0 0.0
  %2126 = vmatprep.subr.mxu0 0.0
  %2127 = vmatpush1.msra.mxu0 0.0
  %2128 = vmatprep.subr.mxu0 0.0
  %2129 = vmatpush1.msra.mxu0 0.0
  %2130 = vmatprep.subr.mxu0 0.0
  %2131 = vmatpush1.msra.mxu0 0.0
  %2132 = vmatprep.subr.mxu0 0.0
  %2133 = vmatpush1.msra.mxu0 0.0
  %2134 = vmatprep.subr.mxu0 0.0
  %2135 = vmatpush1.msra.mxu0 0.0
  %2136 = vmatprep.subr.mxu0 0.0
  %2137 = vmatpush1.msra.mxu0 0.0
  %2138 = vmatprep.subr.mxu0 0.0
  %2139 = vmatpush1.msra.mxu0 0.0
  %2140 = vmatprep.subr.mxu0 0.0
  %2141 = vmatpush1.msra.mxu0 0.0
  %2142 = vmatprep.subr.mxu0 0.0
  %2143 = vmatpush1.msra.mxu0 0.0
  %2144 = vmatprep.subr.mxu0 0.0
  %2145 = vmatpush1.msra.mxu0 0.0
  %2146 = vmatprep.subr.mxu0 0.0
  %2147 = vmatpush1.msra.mxu0 0.0
  %2148 = vmatprep.subr.mxu0 0.0
  %2149 = vmatpush1.msra.mxu0 0.0
  %2150 = vmatprep.subr.mxu0 0.0
  %2151 = vmatpush1.msra.mxu0 0.0
  %2152 = vmatprep.subr.mxu0 0.0
  %2153 = vmatpush1.msra.mxu0 0.0
  %2154 = vmatprep.subr.mxu0 0.0
  %2155 = vmatpush1.msra.mxu0 0.0
  %2156 = vmatprep.subr.mxu0 0.0
  %2157 = vmatpush1.msra.mxu0 0.0
  %2158 = vmatprep.subr.mxu0 0.0
  %2159 = vmatpush1.msra.mxu0 0.0
  %2160 = vmatprep.subr.mxu0 0.0
  %2161 = vmatpush1.msra.mxu0 0.0
  %2162 = vmatprep.mubr.f32.mxu0 0.0
  %2163 = vmatmul.mubr.f32.gmra.mrb[0].mxu0 %v2082
  %v2164 = vpop.f32.mrb[0].mxu0
  %v2165 = vadd.f32 %v2050, %v2164
  %v2166 = vpop.f32.mrb[0].mxu0
  %2167 = vmatprep.mubr.f32.mxu0 0.0
  %2168 = vmatmul.mubr.f32.gmra.mrb[0].mxu0 %v2084
  %v2169 = vpop.f32.mrb[0].mxu0
  %v2170 = vadd.f32 %v2051, %v2169
  %v2171 = vpop.f32.mrb[0].mxu0
  %2172 = vmatprep.mubr.f32.mxu0 0.0
  %2173 = vmatmul.mubr.f32.gmra.mrb[0].mxu0 %v2086
  %v2174 = vpop.f32.mrb[0].mxu0
  %v2175 = vadd.f32 %v2052, %v2174
  %v2176 = vpop.f32.mrb[0].mxu0
  %2177 = vmatprep.mubr.f32.mxu0 0.0
  %2178 = vmatmul.mubr.f32.gmra.mrb[0].mxu0 %v2088
  %v2179 = vpop.f32.mrb[0].mxu0
  %v2180 = vadd.f32 %v2053, %v2179
  %v2181 = vpop.f32.mrb[0].mxu0
  %2182 = vmatprep.mubr.f32.mxu0 0.0
  %2183 = vmatmul.mubr.f32.gmra.mrb[0].mxu0 %v2090
  %v2184 = vpop.f32.mrb[0].mxu0
  %v2185 = vadd.f32 %v2054, %v2184
  %v2186 = vpop.f32.mrb[0].mxu0
  %2187 = vmatprep.mubr.f32.mxu0 0.0
  %2188 = vmatmul.mubr.f32.gmra.mrb[0].mxu0 %v2092
  %v2189 = vpop.f32.mrb[0].mxu0
  %v2190 = vadd.f32 %v2055, %v2189
  %v2191 = vpop.f32.mrb[0].mxu0
  %2192 = vmatprep.mubr.f32.mxu0 0.0
  %2193 = vmatmul.mubr.f32.gmra.mrb[0].mxu0 %v2094
  %v2194 = vpop.f32.mrb[0].mxu0
  %v2195 = vadd.f32 %v2056, %v2194
  %v2196 = vpop.f32.mrb[0].mxu0
  %2197 = vmatprep.mubr.f32.mxu0 0.0
  %2198 = vmatmul.mubr.f32.gmra.mrb[0].mxu0 %v2096
  %v2199 = vpop.f32.mrb[0].mxu0
  %v2200 = vadd.f32 %v2057, %v2199
  %v2201 = vpop.f32.mrb[0].mxu0
  %2202 = vdwg.mxu0
  %v2203 = vxor.u32 %v2165, 2147483648
  %v2204 = vxor.u32 %v2170, 2147483648
  %v2205 = vxor.u32 %v2175, 2147483648
  %v2206 = vxor.u32 %v2180, 2147483648
  %v2207 = vxor.u32 %v2185, 2147483648
  %v2208 = vxor.u32 %v2190, 2147483648
  %v2209 = vxor.u32 %v2195, 2147483648
  %v2210 = vxor.u32 %v2200, 2147483648
  %v2211 = vmul.f32 %v2203, 1.442695
  %v2212 = vpow.pop %v2211
  %v2213 = vmul.f32 %v2204, 1.442695
  %v2214 = vpow.pop %v2213
  %v2215 = vmul.f32 %v2205, 1.442695
  %v2216 = vpow.pop %v2215
  %v2217 = vmul.f32 %v2206, 1.442695
  %v2218 = vpow.pop %v2217
  %v2219 = vmul.f32 %v2207, 1.442695
  %v2220 = vpow.pop %v2219
  %v2221 = vmul.f32 %v2208, 1.442695
  %v2222 = vpow.pop %v2221
  %v2223 = vmul.f32 %v2209, 1.442695
  %v2224 = vpow.pop %v2223
  %v2225 = vmul.f32 %v2210, 1.442695
  %v2226 = vpow.pop %v2225
  %v2227 = vadd.f32 %v2212, 1.0
  %v2228 = vadd.f32 %v2214, 1.0
  %v2229 = vadd.f32 %v2216, 1.0
  %v2230 = vadd.f32 %v2218, 1.0
  %v2231 = vadd.f32 %v2220, 1.0
  %v2232 = vadd.f32 %v2222, 1.0
  %v2233 = vadd.f32 %v2224, 1.0
  %v2234 = vadd.f32 %v2226, 1.0
  %v2235 = vrcp.pop %v2227
  %v2236 = vmul.f32 1.0, %v2235
  %v2237 = vrcp.pop %v2228
  %v2238 = vmul.f32 1.0, %v2237
  %v2239 = vrcp.pop %v2229
  %v2240 = vmul.f32 1.0, %v2239
  %v2241 = vrcp.pop %v2230
  %v2242 = vmul.f32 1.0, %v2241
  %v2243 = vrcp.pop %v2231
  %v2244 = vmul.f32 1.0, %v2243
  %v2245 = vrcp.pop %v2232
  %v2246 = vmul.f32 1.0, %v2245
  %v2247 = vrcp.pop %v2233
  %v2248 = vmul.f32 1.0, %v2247
  %v2249 = vrcp.pop %v2234
  %v2250 = vmul.f32 1.0, %v2249
  %v2259 = vmul.f32 %v2236, %v2067
  %v2260 = vmul.f32 %v2238, %v2069
  %v2261 = vmul.f32 %v2240, %v2071
  %v2262 = vmul.f32 %v2242, %v2073
  %v2263 = vmul.f32 %v2244, %v2075
  %v2264 = vmul.f32 %v2246, %v2077
  %v2265 = vmul.f32 %v2248, %v2079
  %v2266 = vmul.f32 %v2250, %v2081
  %2275 = vrot.lane.b32.xlu0 %v2050, 64
  %v2276 = vpop.permute.xlu0 %2275
  %2277 = vrot.lane.b32.xlu0 %v2051, 64
  %v2278 = vpop.permute.xlu0 %2277
  %2279 = vrot.lane.b32.xlu0 %v2052, 64
  %v2280 = vpop.permute.xlu0 %2279
  %2281 = vrot.lane.b32.xlu0 %v2053, 64
  %v2282 = vpop.permute.xlu0 %2281
  %2283 = vrot.lane.b32.xlu0 %v2054, 64
  %v2284 = vpop.permute.xlu0 %2283
  %2285 = vrot.lane.b32.xlu0 %v2055, 64
  %v2286 = vpop.permute.xlu0 %2285
  %2287 = vrot.lane.b32.xlu0 %v2056, 64
  %v2288 = vpop.permute.xlu0 %2287
  %2289 = vrot.lane.b32.xlu0 %v2057, 64
  %v2290 = vpop.permute.xlu0 %2289
  %v2300 = vsel %vm752, %v2259, 0
  %v2303 = vsel %vm752, %v2260, 0
  %v2306 = vsel %vm752, %v2261, 0
  %v2309 = vsel %vm752, %v2262, 0
  %v2312 = vsel %vm752, %v2263, 0
  %v2315 = vsel %vm752, %v2264, 0
  %v2318 = vsel %vm752, %v2265, 0
  %v2321 = vsel %vm752, %v2266, 0
  %2323 = vmatprep.subr.mxu0 0.0
  %2324 = vmatpush1.msra.mxu0 %v740
  %2325 = vmatprep.subr.mxu0 0.0
  %2326 = vmatpush1.msra.mxu0 %v741
  %2327 = vmatprep.subr.mxu0 0.0
  %2328 = vmatpush1.msra.mxu0 %v742
  %2329 = vmatprep.subr.mxu0 0.0
  %2330 = vmatpush1.msra.mxu0 %v743
  %2331 = vmatprep.subr.mxu0 0.0
  %2332 = vmatpush1.msra.mxu0 0.0
  %2333 = vmatprep.subr.mxu0 0.0
  %2334 = vmatpush1.msra.mxu0 0.0
  %2335 = vmatprep.subr.mxu0 0.0
  %2336 = vmatpush1.msra.mxu0 0.0
  %2337 = vmatprep.subr.mxu0 0.0
  %2338 = vmatpush1.msra.mxu0 0.0
  %2339 = vmatprep.subr.mxu0 0.0
  %2340 = vmatpush1.msra.mxu0 0.0
  %2341 = vmatprep.subr.mxu0 0.0
  %2342 = vmatpush1.msra.mxu0 0.0
  %2343 = vmatprep.subr.mxu0 0.0
  %2344 = vmatpush1.msra.mxu0 0.0
  %2345 = vmatprep.subr.mxu0 0.0
  %2346 = vmatpush1.msra.mxu0 0.0
  %2347 = vmatprep.subr.mxu0 0.0
  %2348 = vmatpush1.msra.mxu0 0.0
  %2349 = vmatprep.subr.mxu0 0.0
  %2350 = vmatpush1.msra.mxu0 0.0
  %2351 = vmatprep.subr.mxu0 0.0
  %2352 = vmatpush1.msra.mxu0 0.0
  %2353 = vmatprep.subr.mxu0 0.0
  %2354 = vmatpush1.msra.mxu0 0.0
  %2355 = vmatprep.subr.mxu0 0.0
  %2356 = vmatpush1.msra.mxu0 0.0
  %2357 = vmatprep.subr.mxu0 0.0
  %2358 = vmatpush1.msra.mxu0 0.0
  %2359 = vmatprep.subr.mxu0 0.0
  %2360 = vmatpush1.msra.mxu0 0.0
  %2361 = vmatprep.subr.mxu0 0.0
  %2362 = vmatpush1.msra.mxu0 0.0
  %2363 = vmatprep.subr.mxu0 0.0
  %2364 = vmatpush1.msra.mxu0 0.0
  %2365 = vmatprep.subr.mxu0 0.0
  %2366 = vmatpush1.msra.mxu0 0.0
  %2367 = vmatprep.subr.mxu0 0.0
  %2368 = vmatpush1.msra.mxu0 0.0
  %2369 = vmatprep.subr.mxu0 0.0
  %2370 = vmatpush1.msra.mxu0 0.0
  %2371 = vmatprep.subr.mxu0 0.0
  %2372 = vmatpush1.msra.mxu0 0.0
  %2373 = vmatprep.subr.mxu0 0.0
  %2374 = vmatpush1.msra.mxu0 0.0
  %2375 = vmatprep.subr.mxu0 0.0
  %2376 = vmatpush1.msra.mxu0 0.0
  %2377 = vmatprep.subr.mxu0 0.0
  %2378 = vmatpush1.msra.mxu0 0.0
  %2379 = vmatprep.subr.mxu0 0.0
  %2380 = vmatpush1.msra.mxu0 0.0
  %2381 = vmatprep.subr.mxu0 0.0
  %2382 = vmatpush1.msra.mxu0 0.0
  %2383 = vmatprep.subr.mxu0 0.0
  %2384 = vmatpush1.msra.mxu0 0.0
  %2385 = vmatprep.subr.mxu0 0.0
  %2386 = vmatpush1.msra.mxu0 0.0
  %2387 = vmatprep.mubr.f32.mxu0 0.0
  %2388 = vmatmul.mubr.f32.gmra.mrb[0].mxu0 %v2300
  %v2389 = vpop.f32.mrb[0].mxu0
  %v2390 = vadd.f32 %v2276, %v2389
  %v2391 = vpop.f32.mrb[0].mxu0
  %2392 = vmatprep.mubr.f32.mxu0 0.0
  %2393 = vmatmul.mubr.f32.gmra.mrb[0].mxu0 %v2303
  %v2394 = vpop.f32.mrb[0].mxu0
  %v2395 = vadd.f32 %v2278, %v2394
  %v2396 = vpop.f32.mrb[0].mxu0
  %2397 = vmatprep.mubr.f32.mxu0 0.0
  %2398 = vmatmul.mubr.f32.gmra.mrb[0].mxu0 %v2306
  %v2399 = vpop.f32.mrb[0].mxu0
  %v2400 = vadd.f32 %v2280, %v2399
  %v2401 = vpop.f32.mrb[0].mxu0
  %2402 = vmatprep.mubr.f32.mxu0 0.0
  %2403 = vmatmul.mubr.f32.gmra.mrb[0].mxu0 %v2309
  %v2404 = vpop.f32.mrb[0].mxu0
  %v2405 = vadd.f32 %v2282, %v2404
  %v2406 = vpop.f32.mrb[0].mxu0
  %2407 = vmatprep.mubr.f32.mxu0 0.0
  %2408 = vmatmul.mubr.f32.gmra.mrb[0].mxu0 %v2312
  %v2409 = vpop.f32.mrb[0].mxu0
  %v2410 = vadd.f32 %v2284, %v2409
  %v2411 = vpop.f32.mrb[0].mxu0
  %2412 = vmatprep.mubr.f32.mxu0 0.0
  %2413 = vmatmul.mubr.f32.gmra.mrb[0].mxu0 %v2315
  %v2414 = vpop.f32.mrb[0].mxu0
  %v2415 = vadd.f32 %v2286, %v2414
  %v2416 = vpop.f32.mrb[0].mxu0
  %2417 = vmatprep.mubr.f32.mxu0 0.0
  %2418 = vmatmul.mubr.f32.gmra.mrb[0].mxu0 %v2318
  %v2419 = vpop.f32.mrb[0].mxu0
  %v2420 = vadd.f32 %v2288, %v2419
  %v2421 = vpop.f32.mrb[0].mxu0
  %2422 = vmatprep.mubr.f32.mxu0 0.0
  %2423 = vmatmul.mubr.f32.gmra.mrb[0].mxu0 %v2321
  %v2424 = vpop.f32.mrb[0].mxu0
  %v2425 = vadd.f32 %v2290, %v2424
  %v2426 = vpop.f32.mrb[0].mxu0
  %2427 = vdwg.mxu0
  %v2428 = vtanh.pop %v2390
  %v2429 = vtanh.pop %v2395
  %v2430 = vtanh.pop %v2400
  %v2431 = vtanh.pop %v2405
  %v2432 = vtanh.pop %v2410
  %v2433 = vtanh.pop %v2415
  %v2434 = vtanh.pop %v2420
  %v2435 = vtanh.pop %v2425
  %v2436 = vsub.f32 1.0, %v2236
  %v2437 = vsub.f32 1.0, %v2238
  %v2438 = vsub.f32 1.0, %v2240
  %v2439 = vsub.f32 1.0, %v2242
  %v2440 = vsub.f32 1.0, %v2244
  %v2441 = vsub.f32 1.0, %v2246
  %v2442 = vsub.f32 1.0, %v2248
  %v2443 = vsub.f32 1.0, %v2250
  %v2444 = vmul.f32 %v2436, %v2042
  %v2445 = vmul.f32 %v2437, %v2043
  %v2446 = vmul.f32 %v2438, %v2044
  %v2447 = vmul.f32 %v2439, %v2045
  %v2448 = vmul.f32 %v2440, %v2046
  %v2449 = vmul.f32 %v2441, %v2047
  %v2450 = vmul.f32 %v2442, %v2048
  %v2451 = vmul.f32 %v2443, %v2049
  %2460 = vrot.lane.b32.xlu0 %v2428, 32
  %v2461 = vpop.permute.xlu0 %2460
  %2462 = vrot.lane.b32.xlu0 %v2429, 32
  %v2463 = vpop.permute.xlu0 %2462
  %2464 = vrot.lane.b32.xlu0 %v2430, 32
  %v2465 = vpop.permute.xlu0 %2464
  %2466 = vrot.lane.b32.xlu0 %v2431, 32
  %v2467 = vpop.permute.xlu0 %2466
  %2468 = vrot.lane.b32.xlu0 %v2432, 32
  %v2469 = vpop.permute.xlu0 %2468
  %2470 = vrot.lane.b32.xlu0 %v2433, 32
  %v2471 = vpop.permute.xlu0 %2470
  %2472 = vrot.lane.b32.xlu0 %v2434, 32
  %v2473 = vpop.permute.xlu0 %2472
  %2474 = vrot.lane.b32.xlu0 %v2435, 32
  %v2475 = vpop.permute.xlu0 %2474
  %v2484 = vmul.f32 %v2236, %v2461
  %v2485 = vmul.f32 %v2238, %v2463
  %v2486 = vmul.f32 %v2240, %v2465
  %v2487 = vmul.f32 %v2242, %v2467
  %v2488 = vmul.f32 %v2244, %v2469
  %v2489 = vmul.f32 %v2246, %v2471
  %v2490 = vmul.f32 %v2248, %v2473
  %v2491 = vmul.f32 %v2250, %v2475
  %v2492 = vadd.f32 %v2444, %v2484
  %v2493 = vadd.f32 %v2445, %v2485
  %v2494 = vadd.f32 %v2446, %v2486
  %v2495 = vadd.f32 %v2447, %v2487
  %v2496 = vadd.f32 %v2448, %v2488
  %v2497 = vadd.f32 %v2449, %v2489
  %v2498 = vadd.f32 %v2450, %v2490
  %v2499 = vadd.f32 %v2451, %v2491
  %v2500 = vld [vmem:[#allocation2 + $0x100] sm:$0xff]
  %v2501 = vld [vmem:[#allocation2 + $0x108] sm:$0xff]
  %v2502 = vld [vmem:[#allocation2 + $0x110] sm:$0xff]
  %v2503 = vld [vmem:[#allocation2 + $0x118] sm:$0xff]
  %v2504 = vld [vmem:[#allocation2 + $0x120] sm:$0xff]
  %v2505 = vld [vmem:[#allocation2 + $0x128] sm:$0xff]
  %v2506 = vld [vmem:[#allocation2 + $0x130] sm:$0xff]
  %v2507 = vld [vmem:[#allocation2 + $0x138] sm:$0xff]
  %2516 = vrot.lane.b32.xlu0 %v2492, 96
  %v2517 = vpop.permute.xlu0 %2516
  %2518 = vrot.lane.b32.xlu0 %v2493, 96
  %v2519 = vpop.permute.xlu0 %2518
  %2520 = vrot.lane.b32.xlu0 %v2494, 96
  %v2521 = vpop.permute.xlu0 %2520
  %2522 = vrot.lane.b32.xlu0 %v2495, 96
  %v2523 = vpop.permute.xlu0 %2522
  %2524 = vrot.lane.b32.xlu0 %v2496, 96
  %v2525 = vpop.permute.xlu0 %2524
  %2526 = vrot.lane.b32.xlu0 %v2497, 96
  %v2527 = vpop.permute.xlu0 %2526
  %2528 = vrot.lane.b32.xlu0 %v2498, 96
  %v2529 = vpop.permute.xlu0 %2528
  %2530 = vrot.lane.b32.xlu0 %v2499, 96
  %v2531 = vpop.permute.xlu0 %2530
  %v2532 = vsel %vm752, %v2517, 0
  %v2534 = vsel %vm752, %v2519, 0
  %v2536 = vsel %vm752, %v2521, 0
  %v2538 = vsel %vm752, %v2523, 0
  %v2540 = vsel %vm752, %v2525, 0
  %v2542 = vsel %vm752, %v2527, 0
  %v2544 = vsel %vm752, %v2529, 0
  %v2546 = vsel %vm752, %v2531, 0
  %2548 = vmatprep.subr.mxu0 0.0
  %2549 = vmatpush1.msra.mxu0 %v736
  %2550 = vmatprep.subr.mxu0 0.0
  %2551 = vmatpush1.msra.mxu0 %v737
  %2552 = vmatprep.subr.mxu0 0.0
  %2553 = vmatpush1.msra.mxu0 %v738
  %2554 = vmatprep.subr.mxu0 0.0
  %2555 = vmatpush1.msra.mxu0 %v739
  %2556 = vmatprep.subr.mxu0 0.0
  %2557 = vmatpush1.msra.mxu0 0.0
  %2558 = vmatprep.subr.mxu0 0.0
  %2559 = vmatpush1.msra.mxu0 0.0
  %2560 = vmatprep.subr.mxu0 0.0
  %2561 = vmatpush1.msra.mxu0 0.0
  %2562 = vmatprep.subr.mxu0 0.0
  %2563 = vmatpush1.msra.mxu0 0.0
  %2564 = vmatprep.subr.mxu0 0.0
  %2565 = vmatpush1.msra.mxu0 0.0
  %2566 = vmatprep.subr.mxu0 0.0
  %2567 = vmatpush1.msra.mxu0 0.0
  %2568 = vmatprep.subr.mxu0 0.0
  %2569 = vmatpush1.msra.mxu0 0.0
  %2570 = vmatprep.subr.mxu0 0.0
  %2571 = vmatpush1.msra.mxu0 0.0
  %2572 = vmatprep.subr.mxu0 0.0
  %2573 = vmatpush1.msra.mxu0 0.0
  %2574 = vmatprep.subr.mxu0 0.0
  %2575 = vmatpush1.msra.mxu0 0.0
  %2576 = vmatprep.subr.mxu0 0.0
  %2577 = vmatpush1.msra.mxu0 0.0
  %2578 = vmatprep.subr.mxu0 0.0
  %2579 = vmatpush1.msra.mxu0 0.0
  %2580 = vmatprep.subr.mxu0 0.0
  %2581 = vmatpush1.msra.mxu0 0.0
  %2582 = vmatprep.subr.mxu0 0.0
  %2583 = vmatpush1.msra.mxu0 0.0
  %2584 = vmatprep.subr.mxu0 0.0
  %2585 = vmatpush1.msra.mxu0 0.0
  %2586 = vmatprep.subr.mxu0 0.0
  %2587 = vmatpush1.msra.mxu0 0.0
  %2588 = vmatprep.subr.mxu0 0.0
  %2589 = vmatpush1.msra.mxu0 0.0
  %2590 = vmatprep.subr.mxu0 0.0
  %2591 = vmatpush1.msra.mxu0 0.0
  %2592 = vmatprep.subr.mxu0 0.0
  %2593 = vmatpush1.msra.mxu0 0.0
  %2594 = vmatprep.subr.mxu0 0.0
  %2595 = vmatpush1.msra.mxu0 0.0
  %2596 = vmatprep.subr.mxu0 0.0
  %2597 = vmatpush1.msra.mxu0 0.0
  %2598 = vmatprep.subr.mxu0 0.0
  %2599 = vmatpush1.msra.mxu0 0.0
  %2600 = vmatprep.subr.mxu0 0.0
  %2601 = vmatpush1.msra.mxu0 0.0
  %2602 = vmatprep.subr.mxu0 0.0
  %2603 = vmatpush1.msra.mxu0 0.0
  %2604 = vmatprep.subr.mxu0 0.0
  %2605 = vmatpush1.msra.mxu0 0.0
  %2606 = vmatprep.subr.mxu0 0.0
  %2607 = vmatpush1.msra.mxu0 0.0
  %2608 = vmatprep.subr.mxu0 0.0
  %2609 = vmatpush1.msra.mxu0 0.0
  %2610 = vmatprep.subr.mxu0 0.0
  %2611 = vmatpush1.msra.mxu0 0.0
  %2612 = vmatprep.mubr.f32.mxu0 0.0
  %2613 = vmatmul.mubr.f32.gmra.mrb[0].mxu0 %v2532
  %v2614 = vpop.f32.mrb[0].mxu0
  %v2615 = vadd.f32 %v2500, %v2614
  %v2616 = vpop.f32.mrb[0].mxu0
  %2617 = vmatprep.mubr.f32.mxu0 0.0
  %2618 = vmatmul.mubr.f32.gmra.mrb[0].mxu0 %v2534
  %v2619 = vpop.f32.mrb[0].mxu0
  %v2620 = vadd.f32 %v2501, %v2619
  %v2621 = vpop.f32.mrb[0].mxu0
  %2622 = vmatprep.mubr.f32.mxu0 0.0
  %2623 = vmatmul.mubr.f32.gmra.mrb[0].mxu0 %v2536
  %v2624 = vpop.f32.mrb[0].mxu0
  %v2625 = vadd.f32 %v2502, %v2624
  %v2626 = vpop.f32.mrb[0].mxu0
  %2627 = vmatprep.mubr.f32.mxu0 0.0
  %2628 = vmatmul.mubr.f32.gmra.mrb[0].mxu0 %v2538
  %v2629 = vpop.f32.mrb[0].mxu0
  %v2630 = vadd.f32 %v2503, %v2629
  %v2631 = vpop.f32.mrb[0].mxu0
  %2632 = vmatprep.mubr.f32.mxu0 0.0
  %2633 = vmatmul.mubr.f32.gmra.mrb[0].mxu0 %v2540
  %v2634 = vpop.f32.mrb[0].mxu0
  %v2635 = vadd.f32 %v2504, %v2634
  %v2636 = vpop.f32.mrb[0].mxu0
  %2637 = vmatprep.mubr.f32.mxu0 0.0
  %2638 = vmatmul.mubr.f32.gmra.mrb[0].mxu0 %v2542
  %v2639 = vpop.f32.mrb[0].mxu0
  %v2640 = vadd.f32 %v2505, %v2639
  %v2641 = vpop.f32.mrb[0].mxu0
  %2642 = vmatprep.mubr.f32.mxu0 0.0
  %2643 = vmatmul.mubr.f32.gmra.mrb[0].mxu0 %v2544
  %v2644 = vpop.f32.mrb[0].mxu0
  %v2645 = vadd.f32 %v2506, %v2644
  %v2646 = vpop.f32.mrb[0].mxu0
  %2647 = vmatprep.mubr.f32.mxu0 0.0
  %2648 = vmatmul.mubr.f32.gmra.mrb[0].mxu0 %v2546
  %v2649 = vpop.f32.mrb[0].mxu0
  %v2650 = vadd.f32 %v2507, %v2649
  %v2651 = vpop.f32.mrb[0].mxu0
  %2652 = vdwg.mxu0
  %v2653 = vxor.u32 %v2615, 2147483648
  %v2654 = vxor.u32 %v2620, 2147483648
  %v2655 = vxor.u32 %v2625, 2147483648
  %v2656 = vxor.u32 %v2630, 2147483648
  %v2657 = vxor.u32 %v2635, 2147483648
  %v2658 = vxor.u32 %v2640, 2147483648
  %v2659 = vxor.u32 %v2645, 2147483648
  %v2660 = vxor.u32 %v2650, 2147483648
  %v2661 = vmul.f32 %v2653, 1.442695
  %v2662 = vpow.pop %v2661
  %v2663 = vmul.f32 %v2654, 1.442695
  %v2664 = vpow.pop %v2663
  %v2665 = vmul.f32 %v2655, 1.442695
  %v2666 = vpow.pop %v2665
  %v2667 = vmul.f32 %v2656, 1.442695
  %v2668 = vpow.pop %v2667
  %v2669 = vmul.f32 %v2657, 1.442695
  %v2670 = vpow.pop %v2669
  %v2671 = vmul.f32 %v2658, 1.442695
  %v2672 = vpow.pop %v2671
  %v2673 = vmul.f32 %v2659, 1.442695
  %v2674 = vpow.pop %v2673
  %v2675 = vmul.f32 %v2660, 1.442695
  %v2676 = vpow.pop %v2675
  %v2677 = vadd.f32 %v2662, 1.0
  %v2678 = vadd.f32 %v2664, 1.0
  %v2679 = vadd.f32 %v2666, 1.0
  %v2680 = vadd.f32 %v2668, 1.0
  %v2681 = vadd.f32 %v2670, 1.0
  %v2682 = vadd.f32 %v2672, 1.0
  %v2683 = vadd.f32 %v2674, 1.0
  %v2684 = vadd.f32 %v2676, 1.0
  %v2685 = vrcp.pop %v2677
  %v2686 = vmul.f32 1.0, %v2685
  %v2687 = vrcp.pop %v2678
  %v2688 = vmul.f32 1.0, %v2687
  %v2689 = vrcp.pop %v2679
  %v2690 = vmul.f32 1.0, %v2689
  %v2691 = vrcp.pop %v2680
  %v2692 = vmul.f32 1.0, %v2691
  %v2693 = vrcp.pop %v2681
  %v2694 = vmul.f32 1.0, %v2693
  %v2695 = vrcp.pop %v2682
  %v2696 = vmul.f32 1.0, %v2695
  %v2697 = vrcp.pop %v2683
  %v2698 = vmul.f32 1.0, %v2697
  %v2699 = vrcp.pop %v2684
  %v2700 = vmul.f32 1.0, %v2699
  %v2709 = vmul.f32 %v2686, %v2517
  %v2710 = vmul.f32 %v2688, %v2519
  %v2711 = vmul.f32 %v2690, %v2521
  %v2712 = vmul.f32 %v2692, %v2523
  %v2713 = vmul.f32 %v2694, %v2525
  %v2714 = vmul.f32 %v2696, %v2527
  %v2715 = vmul.f32 %v2698, %v2529
  %v2716 = vmul.f32 %v2700, %v2531
  %2725 = vrot.lane.b32.xlu0 %v2500, 64
  %v2726 = vpop.permute.xlu0 %2725
  %2727 = vrot.lane.b32.xlu0 %v2501, 64
  %v2728 = vpop.permute.xlu0 %2727
  %2729 = vrot.lane.b32.xlu0 %v2502, 64
  %v2730 = vpop.permute.xlu0 %2729
  %2731 = vrot.lane.b32.xlu0 %v2503, 64
  %v2732 = vpop.permute.xlu0 %2731
  %2733 = vrot.lane.b32.xlu0 %v2504, 64
  %v2734 = vpop.permute.xlu0 %2733
  %2735 = vrot.lane.b32.xlu0 %v2505, 64
  %v2736 = vpop.permute.xlu0 %2735
  %2737 = vrot.lane.b32.xlu0 %v2506, 64
  %v2738 = vpop.permute.xlu0 %2737
  %2739 = vrot.lane.b32.xlu0 %v2507, 64
  %v2740 = vpop.permute.xlu0 %2739
  %v2750 = vsel %vm752, %v2709, 0
  %v2753 = vsel %vm752, %v2710, 0
  %v2756 = vsel %vm752, %v2711, 0
  %v2759 = vsel %vm752, %v2712, 0
  %v2762 = vsel %vm752, %v2713, 0
  %v2765 = vsel %vm752, %v2714, 0
  %v2768 = vsel %vm752, %v2715, 0
  %v2771 = vsel %vm752, %v2716, 0
  %2773 = vmatprep.subr.mxu0 0.0
  %2774 = vmatpush1.msra.mxu0 %v740
  %2775 = vmatprep.subr.mxu0 0.0
  %2776 = vmatpush1.msra.mxu0 %v741
  %2777 = vmatprep.subr.mxu0 0.0
  %2778 = vmatpush1.msra.mxu0 %v742
  %2779 = vmatprep.subr.mxu0 0.0
  %2780 = vmatpush1.msra.mxu0 %v743
  %2781 = vmatprep.subr.mxu0 0.0
  %2782 = vmatpush1.msra.mxu0 0.0
  %2783 = vmatprep.subr.mxu0 0.0
  %2784 = vmatpush1.msra.mxu0 0.0
  %2785 = vmatprep.subr.mxu0 0.0
  %2786 = vmatpush1.msra.mxu0 0.0
  %2787 = vmatprep.subr.mxu0 0.0
  %2788 = vmatpush1.msra.mxu0 0.0
  %2789 = vmatprep.subr.mxu0 0.0
  %2790 = vmatpush1.msra.mxu0 0.0
  %2791 = vmatprep.subr.mxu0 0.0
  %2792 = vmatpush1.msra.mxu0 0.0
  %2793 = vmatprep.subr.mxu0 0.0
  %2794 = vmatpush1.msra.mxu0 0.0
  %2795 = vmatprep.subr.mxu0 0.0
  %2796 = vmatpush1.msra.mxu0 0.0
  %2797 = vmatprep.subr.mxu0 0.0
  %2798 = vmatpush1.msra.mxu0 0.0
  %2799 = vmatprep.subr.mxu0 0.0
  %2800 = vmatpush1.msra.mxu0 0.0
  %2801 = vmatprep.subr.mxu0 0.0
  %2802 = vmatpush1.msra.mxu0 0.0
  %2803 = vmatprep.subr.mxu0 0.0
  %2804 = vmatpush1.msra.mxu0 0.0
  %2805 = vmatprep.subr.mxu0 0.0
  %2806 = vmatpush1.msra.mxu0 0.0
  %2807 = vmatprep.subr.mxu0 0.0
  %2808 = vmatpush1.msra.mxu0 0.0
  %2809 = vmatprep.subr.mxu0 0.0
  %2810 = vmatpush1.msra.mxu0 0.0
  %2811 = vmatprep.subr.mxu0 0.0
  %2812 = vmatpush1.msra.mxu0 0.0
  %2813 = vmatprep.subr.mxu0 0.0
  %2814 = vmatpush1.msra.mxu0 0.0
  %2815 = vmatprep.subr.mxu0 0.0
  %2816 = vmatpush1.msra.mxu0 0.0
  %2817 = vmatprep.subr.mxu0 0.0
  %2818 = vmatpush1.msra.mxu0 0.0
  %2819 = vmatprep.subr.mxu0 0.0
  %2820 = vmatpush1.msra.mxu0 0.0
  %2821 = vmatprep.subr.mxu0 0.0
  %2822 = vmatpush1.msra.mxu0 0.0
  %2823 = vmatprep.subr.mxu0 0.0
  %2824 = vmatpush1.msra.mxu0 0.0
  %2825 = vmatprep.subr.mxu0 0.0
  %2826 = vmatpush1.msra.mxu0 0.0
  %2827 = vmatprep.subr.mxu0 0.0
  %2828 = vmatpush1.msra.mxu0 0.0
  %2829 = vmatprep.subr.mxu0 0.0
  %2830 = vmatpush1.msra.mxu0 0.0
  %2831 = vmatprep.subr.mxu0 0.0
  %2832 = vmatpush1.msra.mxu0 0.0
  %2833 = vmatprep.subr.mxu0 0.0
  %2834 = vmatpush1.msra.mxu0 0.0
  %2835 = vmatprep.subr.mxu0 0.0
  %2836 = vmatpush1.msra.mxu0 0.0
  %2837 = vmatprep.mubr.f32.mxu0 0.0
  %2838 = vmatmul.mubr.f32.gmra.mrb[0].mxu0 %v2750
  %v2839 = vpop.f32.mrb[0].mxu0
  %v2840 = vadd.f32 %v2726, %v2839
  %v2841 = vpop.f32.mrb[0].mxu0
  %2842 = vmatprep.mubr.f32.mxu0 0.0
  %2843 = vmatmul.mubr.f32.gmra.mrb[0].mxu0 %v2753
  %v2844 = vpop.f32.mrb[0].mxu0
  %v2845 = vadd.f32 %v2728, %v2844
  %v2846 = vpop.f32.mrb[0].mxu0
  %2847 = vmatprep.mubr.f32.mxu0 0.0
  %2848 = vmatmul.mubr.f32.gmra.mrb[0].mxu0 %v2756
  %v2849 = vpop.f32.mrb[0].mxu0
  %v2850 = vadd.f32 %v2730, %v2849
  %v2851 = vpop.f32.mrb[0].mxu0
  %2852 = vmatprep.mubr.f32.mxu0 0.0
  %2853 = vmatmul.mubr.f32.gmra.mrb[0].mxu0 %v2759
  %v2854 = vpop.f32.mrb[0].mxu0
  %v2855 = vadd.f32 %v2732, %v2854
  %v2856 = vpop.f32.mrb[0].mxu0
  %2857 = vmatprep.mubr.f32.mxu0 0.0
  %2858 = vmatmul.mubr.f32.gmra.mrb[0].mxu0 %v2762
  %v2859 = vpop.f32.mrb[0].mxu0
  %v2860 = vadd.f32 %v2734, %v2859
  %v2861 = vpop.f32.mrb[0].mxu0
  %2862 = vmatprep.mubr.f32.mxu0 0.0
  %2863 = vmatmul.mubr.f32.gmra.mrb[0].mxu0 %v2765
  %v2864 = vpop.f32.mrb[0].mxu0
  %v2865 = vadd.f32 %v2736, %v2864
  %v2866 = vpop.f32.mrb[0].mxu0
  %2867 = vmatprep.mubr.f32.mxu0 0.0
  %2868 = vmatmul.mubr.f32.gmra.mrb[0].mxu0 %v2768
  %v2869 = vpop.f32.mrb[0].mxu0
  %v2870 = vadd.f32 %v2738, %v2869
  %v2871 = vpop.f32.mrb[0].mxu0
  %2872 = vmatprep.mubr.f32.mxu0 0.0
  %2873 = vmatmul.mubr.f32.gmra.mrb[0].mxu0 %v2771
  %v2874 = vpop.f32.mrb[0].mxu0
  %v2875 = vadd.f32 %v2740, %v2874
  %v2876 = vpop.f32.mrb[0].mxu0
  %2877 = vdwg.mxu0
  %v2878 = vtanh.pop %v2840
  %v2879 = vtanh.pop %v2845
  %v2880 = vtanh.pop %v2850
  %v2881 = vtanh.pop %v2855
  %v2882 = vtanh.pop %v2860
  %v2883 = vtanh.pop %v2865
  %v2884 = vtanh.pop %v2870
  %v2885 = vtanh.pop %v2875
  %v2886 = vsub.f32 1.0, %v2686
  %v2887 = vsub.f32 1.0, %v2688
  %v2888 = vsub.f32 1.0, %v2690
  %v2889 = vsub.f32 1.0, %v2692
  %v2890 = vsub.f32 1.0, %v2694
  %v2891 = vsub.f32 1.0, %v2696
  %v2892 = vsub.f32 1.0, %v2698
  %v2893 = vsub.f32 1.0, %v2700
  %v2894 = vmul.f32 %v2886, %v2492
  %v2895 = vmul.f32 %v2887, %v2493
  %v2896 = vmul.f32 %v2888, %v2494
  %v2897 = vmul.f32 %v2889, %v2495
  %v2898 = vmul.f32 %v2890, %v2496
  %v2899 = vmul.f32 %v2891, %v2497
  %v2900 = vmul.f32 %v2892, %v2498
  %v2901 = vmul.f32 %v2893, %v2499
  %2910 = vrot.lane.b32.xlu0 %v2878, 32
  %v2911 = vpop.permute.xlu0 %2910
  %2912 = vrot.lane.b32.xlu0 %v2879, 32
  %v2913 = vpop.permute.xlu0 %2912
  %2914 = vrot.lane.b32.xlu0 %v2880, 32
  %v2915 = vpop.permute.xlu0 %2914
  %2916 = vrot.lane.b32.xlu0 %v2881, 32
  %v2917 = vpop.permute.xlu0 %2916
  %2918 = vrot.lane.b32.xlu0 %v2882, 32
  %v2919 = vpop.permute.xlu0 %2918
  %2920 = vrot.lane.b32.xlu0 %v2883, 32
  %v2921 = vpop.permute.xlu0 %2920
  %2922 = vrot.lane.b32.xlu0 %v2884, 32
  %v2923 = vpop.permute.xlu0 %2922
  %2924 = vrot.lane.b32.xlu0 %v2885, 32
  %v2925 = vpop.permute.xlu0 %2924
  %v2934 = vmul.f32 %v2686, %v2911
  %v2935 = vmul.f32 %v2688, %v2913
  %v2936 = vmul.f32 %v2690, %v2915
  %v2937 = vmul.f32 %v2692, %v2917
  %v2938 = vmul.f32 %v2694, %v2919
  %v2939 = vmul.f32 %v2696, %v2921
  %v2940 = vmul.f32 %v2698, %v2923
  %v2941 = vmul.f32 %v2700, %v2925
  %v2942 = vadd.f32 %v2894, %v2934
  %v2943 = vadd.f32 %v2895, %v2935
  %v2944 = vadd.f32 %v2896, %v2936
  %v2945 = vadd.f32 %v2897, %v2937
  %v2946 = vadd.f32 %v2898, %v2938
  %v2947 = vadd.f32 %v2899, %v2939
  %v2948 = vadd.f32 %v2900, %v2940
  %v2949 = vadd.f32 %v2901, %v2941
  %v2950 = vld [vmem:[#allocation2 + $0x140] sm:$0xff]
  %v2951 = vld [vmem:[#allocation2 + $0x148] sm:$0xff]
  %v2952 = vld [vmem:[#allocation2 + $0x150] sm:$0xff]
  %v2953 = vld [vmem:[#allocation2 + $0x158] sm:$0xff]
  %v2954 = vld [vmem:[#allocation2 + $0x160] sm:$0xff]
  %v2955 = vld [vmem:[#allocation2 + $0x168] sm:$0xff]
  %v2956 = vld [vmem:[#allocation2 + $0x170] sm:$0xff]
  %v2957 = vld [vmem:[#allocation2 + $0x178] sm:$0xff]
  %2966 = vrot.lane.b32.xlu0 %v2942, 96
  %v2967 = vpop.permute.xlu0 %2966
  %2968 = vrot.lane.b32.xlu0 %v2943, 96
  %v2969 = vpop.permute.xlu0 %2968
  %2970 = vrot.lane.b32.xlu0 %v2944, 96
  %v2971 = vpop.permute.xlu0 %2970
  %2972 = vrot.lane.b32.xlu0 %v2945, 96
  %v2973 = vpop.permute.xlu0 %2972
  %2974 = vrot.lane.b32.xlu0 %v2946, 96
  %v2975 = vpop.permute.xlu0 %2974
  %2976 = vrot.lane.b32.xlu0 %v2947, 96
  %v2977 = vpop.permute.xlu0 %2976
  %2978 = vrot.lane.b32.xlu0 %v2948, 96
  %v2979 = vpop.permute.xlu0 %2978
  %2980 = vrot.lane.b32.xlu0 %v2949, 96
  %v2981 = vpop.permute.xlu0 %2980
  %v2982 = vsel %vm752, %v2967, 0
  %v2984 = vsel %vm752, %v2969, 0
  %v2986 = vsel %vm752, %v2971, 0
  %v2988 = vsel %vm752, %v2973, 0
  %v2990 = vsel %vm752, %v2975, 0
  %v2992 = vsel %vm752, %v2977, 0
  %v2994 = vsel %vm752, %v2979, 0
  %v2996 = vsel %vm752, %v2981, 0
  %2998 = vmatprep.subr.mxu0 0.0
  %2999 = vmatpush1.msra.mxu0 %v736
  %3000 = vmatprep.subr.mxu0 0.0
  %3001 = vmatpush1.msra.mxu0 %v737
  %3002 = vmatprep.subr.mxu0 0.0
  %3003 = vmatpush1.msra.mxu0 %v738
  %3004 = vmatprep.subr.mxu0 0.0
  %3005 = vmatpush1.msra.mxu0 %v739
  %3006 = vmatprep.subr.mxu0 0.0
  %3007 = vmatpush1.msra.mxu0 0.0
  %3008 = vmatprep.subr.mxu0 0.0
  %3009 = vmatpush1.msra.mxu0 0.0
  %3010 = vmatprep.subr.mxu0 0.0
  %3011 = vmatpush1.msra.mxu0 0.0
  %3012 = vmatprep.subr.mxu0 0.0
  %3013 = vmatpush1.msra.mxu0 0.0
  %3014 = vmatprep.subr.mxu0 0.0
  %3015 = vmatpush1.msra.mxu0 0.0
  %3016 = vmatprep.subr.mxu0 0.0
  %3017 = vmatpush1.msra.mxu0 0.0
  %3018 = vmatprep.subr.mxu0 0.0
  %3019 = vmatpush1.msra.mxu0 0.0
  %3020 = vmatprep.subr.mxu0 0.0
  %3021 = vmatpush1.msra.mxu0 0.0
  %3022 = vmatprep.subr.mxu0 0.0
  %3023 = vmatpush1.msra.mxu0 0.0
  %3024 = vmatprep.subr.mxu0 0.0
  %3025 = vmatpush1.msra.mxu0 0.0
  %3026 = vmatprep.subr.mxu0 0.0
  %3027 = vmatpush1.msra.mxu0 0.0
  %3028 = vmatprep.subr.mxu0 0.0
  %3029 = vmatpush1.msra.mxu0 0.0
  %3030 = vmatprep.subr.mxu0 0.0
  %3031 = vmatpush1.msra.mxu0 0.0
  %3032 = vmatprep.subr.mxu0 0.0
  %3033 = vmatpush1.msra.mxu0 0.0
  %3034 = vmatprep.subr.mxu0 0.0
  %3035 = vmatpush1.msra.mxu0 0.0
  %3036 = vmatprep.subr.mxu0 0.0
  %3037 = vmatpush1.msra.mxu0 0.0
  %3038 = vmatprep.subr.mxu0 0.0
  %3039 = vmatpush1.msra.mxu0 0.0
  %3040 = vmatprep.subr.mxu0 0.0
  %3041 = vmatpush1.msra.mxu0 0.0
  %3042 = vmatprep.subr.mxu0 0.0
  %3043 = vmatpush1.msra.mxu0 0.0
  %3044 = vmatprep.subr.mxu0 0.0
  %3045 = vmatpush1.msra.mxu0 0.0
  %3046 = vmatprep.subr.mxu0 0.0
  %3047 = vmatpush1.msra.mxu0 0.0
  %3048 = vmatprep.subr.mxu0 0.0
  %3049 = vmatpush1.msra.mxu0 0.0
  %3050 = vmatprep.subr.mxu0 0.0
  %3051 = vmatpush1.msra.mxu0 0.0
  %3052 = vmatprep.subr.mxu0 0.0
  %3053 = vmatpush1.msra.mxu0 0.0
  %3054 = vmatprep.subr.mxu0 0.0
  %3055 = vmatpush1.msra.mxu0 0.0
  %3056 = vmatprep.subr.mxu0 0.0
  %3057 = vmatpush1.msra.mxu0 0.0
  %3058 = vmatprep.subr.mxu0 0.0
  %3059 = vmatpush1.msra.mxu0 0.0
  %3060 = vmatprep.subr.mxu0 0.0
  %3061 = vmatpush1.msra.mxu0 0.0
  %3062 = vmatprep.mubr.f32.mxu0 0.0
  %3063 = vmatmul.mubr.f32.gmra.mrb[0].mxu0 %v2982
  %v3064 = vpop.f32.mrb[0].mxu0
  %v3065 = vadd.f32 %v2950, %v3064
  %v3066 = vpop.f32.mrb[0].mxu0
  %3067 = vmatprep.mubr.f32.mxu0 0.0
  %3068 = vmatmul.mubr.f32.gmra.mrb[0].mxu0 %v2984
  %v3069 = vpop.f32.mrb[0].mxu0
  %v3070 = vadd.f32 %v2951, %v3069
  %v3071 = vpop.f32.mrb[0].mxu0
  %3072 = vmatprep.mubr.f32.mxu0 0.0
  %3073 = vmatmul.mubr.f32.gmra.mrb[0].mxu0 %v2986
  %v3074 = vpop.f32.mrb[0].mxu0
  %v3075 = vadd.f32 %v2952, %v3074
  %v3076 = vpop.f32.mrb[0].mxu0
  %3077 = vmatprep.mubr.f32.mxu0 0.0
  %3078 = vmatmul.mubr.f32.gmra.mrb[0].mxu0 %v2988
  %v3079 = vpop.f32.mrb[0].mxu0
  %v3080 = vadd.f32 %v2953, %v3079
  %v3081 = vpop.f32.mrb[0].mxu0
  %3082 = vmatprep.mubr.f32.mxu0 0.0
  %3083 = vmatmul.mubr.f32.gmra.mrb[0].mxu0 %v2990
  %v3084 = vpop.f32.mrb[0].mxu0
  %v3085 = vadd.f32 %v2954, %v3084
  %v3086 = vpop.f32.mrb[0].mxu0
  %3087 = vmatprep.mubr.f32.mxu0 0.0
  %3088 = vmatmul.mubr.f32.gmra.mrb[0].mxu0 %v2992
  %v3089 = vpop.f32.mrb[0].mxu0
  %v3090 = vadd.f32 %v2955, %v3089
  %v3091 = vpop.f32.mrb[0].mxu0
  %3092 = vmatprep.mubr.f32.mxu0 0.0
  %3093 = vmatmul.mubr.f32.gmra.mrb[0].mxu0 %v2994
  %v3094 = vpop.f32.mrb[0].mxu0
  %v3095 = vadd.f32 %v2956, %v3094
  %v3096 = vpop.f32.mrb[0].mxu0
  %3097 = vmatprep.mubr.f32.mxu0 0.0
  %3098 = vmatmul.mubr.f32.gmra.mrb[0].mxu0 %v2996
  %v3099 = vpop.f32.mrb[0].mxu0
  %v3100 = vadd.f32 %v2957, %v3099
  %v3101 = vpop.f32.mrb[0].mxu0
  %3102 = vdwg.mxu0
  %v3103 = vxor.u32 %v3065, 2147483648
  %v3104 = vxor.u32 %v3070, 2147483648
  %v3105 = vxor.u32 %v3075, 2147483648
  %v3106 = vxor.u32 %v3080, 2147483648
  %v3107 = vxor.u32 %v3085, 2147483648
  %v3108 = vxor.u32 %v3090, 2147483648
  %v3109 = vxor.u32 %v3095, 2147483648
  %v3110 = vxor.u32 %v3100, 2147483648
  %v3111 = vmul.f32 %v3103, 1.442695
  %v3112 = vpow.pop %v3111
  %v3113 = vmul.f32 %v3104, 1.442695
  %v3114 = vpow.pop %v3113
  %v3115 = vmul.f32 %v3105, 1.442695
  %v3116 = vpow.pop %v3115
  %v3117 = vmul.f32 %v3106, 1.442695
  %v3118 = vpow.pop %v3117
  %v3119 = vmul.f32 %v3107, 1.442695
  %v3120 = vpow.pop %v3119
  %v3121 = vmul.f32 %v3108, 1.442695
  %v3122 = vpow.pop %v3121
  %v3123 = vmul.f32 %v3109, 1.442695
  %v3124 = vpow.pop %v3123
  %v3125 = vmul.f32 %v3110, 1.442695
  %v3126 = vpow.pop %v3125
  %v3127 = vadd.f32 %v3112, 1.0
  %v3128 = vadd.f32 %v3114, 1.0
  %v3129 = vadd.f32 %v3116, 1.0
  %v3130 = vadd.f32 %v3118, 1.0
  %v3131 = vadd.f32 %v3120, 1.0
  %v3132 = vadd.f32 %v3122, 1.0
  %v3133 = vadd.f32 %v3124, 1.0
  %v3134 = vadd.f32 %v3126, 1.0
  %v3135 = vrcp.pop %v3127
  %v3136 = vmul.f32 1.0, %v3135
  %v3137 = vrcp.pop %v3128
  %v3138 = vmul.f32 1.0, %v3137
  %v3139 = vrcp.pop %v3129
  %v3140 = vmul.f32 1.0, %v3139
  %v3141 = vrcp.pop %v3130
  %v3142 = vmul.f32 1.0, %v3141
  %v3143 = vrcp.pop %v3131
  %v3144 = vmul.f32 1.0, %v3143
  %v3145 = vrcp.pop %v3132
  %v3146 = vmul.f32 1.0, %v3145
  %v3147 = vrcp.pop %v3133
  %v3148 = vmul.f32 1.0, %v3147
  %v3149 = vrcp.pop %v3134
  %v3150 = vmul.f32 1.0, %v3149
  %v3159 = vmul.f32 %v3136, %v2967
  %v3160 = vmul.f32 %v3138, %v2969
  %v3161 = vmul.f32 %v3140, %v2971
  %v3162 = vmul.f32 %v3142, %v2973
  %v3163 = vmul.f32 %v3144, %v2975
  %v3164 = vmul.f32 %v3146, %v2977
  %v3165 = vmul.f32 %v3148, %v2979
  %v3166 = vmul.f32 %v3150, %v2981
  %3175 = vrot.lane.b32.xlu0 %v2950, 64
  %v3176 = vpop.permute.xlu0 %3175
  %3177 = vrot.lane.b32.xlu0 %v2951, 64
  %v3178 = vpop.permute.xlu0 %3177
  %3179 = vrot.lane.b32.xlu0 %v2952, 64
  %v3180 = vpop.permute.xlu0 %3179
  %3181 = vrot.lane.b32.xlu0 %v2953, 64
  %v3182 = vpop.permute.xlu0 %3181
  %3183 = vrot.lane.b32.xlu0 %v2954, 64
  %v3184 = vpop.permute.xlu0 %3183
  %3185 = vrot.lane.b32.xlu0 %v2955, 64
  %v3186 = vpop.permute.xlu0 %3185
  %3187 = vrot.lane.b32.xlu0 %v2956, 64
  %v3188 = vpop.permute.xlu0 %3187
  %3189 = vrot.lane.b32.xlu0 %v2957, 64
  %v3190 = vpop.permute.xlu0 %3189
  %v3200 = vsel %vm752, %v3159, 0
  %v3203 = vsel %vm752, %v3160, 0
  %v3206 = vsel %vm752, %v3161, 0
  %v3209 = vsel %vm752, %v3162, 0
  %v3212 = vsel %vm752, %v3163, 0
  %v3215 = vsel %vm752, %v3164, 0
  %v3218 = vsel %vm752, %v3165, 0
  %v3221 = vsel %vm752, %v3166, 0
  %3223 = vmatprep.subr.mxu0 0.0
  %3224 = vmatpush1.msra.mxu0 %v740
  %3225 = vmatprep.subr.mxu0 0.0
  %3226 = vmatpush1.msra.mxu0 %v741
  %3227 = vmatprep.subr.mxu0 0.0
  %3228 = vmatpush1.msra.mxu0 %v742
  %3229 = vmatprep.subr.mxu0 0.0
  %3230 = vmatpush1.msra.mxu0 %v743
  %3231 = vmatprep.subr.mxu0 0.0
  %3232 = vmatpush1.msra.mxu0 0.0
  %3233 = vmatprep.subr.mxu0 0.0
  %3234 = vmatpush1.msra.mxu0 0.0
  %3235 = vmatprep.subr.mxu0 0.0
  %3236 = vmatpush1.msra.mxu0 0.0
  %3237 = vmatprep.subr.mxu0 0.0
  %3238 = vmatpush1.msra.mxu0 0.0
  %3239 = vmatprep.subr.mxu0 0.0
  %3240 = vmatpush1.msra.mxu0 0.0
  %3241 = vmatprep.subr.mxu0 0.0
  %3242 = vmatpush1.msra.mxu0 0.0
  %3243 = vmatprep.subr.mxu0 0.0
  %3244 = vmatpush1.msra.mxu0 0.0
  %3245 = vmatprep.subr.mxu0 0.0
  %3246 = vmatpush1.msra.mxu0 0.0
  %3247 = vmatprep.subr.mxu0 0.0
  %3248 = vmatpush1.msra.mxu0 0.0
  %3249 = vmatprep.subr.mxu0 0.0
  %3250 = vmatpush1.msra.mxu0 0.0
  %3251 = vmatprep.subr.mxu0 0.0
  %3252 = vmatpush1.msra.mxu0 0.0
  %3253 = vmatprep.subr.mxu0 0.0
  %3254 = vmatpush1.msra.mxu0 0.0
  %3255 = vmatprep.subr.mxu0 0.0
  %3256 = vmatpush1.msra.mxu0 0.0
  %3257 = vmatprep.subr.mxu0 0.0
  %3258 = vmatpush1.msra.mxu0 0.0
  %3259 = vmatprep.subr.mxu0 0.0
  %3260 = vmatpush1.msra.mxu0 0.0
  %3261 = vmatprep.subr.mxu0 0.0
  %3262 = vmatpush1.msra.mxu0 0.0
  %3263 = vmatprep.subr.mxu0 0.0
  %3264 = vmatpush1.msra.mxu0 0.0
  %3265 = vmatprep.subr.mxu0 0.0
  %3266 = vmatpush1.msra.mxu0 0.0
  %3267 = vmatprep.subr.mxu0 0.0
  %3268 = vmatpush1.msra.mxu0 0.0
  %3269 = vmatprep.subr.mxu0 0.0
  %3270 = vmatpush1.msra.mxu0 0.0
  %3271 = vmatprep.subr.mxu0 0.0
  %3272 = vmatpush1.msra.mxu0 0.0
  %3273 = vmatprep.subr.mxu0 0.0
  %3274 = vmatpush1.msra.mxu0 0.0
  %3275 = vmatprep.subr.mxu0 0.0
  %3276 = vmatpush1.msra.mxu0 0.0
  %3277 = vmatprep.subr.mxu0 0.0
  %3278 = vmatpush1.msra.mxu0 0.0
  %3279 = vmatprep.subr.mxu0 0.0
  %3280 = vmatpush1.msra.mxu0 0.0
  %3281 = vmatprep.subr.mxu0 0.0
  %3282 = vmatpush1.msra.mxu0 0.0
  %3283 = vmatprep.subr.mxu0 0.0
  %3284 = vmatpush1.msra.mxu0 0.0
  %3285 = vmatprep.subr.mxu0 0.0
  %3286 = vmatpush1.msra.mxu0 0.0
  %3287 = vmatprep.mubr.f32.mxu0 0.0
  %3288 = vmatmul.mubr.f32.gmra.mrb[0].mxu0 %v3200
  %v3289 = vpop.f32.mrb[0].mxu0
  %v3290 = vadd.f32 %v3176, %v3289
  %v3291 = vpop.f32.mrb[0].mxu0
  %3292 = vmatprep.mubr.f32.mxu0 0.0
  %3293 = vmatmul.mubr.f32.gmra.mrb[0].mxu0 %v3203
  %v3294 = vpop.f32.mrb[0].mxu0
  %v3295 = vadd.f32 %v3178, %v3294
  %v3296 = vpop.f32.mrb[0].mxu0
  %3297 = vmatprep.mubr.f32.mxu0 0.0
  %3298 = vmatmul.mubr.f32.gmra.mrb[0].mxu0 %v3206
  %v3299 = vpop.f32.mrb[0].mxu0
  %v3300 = vadd.f32 %v3180, %v3299
  %v3301 = vpop.f32.mrb[0].mxu0
  %3302 = vmatprep.mubr.f32.mxu0 0.0
  %3303 = vmatmul.mubr.f32.gmra.mrb[0].mxu0 %v3209
  %v3304 = vpop.f32.mrb[0].mxu0
  %v3305 = vadd.f32 %v3182, %v3304
  %v3306 = vpop.f32.mrb[0].mxu0
  %3307 = vmatprep.mubr.f32.mxu0 0.0
  %3308 = vmatmul.mubr.f32.gmra.mrb[0].mxu0 %v3212
  %v3309 = vpop.f32.mrb[0].mxu0
  %v3310 = vadd.f32 %v3184, %v3309
  %v3311 = vpop.f32.mrb[0].mxu0
  %3312 = vmatprep.mubr.f32.mxu0 0.0
  %3313 = vmatmul.mubr.f32.gmra.mrb[0].mxu0 %v3215
  %v3314 = vpop.f32.mrb[0].mxu0
  %v3315 = vadd.f32 %v3186, %v3314
  %v3316 = vpop.f32.mrb[0].mxu0
  %3317 = vmatprep.mubr.f32.mxu0 0.0
  %3318 = vmatmul.mubr.f32.gmra.mrb[0].mxu0 %v3218
  %v3319 = vpop.f32.mrb[0].mxu0
  %v3320 = vadd.f32 %v3188, %v3319
  %v3321 = vpop.f32.mrb[0].mxu0
  %3322 = vmatprep.mubr.f32.mxu0 0.0
  %3323 = vmatmul.mubr.f32.gmra.mrb[0].mxu0 %v3221
  %v3324 = vpop.f32.mrb[0].mxu0
  %v3325 = vadd.f32 %v3190, %v3324
  %v3326 = vpop.f32.mrb[0].mxu0
  %3327 = vdwg.mxu0
  %v3328 = vtanh.pop %v3290
  %v3329 = vtanh.pop %v3295
  %v3330 = vtanh.pop %v3300
  %v3331 = vtanh.pop %v3305
  %v3332 = vtanh.pop %v3310
  %v3333 = vtanh.pop %v3315
  %v3334 = vtanh.pop %v3320
  %v3335 = vtanh.pop %v3325
  %v3336 = vsub.f32 1.0, %v3136
  %v3337 = vsub.f32 1.0, %v3138
  %v3338 = vsub.f32 1.0, %v3140
  %v3339 = vsub.f32 1.0, %v3142
  %v3340 = vsub.f32 1.0, %v3144
  %v3341 = vsub.f32 1.0, %v3146
  %v3342 = vsub.f32 1.0, %v3148
  %v3343 = vsub.f32 1.0, %v3150
  %v3344 = vmul.f32 %v3336, %v2942
  %v3345 = vmul.f32 %v3337, %v2943
  %v3346 = vmul.f32 %v3338, %v2944
  %v3347 = vmul.f32 %v3339, %v2945
  %v3348 = vmul.f32 %v3340, %v2946
  %v3349 = vmul.f32 %v3341, %v2947
  %v3350 = vmul.f32 %v3342, %v2948
  %v3351 = vmul.f32 %v3343, %v2949
  %3360 = vrot.lane.b32.xlu0 %v3328, 32
  %v3361 = vpop.permute.xlu0 %3360
  %3362 = vrot.lane.b32.xlu0 %v3329, 32
  %v3363 = vpop.permute.xlu0 %3362
  %3364 = vrot.lane.b32.xlu0 %v3330, 32
  %v3365 = vpop.permute.xlu0 %3364
  %3366 = vrot.lane.b32.xlu0 %v3331, 32
  %v3367 = vpop.permute.xlu0 %3366
  %3368 = vrot.lane.b32.xlu0 %v3332, 32
  %v3369 = vpop.permute.xlu0 %3368
  %3370 = vrot.lane.b32.xlu0 %v3333, 32
  %v3371 = vpop.permute.xlu0 %3370
  %3372 = vrot.lane.b32.xlu0 %v3334, 32
  %v3373 = vpop.permute.xlu0 %3372
  %3374 = vrot.lane.b32.xlu0 %v3335, 32
  %v3375 = vpop.permute.xlu0 %3374
  %v3384 = vmul.f32 %v3136, %v3361
  %v3385 = vmul.f32 %v3138, %v3363
  %v3386 = vmul.f32 %v3140, %v3365
  %v3387 = vmul.f32 %v3142, %v3367
  %v3388 = vmul.f32 %v3144, %v3369
  %v3389 = vmul.f32 %v3146, %v3371
  %v3390 = vmul.f32 %v3148, %v3373
  %v3391 = vmul.f32 %v3150, %v3375
  %v3392 = vadd.f32 %v3344, %v3384
  %v3393 = vadd.f32 %v3345, %v3385
  %v3394 = vadd.f32 %v3346, %v3386
  %v3395 = vadd.f32 %v3347, %v3387
  %v3396 = vadd.f32 %v3348, %v3388
  %v3397 = vadd.f32 %v3349, %v3389
  %v3398 = vadd.f32 %v3350, %v3390
  %v3399 = vadd.f32 %v3351, %v3391
  %v3400 = vld [vmem:[#allocation2 + $0x180] sm:$0xff]
  %v3401 = vld [vmem:[#allocation2 + $0x188] sm:$0xff]
  %v3402 = vld [vmem:[#allocation2 + $0x190] sm:$0xff]
  %v3403 = vld [vmem:[#allocation2 + $0x198] sm:$0xff]
  %v3404 = vld [vmem:[#allocation2 + $0x1a0] sm:$0xff]
  %v3405 = vld [vmem:[#allocation2 + $0x1a8] sm:$0xff]
  %v3406 = vld [vmem:[#allocation2 + $0x1b0] sm:$0xff]
  %v3407 = vld [vmem:[#allocation2 + $0x1b8] sm:$0xff]
  %3416 = vrot.lane.b32.xlu0 %v3392, 96
  %v3417 = vpop.permute.xlu0 %3416
  %3418 = vrot.lane.b32.xlu0 %v3393, 96
  %v3419 = vpop.permute.xlu0 %3418
  %3420 = vrot.lane.b32.xlu0 %v3394, 96
  %v3421 = vpop.permute.xlu0 %3420
  %3422 = vrot.lane.b32.xlu0 %v3395, 96
  %v3423 = vpop.permute.xlu0 %3422
  %3424 = vrot.lane.b32.xlu0 %v3396, 96
  %v3425 = vpop.permute.xlu0 %3424
  %3426 = vrot.lane.b32.xlu0 %v3397, 96
  %v3427 = vpop.permute.xlu0 %3426
  %3428 = vrot.lane.b32.xlu0 %v3398, 96
  %v3429 = vpop.permute.xlu0 %3428
  %3430 = vrot.lane.b32.xlu0 %v3399, 96
  %v3431 = vpop.permute.xlu0 %3430
  %v3432 = vsel %vm752, %v3417, 0
  %v3434 = vsel %vm752, %v3419, 0
  %v3436 = vsel %vm752, %v3421, 0
  %v3438 = vsel %vm752, %v3423, 0
  %v3440 = vsel %vm752, %v3425, 0
  %v3442 = vsel %vm752, %v3427, 0
  %v3444 = vsel %vm752, %v3429, 0
  %v3446 = vsel %vm752, %v3431, 0
  %3448 = vmatprep.subr.mxu0 0.0
  %3449 = vmatpush1.msra.mxu0 %v736
  %3450 = vmatprep.subr.mxu0 0.0
  %3451 = vmatpush1.msra.mxu0 %v737
  %3452 = vmatprep.subr.mxu0 0.0
  %3453 = vmatpush1.msra.mxu0 %v738
  %3454 = vmatprep.subr.mxu0 0.0
  %3455 = vmatpush1.msra.mxu0 %v739
  %3456 = vmatprep.subr.mxu0 0.0
  %3457 = vmatpush1.msra.mxu0 0.0
  %3458 = vmatprep.subr.mxu0 0.0
  %3459 = vmatpush1.msra.mxu0 0.0
  %3460 = vmatprep.subr.mxu0 0.0
  %3461 = vmatpush1.msra.mxu0 0.0
  %3462 = vmatprep.subr.mxu0 0.0
  %3463 = vmatpush1.msra.mxu0 0.0
  %3464 = vmatprep.subr.mxu0 0.0
  %3465 = vmatpush1.msra.mxu0 0.0
  %3466 = vmatprep.subr.mxu0 0.0
  %3467 = vmatpush1.msra.mxu0 0.0
  %3468 = vmatprep.subr.mxu0 0.0
  %3469 = vmatpush1.msra.mxu0 0.0
  %3470 = vmatprep.subr.mxu0 0.0
  %3471 = vmatpush1.msra.mxu0 0.0
  %3472 = vmatprep.subr.mxu0 0.0
  %3473 = vmatpush1.msra.mxu0 0.0
  %3474 = vmatprep.subr.mxu0 0.0
  %3475 = vmatpush1.msra.mxu0 0.0
  %3476 = vmatprep.subr.mxu0 0.0
  %3477 = vmatpush1.msra.mxu0 0.0
  %3478 = vmatprep.subr.mxu0 0.0
  %3479 = vmatpush1.msra.mxu0 0.0
  %3480 = vmatprep.subr.mxu0 0.0
  %3481 = vmatpush1.msra.mxu0 0.0
  %3482 = vmatprep.subr.mxu0 0.0
  %3483 = vmatpush1.msra.mxu0 0.0
  %3484 = vmatprep.subr.mxu0 0.0
  %3485 = vmatpush1.msra.mxu0 0.0
  %3486 = vmatprep.subr.mxu0 0.0
  %3487 = vmatpush1.msra.mxu0 0.0
  %3488 = vmatprep.subr.mxu0 0.0
  %3489 = vmatpush1.msra.mxu0 0.0
  %3490 = vmatprep.subr.mxu0 0.0
  %3491 = vmatpush1.msra.mxu0 0.0
  %3492 = vmatprep.subr.mxu0 0.0
  %3493 = vmatpush1.msra.mxu0 0.0
  %3494 = vmatprep.subr.mxu0 0.0
  %3495 = vmatpush1.msra.mxu0 0.0
  %3496 = vmatprep.subr.mxu0 0.0
  %3497 = vmatpush1.msra.mxu0 0.0
  %3498 = vmatprep.subr.mxu0 0.0
  %3499 = vmatpush1.msra.mxu0 0.0
  %3500 = vmatprep.subr.mxu0 0.0
  %3501 = vmatpush1.msra.mxu0 0.0
  %3502 = vmatprep.subr.mxu0 0.0
  %3503 = vmatpush1.msra.mxu0 0.0
  %3504 = vmatprep.subr.mxu0 0.0
  %3505 = vmatpush1.msra.mxu0 0.0
  %3506 = vmatprep.subr.mxu0 0.0
  %3507 = vmatpush1.msra.mxu0 0.0
  %3508 = vmatprep.subr.mxu0 0.0
  %3509 = vmatpush1.msra.mxu0 0.0
  %3510 = vmatprep.subr.mxu0 0.0
  %3511 = vmatpush1.msra.mxu0 0.0
  %3512 = vmatprep.mubr.f32.mxu0 0.0
  %3513 = vmatmul.mubr.f32.gmra.mrb[0].mxu0 %v3432
  %v3514 = vpop.f32.mrb[0].mxu0
  %v3515 = vadd.f32 %v3400, %v3514
  %v3516 = vpop.f32.mrb[0].mxu0
  %3517 = vmatprep.mubr.f32.mxu0 0.0
  %3518 = vmatmul.mubr.f32.gmra.mrb[0].mxu0 %v3434
  %v3519 = vpop.f32.mrb[0].mxu0
  %v3520 = vadd.f32 %v3401, %v3519
  %v3521 = vpop.f32.mrb[0].mxu0
  %3522 = vmatprep.mubr.f32.mxu0 0.0
  %3523 = vmatmul.mubr.f32.gmra.mrb[0].mxu0 %v3436
  %v3524 = vpop.f32.mrb[0].mxu0
  %v3525 = vadd.f32 %v3402, %v3524
  %v3526 = vpop.f32.mrb[0].mxu0
  %3527 = vmatprep.mubr.f32.mxu0 0.0
  %3528 = vmatmul.mubr.f32.gmra.mrb[0].mxu0 %v3438
  %v3529 = vpop.f32.mrb[0].mxu0
  %v3530 = vadd.f32 %v3403, %v3529
  %v3531 = vpop.f32.mrb[0].mxu0
  %3532 = vmatprep.mubr.f32.mxu0 0.0
  %3533 = vmatmul.mubr.f32.gmra.mrb[0].mxu0 %v3440
  %v3534 = vpop.f32.mrb[0].mxu0
  %v3535 = vadd.f32 %v3404, %v3534
  %v3536 = vpop.f32.mrb[0].mxu0
  %3537 = vmatprep.mubr.f32.mxu0 0.0
  %3538 = vmatmul.mubr.f32.gmra.mrb[0].mxu0 %v3442
  %v3539 = vpop.f32.mrb[0].mxu0
  %v3540 = vadd.f32 %v3405, %v3539
  %v3541 = vpop.f32.mrb[0].mxu0
  %3542 = vmatprep.mubr.f32.mxu0 0.0
  %3543 = vmatmul.mubr.f32.gmra.mrb[0].mxu0 %v3444
  %v3544 = vpop.f32.mrb[0].mxu0
  %v3545 = vadd.f32 %v3406, %v3544
  %v3546 = vpop.f32.mrb[0].mxu0
  %3547 = vmatprep.mubr.f32.mxu0 0.0
  %3548 = vmatmul.mubr.f32.gmra.mrb[0].mxu0 %v3446
  %v3549 = vpop.f32.mrb[0].mxu0
  %v3550 = vadd.f32 %v3407, %v3549
  %v3551 = vpop.f32.mrb[0].mxu0
  %3552 = vdwg.mxu0
  %v3553 = vxor.u32 %v3515, 2147483648
  %v3554 = vxor.u32 %v3520, 2147483648
  %v3555 = vxor.u32 %v3525, 2147483648
  %v3556 = vxor.u32 %v3530, 2147483648
  %v3557 = vxor.u32 %v3535, 2147483648
  %v3558 = vxor.u32 %v3540, 2147483648
  %v3559 = vxor.u32 %v3545, 2147483648
  %v3560 = vxor.u32 %v3550, 2147483648
  %v3561 = vmul.f32 %v3553, 1.442695
  %v3562 = vpow.pop %v3561
  %v3563 = vmul.f32 %v3554, 1.442695
  %v3564 = vpow.pop %v3563
  %v3565 = vmul.f32 %v3555, 1.442695
  %v3566 = vpow.pop %v3565
  %v3567 = vmul.f32 %v3556, 1.442695
  %v3568 = vpow.pop %v3567
  %v3569 = vmul.f32 %v3557, 1.442695
  %v3570 = vpow.pop %v3569
  %v3571 = vmul.f32 %v3558, 1.442695
  %v3572 = vpow.pop %v3571
  %v3573 = vmul.f32 %v3559, 1.442695
  %v3574 = vpow.pop %v3573
  %v3575 = vmul.f32 %v3560, 1.442695
  %v3576 = vpow.pop %v3575
  %v3577 = vadd.f32 %v3562, 1.0
  %v3578 = vadd.f32 %v3564, 1.0
  %v3579 = vadd.f32 %v3566, 1.0
  %v3580 = vadd.f32 %v3568, 1.0
  %v3581 = vadd.f32 %v3570, 1.0
  %v3582 = vadd.f32 %v3572, 1.0
  %v3583 = vadd.f32 %v3574, 1.0
  %v3584 = vadd.f32 %v3576, 1.0
  %v3585 = vrcp.pop %v3577
  %v3586 = vmul.f32 1.0, %v3585
  %v3587 = vrcp.pop %v3578
  %v3588 = vmul.f32 1.0, %v3587
  %v3589 = vrcp.pop %v3579
  %v3590 = vmul.f32 1.0, %v3589
  %v3591 = vrcp.pop %v3580
  %v3592 = vmul.f32 1.0, %v3591
  %v3593 = vrcp.pop %v3581
  %v3594 = vmul.f32 1.0, %v3593
  %v3595 = vrcp.pop %v3582
  %v3596 = vmul.f32 1.0, %v3595
  %v3597 = vrcp.pop %v3583
  %v3598 = vmul.f32 1.0, %v3597
  %v3599 = vrcp.pop %v3584
  %v3600 = vmul.f32 1.0, %v3599
  %v3609 = vmul.f32 %v3586, %v3417
  %v3610 = vmul.f32 %v3588, %v3419
  %v3611 = vmul.f32 %v3590, %v3421
  %v3612 = vmul.f32 %v3592, %v3423
  %v3613 = vmul.f32 %v3594, %v3425
  %v3614 = vmul.f32 %v3596, %v3427
  %v3615 = vmul.f32 %v3598, %v3429
  %v3616 = vmul.f32 %v3600, %v3431
  %3625 = vrot.lane.b32.xlu0 %v3400, 64
  %v3626 = vpop.permute.xlu0 %3625
  %3627 = vrot.lane.b32.xlu0 %v3401, 64
  %v3628 = vpop.permute.xlu0 %3627
  %3629 = vrot.lane.b32.xlu0 %v3402, 64
  %v3630 = vpop.permute.xlu0 %3629
  %3631 = vrot.lane.b32.xlu0 %v3403, 64
  %v3632 = vpop.permute.xlu0 %3631
  %3633 = vrot.lane.b32.xlu0 %v3404, 64
  %v3634 = vpop.permute.xlu0 %3633
  %3635 = vrot.lane.b32.xlu0 %v3405, 64
  %v3636 = vpop.permute.xlu0 %3635
  %3637 = vrot.lane.b32.xlu0 %v3406, 64
  %v3638 = vpop.permute.xlu0 %3637
  %3639 = vrot.lane.b32.xlu0 %v3407, 64
  %v3640 = vpop.permute.xlu0 %3639
  %v3650 = vsel %vm752, %v3609, 0
  %v3653 = vsel %vm752, %v3610, 0
  %v3656 = vsel %vm752, %v3611, 0
  %v3659 = vsel %vm752, %v3612, 0
  %v3662 = vsel %vm752, %v3613, 0
  %v3665 = vsel %vm752, %v3614, 0
  %v3668 = vsel %vm752, %v3615, 0
  %v3671 = vsel %vm752, %v3616, 0
  %3673 = vmatprep.subr.mxu0 0.0
  %3674 = vmatpush1.msra.mxu0 %v740
  %3675 = vmatprep.subr.mxu0 0.0
  %3676 = vmatpush1.msra.mxu0 %v741
  %3677 = vmatprep.subr.mxu0 0.0
  %3678 = vmatpush1.msra.mxu0 %v742
  %3679 = vmatprep.subr.mxu0 0.0
  %3680 = vmatpush1.msra.mxu0 %v743
  %3681 = vmatprep.subr.mxu0 0.0
  %3682 = vmatpush1.msra.mxu0 0.0
  %3683 = vmatprep.subr.mxu0 0.0
  %3684 = vmatpush1.msra.mxu0 0.0
  %3685 = vmatprep.subr.mxu0 0.0
  %3686 = vmatpush1.msra.mxu0 0.0
  %3687 = vmatprep.subr.mxu0 0.0
  %3688 = vmatpush1.msra.mxu0 0.0
  %3689 = vmatprep.subr.mxu0 0.0
  %3690 = vmatpush1.msra.mxu0 0.0
  %3691 = vmatprep.subr.mxu0 0.0
  %3692 = vmatpush1.msra.mxu0 0.0
  %3693 = vmatprep.subr.mxu0 0.0
  %3694 = vmatpush1.msra.mxu0 0.0
  %3695 = vmatprep.subr.mxu0 0.0
  %3696 = vmatpush1.msra.mxu0 0.0
  %3697 = vmatprep.subr.mxu0 0.0
  %3698 = vmatpush1.msra.mxu0 0.0
  %3699 = vmatprep.subr.mxu0 0.0
  %3700 = vmatpush1.msra.mxu0 0.0
  %3701 = vmatprep.subr.mxu0 0.0
  %3702 = vmatpush1.msra.mxu0 0.0
  %3703 = vmatprep.subr.mxu0 0.0
  %3704 = vmatpush1.msra.mxu0 0.0
  %3705 = vmatprep.subr.mxu0 0.0
  %3706 = vmatpush1.msra.mxu0 0.0
  %3707 = vmatprep.subr.mxu0 0.0
  %3708 = vmatpush1.msra.mxu0 0.0
  %3709 = vmatprep.subr.mxu0 0.0
  %3710 = vmatpush1.msra.mxu0 0.0
  %3711 = vmatprep.subr.mxu0 0.0
  %3712 = vmatpush1.msra.mxu0 0.0
  %3713 = vmatprep.subr.mxu0 0.0
  %3714 = vmatpush1.msra.mxu0 0.0
  %3715 = vmatprep.subr.mxu0 0.0
  %3716 = vmatpush1.msra.mxu0 0.0
  %3717 = vmatprep.subr.mxu0 0.0
  %3718 = vmatpush1.msra.mxu0 0.0
  %3719 = vmatprep.subr.mxu0 0.0
  %3720 = vmatpush1.msra.mxu0 0.0
  %3721 = vmatprep.subr.mxu0 0.0
  %3722 = vmatpush1.msra.mxu0 0.0
  %3723 = vmatprep.subr.mxu0 0.0
  %3724 = vmatpush1.msra.mxu0 0.0
  %3725 = vmatprep.subr.mxu0 0.0
  %3726 = vmatpush1.msra.mxu0 0.0
  %3727 = vmatprep.subr.mxu0 0.0
  %3728 = vmatpush1.msra.mxu0 0.0
  %3729 = vmatprep.subr.mxu0 0.0
  %3730 = vmatpush1.msra.mxu0 0.0
  %3731 = vmatprep.subr.mxu0 0.0
  %3732 = vmatpush1.msra.mxu0 0.0
  %3733 = vmatprep.subr.mxu0 0.0
  %3734 = vmatpush1.msra.mxu0 0.0
  %3735 = vmatprep.subr.mxu0 0.0
  %3736 = vmatpush1.msra.mxu0 0.0
  %3737 = vmatprep.mubr.f32.mxu0 0.0
  %3738 = vmatmul.mubr.f32.gmra.mrb[0].mxu0 %v3650
  %v3739 = vpop.f32.mrb[0].mxu0
  %v3740 = vadd.f32 %v3626, %v3739
  %v3741 = vpop.f32.mrb[0].mxu0
  %3742 = vmatprep.mubr.f32.mxu0 0.0
  %3743 = vmatmul.mubr.f32.gmra.mrb[0].mxu0 %v3653
  %v3744 = vpop.f32.mrb[0].mxu0
  %v3745 = vadd.f32 %v3628, %v3744
  %v3746 = vpop.f32.mrb[0].mxu0
  %3747 = vmatprep.mubr.f32.mxu0 0.0
  %3748 = vmatmul.mubr.f32.gmra.mrb[0].mxu0 %v3656
  %v3749 = vpop.f32.mrb[0].mxu0
  %v3750 = vadd.f32 %v3630, %v3749
  %v3751 = vpop.f32.mrb[0].mxu0
  %3752 = vmatprep.mubr.f32.mxu0 0.0
  %3753 = vmatmul.mubr.f32.gmra.mrb[0].mxu0 %v3659
  %v3754 = vpop.f32.mrb[0].mxu0
  %v3755 = vadd.f32 %v3632, %v3754
  %v3756 = vpop.f32.mrb[0].mxu0
  %3757 = vmatprep.mubr.f32.mxu0 0.0
  %3758 = vmatmul.mubr.f32.gmra.mrb[0].mxu0 %v3662
  %v3759 = vpop.f32.mrb[0].mxu0
  %v3760 = vadd.f32 %v3634, %v3759
  %v3761 = vpop.f32.mrb[0].mxu0
  %3762 = vmatprep.mubr.f32.mxu0 0.0
  %3763 = vmatmul.mubr.f32.gmra.mrb[0].mxu0 %v3665
  %v3764 = vpop.f32.mrb[0].mxu0
  %v3765 = vadd.f32 %v3636, %v3764
  %v3766 = vpop.f32.mrb[0].mxu0
  %3767 = vmatprep.mubr.f32.mxu0 0.0
  %3768 = vmatmul.mubr.f32.gmra.mrb[0].mxu0 %v3668
  %v3769 = vpop.f32.mrb[0].mxu0
  %v3770 = vadd.f32 %v3638, %v3769
  %v3771 = vpop.f32.mrb[0].mxu0
  %3772 = vmatprep.mubr.f32.mxu0 0.0
  %3773 = vmatmul.mubr.f32.gmra.mrb[0].mxu0 %v3671
  %v3774 = vpop.f32.mrb[0].mxu0
  %v3775 = vadd.f32 %v3640, %v3774
  %v3776 = vpop.f32.mrb[0].mxu0
  %3777 = vdwg.mxu0
  %v3778 = vtanh.pop %v3740
  %v3779 = vtanh.pop %v3745
  %v3780 = vtanh.pop %v3750
  %v3781 = vtanh.pop %v3755
  %v3782 = vtanh.pop %v3760
  %v3783 = vtanh.pop %v3765
  %v3784 = vtanh.pop %v3770
  %v3785 = vtanh.pop %v3775
  %v3786 = vsub.f32 1.0, %v3586
  %v3787 = vsub.f32 1.0, %v3588
  %v3788 = vsub.f32 1.0, %v3590
  %v3789 = vsub.f32 1.0, %v3592
  %v3790 = vsub.f32 1.0, %v3594
  %v3791 = vsub.f32 1.0, %v3596
  %v3792 = vsub.f32 1.0, %v3598
  %v3793 = vsub.f32 1.0, %v3600
  %v3794 = vmul.f32 %v3786, %v3392
  %v3795 = vmul.f32 %v3787, %v3393
  %v3796 = vmul.f32 %v3788, %v3394
  %v3797 = vmul.f32 %v3789, %v3395
  %v3798 = vmul.f32 %v3790, %v3396
  %v3799 = vmul.f32 %v3791, %v3397
  %v3800 = vmul.f32 %v3792, %v3398
  %v3801 = vmul.f32 %v3793, %v3399
  %3810 = vrot.lane.b32.xlu0 %v3778, 32
  %v3811 = vpop.permute.xlu0 %3810
  %3812 = vrot.lane.b32.xlu0 %v3779, 32
  %v3813 = vpop.permute.xlu0 %3812
  %3814 = vrot.lane.b32.xlu0 %v3780, 32
  %v3815 = vpop.permute.xlu0 %3814
  %3816 = vrot.lane.b32.xlu0 %v3781, 32
  %v3817 = vpop.permute.xlu0 %3816
  %3818 = vrot.lane.b32.xlu0 %v3782, 32
  %v3819 = vpop.permute.xlu0 %3818
  %3820 = vrot.lane.b32.xlu0 %v3783, 32
  %v3821 = vpop.permute.xlu0 %3820
  %3822 = vrot.lane.b32.xlu0 %v3784, 32
  %v3823 = vpop.permute.xlu0 %3822
  %3824 = vrot.lane.b32.xlu0 %v3785, 32
  %v3825 = vpop.permute.xlu0 %3824
  %v3834 = vmul.f32 %v3586, %v3811
  %v3835 = vmul.f32 %v3588, %v3813
  %v3836 = vmul.f32 %v3590, %v3815
  %v3837 = vmul.f32 %v3592, %v3817
  %v3838 = vmul.f32 %v3594, %v3819
  %v3839 = vmul.f32 %v3596, %v3821
  %v3840 = vmul.f32 %v3598, %v3823
  %v3841 = vmul.f32 %v3600, %v3825
  %v3842 = vadd.f32 %v3794, %v3834
  %v3843 = vadd.f32 %v3795, %v3835
  %v3844 = vadd.f32 %v3796, %v3836
  %v3845 = vadd.f32 %v3797, %v3837
  %v3846 = vadd.f32 %v3798, %v3838
  %v3847 = vadd.f32 %v3799, %v3839
  %v3848 = vadd.f32 %v3800, %v3840
  %v3849 = vadd.f32 %v3801, %v3841
  %v3850 = vld [vmem:[#allocation2 + $0x1c0] sm:$0xff]
  %v3851 = vld [vmem:[#allocation2 + $0x1c8] sm:$0xff]
  %v3852 = vld [vmem:[#allocation2 + $0x1d0] sm:$0xff]
  %v3853 = vld [vmem:[#allocation2 + $0x1d8] sm:$0xff]
  %v3854 = vld [vmem:[#allocation2 + $0x1e0] sm:$0xff]
  %v3855 = vld [vmem:[#allocation2 + $0x1e8] sm:$0xff]
  %v3856 = vld [vmem:[#allocation2 + $0x1f0] sm:$0xff]
  %v3857 = vld [vmem:[#allocation2 + $0x1f8] sm:$0xff]
  %3866 = vrot.lane.b32.xlu0 %v3842, 96
  %v3867 = vpop.permute.xlu0 %3866
  %3868 = vrot.lane.b32.xlu0 %v3843, 96
  %v3869 = vpop.permute.xlu0 %3868
  %3870 = vrot.lane.b32.xlu0 %v3844, 96
  %v3871 = vpop.permute.xlu0 %3870
  %3872 = vrot.lane.b32.xlu0 %v3845, 96
  %v3873 = vpop.permute.xlu0 %3872
  %3874 = vrot.lane.b32.xlu0 %v3846, 96
  %v3875 = vpop.permute.xlu0 %3874
  %3876 = vrot.lane.b32.xlu0 %v3847, 96
  %v3877 = vpop.permute.xlu0 %3876
  %3878 = vrot.lane.b32.xlu0 %v3848, 96
  %v3879 = vpop.permute.xlu0 %3878
  %3880 = vrot.lane.b32.xlu0 %v3849, 96
  %v3881 = vpop.permute.xlu0 %3880
  %v3882 = vsel %vm752, %v3867, 0
  %v3884 = vsel %vm752, %v3869, 0
  %v3886 = vsel %vm752, %v3871, 0
  %v3888 = vsel %vm752, %v3873, 0
  %v3890 = vsel %vm752, %v3875, 0
  %v3892 = vsel %vm752, %v3877, 0
  %v3894 = vsel %vm752, %v3879, 0
  %v3896 = vsel %vm752, %v3881, 0
  %3898 = vmatprep.subr.mxu0 0.0
  %3899 = vmatpush1.msra.mxu0 %v736
  %3900 = vmatprep.subr.mxu0 0.0
  %3901 = vmatpush1.msra.mxu0 %v737
  %3902 = vmatprep.subr.mxu0 0.0
  %3903 = vmatpush1.msra.mxu0 %v738
  %3904 = vmatprep.subr.mxu0 0.0
  %3905 = vmatpush1.msra.mxu0 %v739
  %3906 = vmatprep.subr.mxu0 0.0
  %3907 = vmatpush1.msra.mxu0 0.0
  %3908 = vmatprep.subr.mxu0 0.0
  %3909 = vmatpush1.msra.mxu0 0.0
  %3910 = vmatprep.subr.mxu0 0.0
  %3911 = vmatpush1.msra.mxu0 0.0
  %3912 = vmatprep.subr.mxu0 0.0
  %3913 = vmatpush1.msra.mxu0 0.0
  %3914 = vmatprep.subr.mxu0 0.0
  %3915 = vmatpush1.msra.mxu0 0.0
  %3916 = vmatprep.subr.mxu0 0.0
  %3917 = vmatpush1.msra.mxu0 0.0
  %3918 = vmatprep.subr.mxu0 0.0
  %3919 = vmatpush1.msra.mxu0 0.0
  %3920 = vmatprep.subr.mxu0 0.0
  %3921 = vmatpush1.msra.mxu0 0.0
  %3922 = vmatprep.subr.mxu0 0.0
  %3923 = vmatpush1.msra.mxu0 0.0
  %3924 = vmatprep.subr.mxu0 0.0
  %3925 = vmatpush1.msra.mxu0 0.0
  %3926 = vmatprep.subr.mxu0 0.0
  %3927 = vmatpush1.msra.mxu0 0.0
  %3928 = vmatprep.subr.mxu0 0.0
  %3929 = vmatpush1.msra.mxu0 0.0
  %3930 = vmatprep.subr.mxu0 0.0
  %3931 = vmatpush1.msra.mxu0 0.0
  %3932 = vmatprep.subr.mxu0 0.0
  %3933 = vmatpush1.msra.mxu0 0.0
  %3934 = vmatprep.subr.mxu0 0.0
  %3935 = vmatpush1.msra.mxu0 0.0
  %3936 = vmatprep.subr.mxu0 0.0
  %3937 = vmatpush1.msra.mxu0 0.0
  %3938 = vmatprep.subr.mxu0 0.0
  %3939 = vmatpush1.msra.mxu0 0.0
  %3940 = vmatprep.subr.mxu0 0.0
  %3941 = vmatpush1.msra.mxu0 0.0
  %3942 = vmatprep.subr.mxu0 0.0
  %3943 = vmatpush1.msra.mxu0 0.0
  %3944 = vmatprep.subr.mxu0 0.0
  %3945 = vmatpush1.msra.mxu0 0.0
  %3946 = vmatprep.subr.mxu0 0.0
  %3947 = vmatpush1.msra.mxu0 0.0
  %3948 = vmatprep.subr.mxu0 0.0
  %3949 = vmatpush1.msra.mxu0 0.0
  %3950 = vmatprep.subr.mxu0 0.0
  %3951 = vmatpush1.msra.mxu0 0.0
  %3952 = vmatprep.subr.mxu0 0.0
  %3953 = vmatpush1.msra.mxu0 0.0
  %3954 = vmatprep.subr.mxu0 0.0
  %3955 = vmatpush1.msra.mxu0 0.0
  %3956 = vmatprep.subr.mxu0 0.0
  %3957 = vmatpush1.msra.mxu0 0.0
  %3958 = vmatprep.subr.mxu0 0.0
  %3959 = vmatpush1.msra.mxu0 0.0
  %3960 = vmatprep.subr.mxu0 0.0
  %3961 = vmatpush1.msra.mxu0 0.0
  %3962 = vmatprep.mubr.f32.mxu0 0.0
  %3963 = vmatmul.mubr.f32.gmra.mrb[0].mxu0 %v3882
  %v3964 = vpop.f32.mrb[0].mxu0
  %v3965 = vadd.f32 %v3850, %v3964
  %v3966 = vpop.f32.mrb[0].mxu0
  %3967 = vmatprep.mubr.f32.mxu0 0.0
  %3968 = vmatmul.mubr.f32.gmra.mrb[0].mxu0 %v3884
  %v3969 = vpop.f32.mrb[0].mxu0
  %v3970 = vadd.f32 %v3851, %v3969
  %v3971 = vpop.f32.mrb[0].mxu0
  %3972 = vmatprep.mubr.f32.mxu0 0.0
  %3973 = vmatmul.mubr.f32.gmra.mrb[0].mxu0 %v3886
  %v3974 = vpop.f32.mrb[0].mxu0
  %v3975 = vadd.f32 %v3852, %v3974
  %v3976 = vpop.f32.mrb[0].mxu0
  %3977 = vmatprep.mubr.f32.mxu0 0.0
  %3978 = vmatmul.mubr.f32.gmra.mrb[0].mxu0 %v3888
  %v3979 = vpop.f32.mrb[0].mxu0
  %v3980 = vadd.f32 %v3853, %v3979
  %v3981 = vpop.f32.mrb[0].mxu0
  %3982 = vmatprep.mubr.f32.mxu0 0.0
  %3983 = vmatmul.mubr.f32.gmra.mrb[0].mxu0 %v3890
  %v3984 = vpop.f32.mrb[0].mxu0
  %v3985 = vadd.f32 %v3854, %v3984
  %v3986 = vpop.f32.mrb[0].mxu0
  %3987 = vmatprep.mubr.f32.mxu0 0.0
  %3988 = vmatmul.mubr.f32.gmra.mrb[0].mxu0 %v3892
  %v3989 = vpop.f32.mrb[0].mxu0
  %v3990 = vadd.f32 %v3855, %v3989
  %v3991 = vpop.f32.mrb[0].mxu0
  %3992 = vmatprep.mubr.f32.mxu0 0.0
  %3993 = vmatmul.mubr.f32.gmra.mrb[0].mxu0 %v3894
  %v3994 = vpop.f32.mrb[0].mxu0
  %v3995 = vadd.f32 %v3856, %v3994
  %v3996 = vpop.f32.mrb[0].mxu0
  %3997 = vmatprep.mubr.f32.mxu0 0.0
  %3998 = vmatmul.mubr.f32.gmra.mrb[0].mxu0 %v3896
  %v3999 = vpop.f32.mrb[0].mxu0
  %v4000 = vadd.f32 %v3857, %v3999
  %v4001 = vpop.f32.mrb[0].mxu0
  %4002 = vdwg.mxu0
  %v4003 = vxor.u32 %v3965, 2147483648
  %v4004 = vxor.u32 %v3970, 2147483648
  %v4005 = vxor.u32 %v3975, 2147483648
  %v4006 = vxor.u32 %v3980, 2147483648
  %v4007 = vxor.u32 %v3985, 2147483648
  %v4008 = vxor.u32 %v3990, 2147483648
  %v4009 = vxor.u32 %v3995, 2147483648
  %v4010 = vxor.u32 %v4000, 2147483648
  %v4011 = vmul.f32 %v4003, 1.442695
  %v4012 = vpow.pop %v4011
  %v4013 = vmul.f32 %v4004, 1.442695
  %v4014 = vpow.pop %v4013
  %v4015 = vmul.f32 %v4005, 1.442695
  %v4016 = vpow.pop %v4015
  %v4017 = vmul.f32 %v4006, 1.442695
  %v4018 = vpow.pop %v4017
  %v4019 = vmul.f32 %v4007, 1.442695
  %v4020 = vpow.pop %v4019
  %v4021 = vmul.f32 %v4008, 1.442695
  %v4022 = vpow.pop %v4021
  %v4023 = vmul.f32 %v4009, 1.442695
  %v4024 = vpow.pop %v4023
  %v4025 = vmul.f32 %v4010, 1.442695
  %v4026 = vpow.pop %v4025
  %v4027 = vadd.f32 %v4012, 1.0
  %v4028 = vadd.f32 %v4014, 1.0
  %v4029 = vadd.f32 %v4016, 1.0
  %v4030 = vadd.f32 %v4018, 1.0
  %v4031 = vadd.f32 %v4020, 1.0
  %v4032 = vadd.f32 %v4022, 1.0
  %v4033 = vadd.f32 %v4024, 1.0
  %v4034 = vadd.f32 %v4026, 1.0
  %v4035 = vrcp.pop %v4027
  %v4036 = vmul.f32 1.0, %v4035
  %v4037 = vrcp.pop %v4028
  %v4038 = vmul.f32 1.0, %v4037
  %v4039 = vrcp.pop %v4029
  %v4040 = vmul.f32 1.0, %v4039
  %v4041 = vrcp.pop %v4030
  %v4042 = vmul.f32 1.0, %v4041
  %v4043 = vrcp.pop %v4031
  %v4044 = vmul.f32 1.0, %v4043
  %v4045 = vrcp.pop %v4032
  %v4046 = vmul.f32 1.0, %v4045
  %v4047 = vrcp.pop %v4033
  %v4048 = vmul.f32 1.0, %v4047
  %v4049 = vrcp.pop %v4034
  %v4050 = vmul.f32 1.0, %v4049
  %v4059 = vmul.f32 %v4036, %v3867
  %v4060 = vmul.f32 %v4038, %v3869
  %v4061 = vmul.f32 %v4040, %v3871
  %v4062 = vmul.f32 %v4042, %v3873
  %v4063 = vmul.f32 %v4044, %v3875
  %v4064 = vmul.f32 %v4046, %v3877
  %v4065 = vmul.f32 %v4048, %v3879
  %v4066 = vmul.f32 %v4050, %v3881
  %4075 = vrot.lane.b32.xlu0 %v3850, 64
  %v4076 = vpop.permute.xlu0 %4075
  %4077 = vrot.lane.b32.xlu0 %v3851, 64
  %v4078 = vpop.permute.xlu0 %4077
  %4079 = vrot.lane.b32.xlu0 %v3852, 64
  %v4080 = vpop.permute.xlu0 %4079
  %4081 = vrot.lane.b32.xlu0 %v3853, 64
  %v4082 = vpop.permute.xlu0 %4081
  %4083 = vrot.lane.b32.xlu0 %v3854, 64
  %v4084 = vpop.permute.xlu0 %4083
  %4085 = vrot.lane.b32.xlu0 %v3855, 64
  %v4086 = vpop.permute.xlu0 %4085
  %4087 = vrot.lane.b32.xlu0 %v3856, 64
  %v4088 = vpop.permute.xlu0 %4087
  %4089 = vrot.lane.b32.xlu0 %v3857, 64
  %v4090 = vpop.permute.xlu0 %4089
  %v4100 = vsel %vm752, %v4059, 0
  %v4103 = vsel %vm752, %v4060, 0
  %v4106 = vsel %vm752, %v4061, 0
  %v4109 = vsel %vm752, %v4062, 0
  %v4112 = vsel %vm752, %v4063, 0
  %v4115 = vsel %vm752, %v4064, 0
  %v4118 = vsel %vm752, %v4065, 0
  %v4121 = vsel %vm752, %v4066, 0
  %4123 = vmatprep.subr.mxu0 0.0
  %4124 = vmatpush1.msra.mxu0 %v740
  %4125 = vmatprep.subr.mxu0 0.0
  %4126 = vmatpush1.msra.mxu0 %v741
  %4127 = vmatprep.subr.mxu0 0.0
  %4128 = vmatpush1.msra.mxu0 %v742
  %4129 = vmatprep.subr.mxu0 0.0
  %4130 = vmatpush1.msra.mxu0 %v743
  %4131 = vmatprep.subr.mxu0 0.0
  %4132 = vmatpush1.msra.mxu0 0.0
  %4133 = vmatprep.subr.mxu0 0.0
  %4134 = vmatpush1.msra.mxu0 0.0
  %4135 = vmatprep.subr.mxu0 0.0
  %4136 = vmatpush1.msra.mxu0 0.0
  %4137 = vmatprep.subr.mxu0 0.0
  %4138 = vmatpush1.msra.mxu0 0.0
  %4139 = vmatprep.subr.mxu0 0.0
  %4140 = vmatpush1.msra.mxu0 0.0
  %4141 = vmatprep.subr.mxu0 0.0
  %4142 = vmatpush1.msra.mxu0 0.0
  %4143 = vmatprep.subr.mxu0 0.0
  %4144 = vmatpush1.msra.mxu0 0.0
  %4145 = vmatprep.subr.mxu0 0.0
  %4146 = vmatpush1.msra.mxu0 0.0
  %4147 = vmatprep.subr.mxu0 0.0
  %4148 = vmatpush1.msra.mxu0 0.0
  %4149 = vmatprep.subr.mxu0 0.0
  %4150 = vmatpush1.msra.mxu0 0.0
  %4151 = vmatprep.subr.mxu0 0.0
  %4152 = vmatpush1.msra.mxu0 0.0
  %4153 = vmatprep.subr.mxu0 0.0
  %4154 = vmatpush1.msra.mxu0 0.0
  %4155 = vmatprep.subr.mxu0 0.0
  %4156 = vmatpush1.msra.mxu0 0.0
  %4157 = vmatprep.subr.mxu0 0.0
  %4158 = vmatpush1.msra.mxu0 0.0
  %4159 = vmatprep.subr.mxu0 0.0
  %4160 = vmatpush1.msra.mxu0 0.0
  %4161 = vmatprep.subr.mxu0 0.0
  %4162 = vmatpush1.msra.mxu0 0.0
  %4163 = vmatprep.subr.mxu0 0.0
  %4164 = vmatpush1.msra.mxu0 0.0
  %4165 = vmatprep.subr.mxu0 0.0
  %4166 = vmatpush1.msra.mxu0 0.0
  %4167 = vmatprep.subr.mxu0 0.0
  %4168 = vmatpush1.msra.mxu0 0.0
  %4169 = vmatprep.subr.mxu0 0.0
  %4170 = vmatpush1.msra.mxu0 0.0
  %4171 = vmatprep.subr.mxu0 0.0
  %4172 = vmatpush1.msra.mxu0 0.0
  %4173 = vmatprep.subr.mxu0 0.0
  %4174 = vmatpush1.msra.mxu0 0.0
  %4175 = vmatprep.subr.mxu0 0.0
  %4176 = vmatpush1.msra.mxu0 0.0
  %4177 = vmatprep.subr.mxu0 0.0
  %4178 = vmatpush1.msra.mxu0 0.0
  %4179 = vmatprep.subr.mxu0 0.0
  %4180 = vmatpush1.msra.mxu0 0.0
  %4181 = vmatprep.subr.mxu0 0.0
  %4182 = vmatpush1.msra.mxu0 0.0
  %4183 = vmatprep.subr.mxu0 0.0
  %4184 = vmatpush1.msra.mxu0 0.0
  %4185 = vmatprep.subr.mxu0 0.0
  %4186 = vmatpush1.msra.mxu0 0.0
  %4187 = vmatprep.mubr.f32.mxu0 0.0
  %4188 = vmatmul.mubr.f32.gmra.mrb[0].mxu0 %v4100
  %v4189 = vpop.f32.mrb[0].mxu0
  %v4190 = vadd.f32 %v4076, %v4189
  %v4191 = vpop.f32.mrb[0].mxu0
  %4192 = vmatprep.mubr.f32.mxu0 0.0
  %4193 = vmatmul.mubr.f32.gmra.mrb[0].mxu0 %v4103
  %v4194 = vpop.f32.mrb[0].mxu0
  %v4195 = vadd.f32 %v4078, %v4194
  %v4196 = vpop.f32.mrb[0].mxu0
  %4197 = vmatprep.mubr.f32.mxu0 0.0
  %4198 = vmatmul.mubr.f32.gmra.mrb[0].mxu0 %v4106
  %v4199 = vpop.f32.mrb[0].mxu0
  %v4200 = vadd.f32 %v4080, %v4199
  %v4201 = vpop.f32.mrb[0].mxu0
  %4202 = vmatprep.mubr.f32.mxu0 0.0
  %4203 = vmatmul.mubr.f32.gmra.mrb[0].mxu0 %v4109
  %v4204 = vpop.f32.mrb[0].mxu0
  %v4205 = vadd.f32 %v4082, %v4204
  %v4206 = vpop.f32.mrb[0].mxu0
  %4207 = vmatprep.mubr.f32.mxu0 0.0
  %4208 = vmatmul.mubr.f32.gmra.mrb[0].mxu0 %v4112
  %v4209 = vpop.f32.mrb[0].mxu0
  %v4210 = vadd.f32 %v4084, %v4209
  %v4211 = vpop.f32.mrb[0].mxu0
  %4212 = vmatprep.mubr.f32.mxu0 0.0
  %4213 = vmatmul.mubr.f32.gmra.mrb[0].mxu0 %v4115
  %v4214 = vpop.f32.mrb[0].mxu0
  %v4215 = vadd.f32 %v4086, %v4214
  %v4216 = vpop.f32.mrb[0].mxu0
  %4217 = vmatprep.mubr.f32.mxu0 0.0
  %4218 = vmatmul.mubr.f32.gmra.mrb[0].mxu0 %v4118
  %v4219 = vpop.f32.mrb[0].mxu0
  %v4220 = vadd.f32 %v4088, %v4219
  %v4221 = vpop.f32.mrb[0].mxu0
  %4222 = vmatprep.mubr.f32.mxu0 0.0
  %4223 = vmatmul.mubr.f32.gmra.mrb[0].mxu0 %v4121
  %v4224 = vpop.f32.mrb[0].mxu0
  %v4225 = vadd.f32 %v4090, %v4224
  %v4226 = vpop.f32.mrb[0].mxu0
  %4227 = vdwg.mxu0
  %v4228 = vtanh.pop %v4190
  %v4229 = vtanh.pop %v4195
  %v4230 = vtanh.pop %v4200
  %v4231 = vtanh.pop %v4205
  %v4232 = vtanh.pop %v4210
  %v4233 = vtanh.pop %v4215
  %v4234 = vtanh.pop %v4220
  %v4235 = vtanh.pop %v4225
  %v4236 = vsub.f32 1.0, %v4036
  %v4237 = vsub.f32 1.0, %v4038
  %v4238 = vsub.f32 1.0, %v4040
  %v4239 = vsub.f32 1.0, %v4042
  %v4240 = vsub.f32 1.0, %v4044
  %v4241 = vsub.f32 1.0, %v4046
  %v4242 = vsub.f32 1.0, %v4048
  %v4243 = vsub.f32 1.0, %v4050
  %v4244 = vmul.f32 %v4236, %v3842
  %v4245 = vmul.f32 %v4237, %v3843
  %v4246 = vmul.f32 %v4238, %v3844
  %v4247 = vmul.f32 %v4239, %v3845
  %v4248 = vmul.f32 %v4240, %v3846
  %v4249 = vmul.f32 %v4241, %v3847
  %v4250 = vmul.f32 %v4242, %v3848
  %v4251 = vmul.f32 %v4243, %v3849
  %4260 = vrot.lane.b32.xlu0 %v4228, 32
  %v4261 = vpop.permute.xlu0 %4260
  %4262 = vrot.lane.b32.xlu0 %v4229, 32
  %v4263 = vpop.permute.xlu0 %4262
  %4264 = vrot.lane.b32.xlu0 %v4230, 32
  %v4265 = vpop.permute.xlu0 %4264
  %4266 = vrot.lane.b32.xlu0 %v4231, 32
  %v4267 = vpop.permute.xlu0 %4266
  %4268 = vrot.lane.b32.xlu0 %v4232, 32
  %v4269 = vpop.permute.xlu0 %4268
  %4270 = vrot.lane.b32.xlu0 %v4233, 32
  %v4271 = vpop.permute.xlu0 %4270
  %4272 = vrot.lane.b32.xlu0 %v4234, 32
  %v4273 = vpop.permute.xlu0 %4272
  %4274 = vrot.lane.b32.xlu0 %v4235, 32
  %v4275 = vpop.permute.xlu0 %4274
  %v4284 = vmul.f32 %v4036, %v4261
  %v4285 = vmul.f32 %v4038, %v4263
  %v4286 = vmul.f32 %v4040, %v4265
  %v4287 = vmul.f32 %v4042, %v4267
  %v4288 = vmul.f32 %v4044, %v4269
  %v4289 = vmul.f32 %v4046, %v4271
  %v4290 = vmul.f32 %v4048, %v4273
  %v4291 = vmul.f32 %v4050, %v4275
  %v4292 = vadd.f32 %v4244, %v4284
  %v4293 = vadd.f32 %v4245, %v4285
  %v4294 = vadd.f32 %v4246, %v4286
  %v4295 = vadd.f32 %v4247, %v4287
  %v4296 = vadd.f32 %v4248, %v4288
  %v4297 = vadd.f32 %v4249, %v4289
  %v4298 = vadd.f32 %v4250, %v4290
  %v4299 = vadd.f32 %v4251, %v4291
  %4308 = vrot.lane.b32.xlu0 %v4292, 96
  %v4309 = vpop.permute.xlu0 %4308
  %4310 = vrot.lane.b32.xlu0 %v4293, 96
  %v4311 = vpop.permute.xlu0 %4310
  %4312 = vrot.lane.b32.xlu0 %v4294, 96
  %v4313 = vpop.permute.xlu0 %4312
  %4314 = vrot.lane.b32.xlu0 %v4295, 96
  %v4315 = vpop.permute.xlu0 %4314
  %4316 = vrot.lane.b32.xlu0 %v4296, 96
  %v4317 = vpop.permute.xlu0 %4316
  %4318 = vrot.lane.b32.xlu0 %v4297, 96
  %v4319 = vpop.permute.xlu0 %4318
  %4320 = vrot.lane.b32.xlu0 %v4298, 96
  %v4321 = vpop.permute.xlu0 %4320
  %4322 = vrot.lane.b32.xlu0 %v4299, 96
  %v4323 = vpop.permute.xlu0 %4322
  %4332 = vst.msk [vmem:[%s5] sm:$0xff] %vm752, %v4309
  %4333 = vst.msk [vmem:[%s5 + $0x8] sm:$0xff] %vm752, %v4311
  %4334 = vst.msk [vmem:[%s5 + $0x10] sm:$0xff] %vm752, %v4313
  %4335 = vst.msk [vmem:[%s5 + $0x18] sm:$0xff] %vm752, %v4315
  %4336 = vst.msk [vmem:[%s5 + $0x20] sm:$0xff] %vm752, %v4317
  %4337 = vst.msk [vmem:[%s5 + $0x28] sm:$0xff] %vm752, %v4319
  %4338 = vst.msk [vmem:[%s5 + $0x30] sm:$0xff] %vm752, %v4321
  %4339 = vst.msk [vmem:[%s5 + $0x38] sm:$0xff] %vm752, %v4323
  // Predicated region
  $region22: #{tpu_custom_call.1} parent=0 // pred_check
    _
  $region23: #{tpu_custom_call.1} parent=0 // pred_check_branch
    %4341 = sbr.rel (0) target = $region25
  $region24: #{tpu_custom_call.1} parent=0 // pred_region
    _
  $region25: #{tpu_custom_call.1} parent=0 // pred_fallthru
    _
  // Predicated region
  $region26: #{tpu_custom_call.1} parent=0 // pred_check
    _
  $region27: #{tpu_custom_call.1} parent=0 // pred_check_branch
    %4343 = sbr.rel (0) target = $region29
  $region28: #{tpu_custom_call.1} parent=0 // pred_region
    _
  $region29: #{tpu_custom_call.1} parent=0 // pred_fallthru
    _

</llo_original>
